<compile_context>
chip_gen: v7x
topology: tpu7x:2x2x1
jax: 0.10.0
libtpu: 0.0.40
codegen_flags: <defaults>
</compile_context>

<pallas_src>
import functools
import math

import jax
import jax.numpy as jnp
from jax.experimental import pallas as pl
from jax.experimental.pallas import tpu as pltpu

BN_EPS = 1e-5
LANE = 128
VMEM_LIMIT = 64 * 1024 * 1024  # explicit scoped-VMEM budget (review: set explicitly)

# On v6e/v7x, flipping this halves HBM traffic of the 1x1-conv matmul inputs
# (f32 accumulation + f32 epilogue are kept).  Left off so the f32 correctness
# check below stays tight on every generation.
USE_BF16_MATMUL_INPUTS = False


def _round_up(x, m):
    return (x + m - 1) // m * m


def _pick_block(n, cap, mult):
    """n if n <= cap, else the largest divisor of n that is <= cap and a
    multiple of `mult`; falls back to n (full dim) if none exists."""
    if n <= cap:
        return n
    for d in range(cap, 0, -1):
        if n % d == 0 and d % mult == 0:
            return d
    return n


# ----------------------------------------------------------------------------
# Kernel 1: depthwise 3x3 (stride 1, pad 1) + folded BN + ReLU
# Taps extracted in-kernel from a manually DMA'd row halo (no im2col in HBM).
# ----------------------------------------------------------------------------
def _dw3x3_bn_relu_kernel(xp_ref, w_ref, b_ref, o_ref, xbuf, sem, *, th, W):
    n = pl.program_id(0)
    r = pl.program_id(1)
    row0 = r * th
    # Halo DMA: rows [row0, row0+th+2) of the zero-padded input -> VMEM.
    cp = pltpu.make_async_copy(xp_ref.at[n, pl.ds(row0, th + 2)], xbuf, sem.at[0])
    cp.start()
    cp.wait()
    # 9 shifted multiply-accumulates (BN scale already folded into w_ref).
    acc = xbuf[0:th, 0:W, :] * w_ref[0]
    for k in range(1, 9):
        ky, kx = divmod(k, 3)
        acc = acc + xbuf[ky:ky + th, kx:kx + W, :] * w_ref[k]
    y = jnp.maximum(acc + b_ref[0], 0.0)
    o_ref[0] = y.astype(o_ref.dtype)


def dw3x3_bn_relu(x, w_taps, bias):
    """x: (N,H,W,C) f32; w_taps: (9,1,C) (BN scale folded in); bias: (1,1,C)."""
    N, H, W, C = x.shape
    # Row-tile height (no (8,128) constraint on this axis): ~<=4 MiB out block.
    th = max(1, min(H, 64, (4 * 1024 * 1024) // max(1, W * C * 4)))
    H_pad = _round_up(H, th)
    xp = jnp.pad(x, ((0, 0), (1, H_pad - H + 1), (1, 1), (0, 0)))
    kernel = functools.partial(_dw3x3_bn_relu_kernel, th=th, W=W)
    out = pl.pallas_call(
        kernel,
        out_shape=jax.ShapeDtypeStruct((N, H_pad, W, C), jnp.float32),
        grid=(N, H_pad // th),
        in_specs=[
            pl.BlockSpec(memory_space=pl.ANY),              # padded input in HBM
            pl.BlockSpec((9, 1, C), lambda n, r: (0, 0, 0)),
            pl.BlockSpec((1, 1, C), lambda n, r: (0, 0, 0)),
        ],
        out_specs=pl.BlockSpec((1, th, W, C), lambda n, r: (n, r, 0, 0)),
        scratch_shapes=[
            pltpu.VMEM((th + 2, W + 2, C), jnp.float32),
            pltpu.SemaphoreType.DMA((1,)),
        ],
        compiler_params=pltpu.CompilerParams(
            dimension_semantics=("parallel", "parallel"),
            vmem_limit_bytes=VMEM_LIMIT),
    )(xp, w_taps, bias)
    return out if H_pad == H else out[:, :H]


# ----------------------------------------------------------------------------
# Kernel 2: 1x1 conv = row-tiled matmul + bias (Cout zero-padded to 128 lanes)
# ----------------------------------------------------------------------------
def _matmul_bias_kernel(x_ref, w_ref, b_ref, o_ref):
    acc = jnp.dot(x_ref[...], w_ref[...], preferred_element_type=jnp.float32)
    o_ref[...] = (acc + b_ref[...]).astype(o_ref.dtype)


def conv1x1_bias(x_flat, w, b):
    """x_flat: (M, K) ; w: (K, Cout_pad) ; b: (1, Cout_pad)."""
    M, K = x_flat.shape
    Cp = w.shape[1]
    tm = 512 if M >= 2048 else 256
    tm = min(tm, _round_up(M, 8))
    M_pad = _round_up(M, tm)
    if M_pad != M:
        x_flat = jnp.pad(x_flat, ((0, M_pad - M), (0, 0)))
    if USE_BF16_MATMUL_INPUTS:
        x_flat = x_flat.astype(jnp.bfloat16)
        w = w.astype(jnp.bfloat16)
    out = pl.pallas_call(
        _matmul_bias_kernel,
        out_shape=jax.ShapeDtypeStruct((M_pad, Cp), jnp.float32),
        grid=(M_pad // tm,),
        in_specs=[
            pl.BlockSpec((tm, K), lambda i: (i, 0)),
            pl.BlockSpec((K, Cp), lambda i: (0, 0)),
            pl.BlockSpec((1, Cp), lambda i: (0, 0)),
        ],
        out_specs=pl.BlockSpec((tm, Cp), lambda i: (i, 0)),
        compiler_params=pltpu.CompilerParams(
            dimension_semantics=("parallel",), vmem_limit_bytes=VMEM_LIMIT),
    )(x_flat, w, b)
    return out if M_pad == M else out[:M]


# ----------------------------------------------------------------------------
# Kernels 3 & 4: bilinear upsample (align_corners=True) as separable matmuls
# ----------------------------------------------------------------------------
def _h_interp_kernel(mh_ref, x_ref, o_ref):
    o_ref[0] = jnp.dot(mh_ref[...], x_ref[0],
                       preferred_element_type=jnp.float32).astype(o_ref.dtype)


def h_interp(mh, x3):
    """mh: (Ho, H); x3: (N, H, W*C)  ->  (N, Ho, W*C)."""
    N, H, WC = x3.shape
    Ho = mh.shape[0]
    t_ho = _pick_block(Ho, 256, 8)
    t_col = 128 * _pick_block(WC // 128, 16, 1)      # lane-dense column tile
    return pl.pallas_call(
        _h_interp_kernel,
        out_shape=jax.ShapeDtypeStruct((N, Ho, WC), jnp.float32),
        grid=(N, Ho // t_ho, WC // t_col),
        in_specs=[
            pl.BlockSpec((t_ho, H), lambda n, i, j: (i, 0)),
            pl.BlockSpec((1, H, t_col), lambda n, i, j: (n, 0, j)),
        ],
        out_specs=pl.BlockSpec((1, t_ho, t_col), lambda n, i, j: (n, i, j)),
        compiler_params=pltpu.CompilerParams(
            dimension_semantics=("parallel", "parallel", "parallel"),
            vmem_limit_bytes=VMEM_LIMIT),
    )(mh, x3)


def _w_interp_kernel(mw_ref, z_ref, o_ref, *, tb):
    mw = mw_ref[...]
    for b in range(tb):                              # small static unroll
        o_ref[b] = jnp.dot(mw, z_ref[b],
                           preferred_element_type=jnp.float32).astype(o_ref.dtype)


def w_interp(mw, z3):
    """mw: (Wo, W); z3: (M2, W, C)  ->  (M2, Wo, C)."""
    M2, W, C = z3.shape
    Wo = mw.shape[0]
    tb = max(1, min(8, (4 * 1024 * 1024) // max(1, Wo * C * 4)))
    tb = min(tb, M2)
    M2_pad = _round_up(M2, tb)
    if M2_pad != M2:
        z3 = jnp.pad(z3, ((0, M2_pad - M2), (0, 0), (0, 0)))
    kernel = functools.partial(_w_interp_kernel, tb=tb)
    out = pl.pallas_call(
        kernel,
        out_shape=jax.ShapeDtypeStruct((M2_pad, Wo, C), jnp.float32),
        grid=(M2_pad // tb,),
        in_specs=[
            pl.BlockSpec((Wo, W), lambda i: (0, 0)),
            pl.BlockSpec((tb, W, C), lambda i: (i, 0, 0)),
        ],
        out_specs=pl.BlockSpec((tb, Wo, C), lambda i: (i, 0, 0)),
        compiler_params=pltpu.CompilerParams(
            dimension_semantics=("parallel",), vmem_limit_bytes=VMEM_LIMIT),
    )(mw, z3)
    return out if M2_pad == M2 else out[:M2]


def _interp_matrix(out_size, in_size):
    """Dense (out_size, in_size) 1-D bilinear matrix, align_corners=True."""
    if out_size == 1 or in_size == 1:
        src = jnp.zeros((out_size,), jnp.float32)
    else:
        src = jnp.arange(out_size, dtype=jnp.float32) * (
            (in_size - 1) / (out_size - 1))
    i0 = jnp.clip(jnp.floor(src).astype(jnp.int32), 0, in_size - 1)
    i1 = jnp.minimum(i0 + 1, in_size - 1)
    w1 = src - i0.astype(jnp.float32)
    w0 = 1.0 - w1
    rows = jnp.arange(out_size)
    m = jnp.zeros((out_size, in_size), jnp.float32)
    m = m.at[rows, i0].add(w0)
    m = m.at[rows, i1].add(w1)
    return m


# ----------------------------------------------------------------------------
# Classifier forward
# ----------------------------------------------------------------------------
def classifier_forward(x_nchw, params, *, num_classes, scale_factor):
    x = jnp.transpose(x_nchw, (0, 2, 3, 1)).astype(jnp.float32)      # -> NHWC
    N, H, W, C = x.shape
    assert C == 128

    # Fold BN scale into the depthwise tap weights (review: scale-free kernel).
    scale = params["dw_scale"]
    w_taps = (params["dw_w"].reshape(9, C) * scale[None, :]).reshape(9, 1, C)
    b_dw = params["dw_bias"].reshape(1, 1, C)

    # forward() applies self.sconv1 TWICE (sconv2 exists but is never used).
    x = dw3x3_bn_relu(x, w_taps, b_dw)
    x = dw3x3_bn_relu(x, w_taps, b_dw)

    # 1x1 conv + bias; Cout zero-padded to the 128-lane width (lane-dense stores).
    Cp = _round_up(max(num_classes, 1), LANE)
    w_pw = jnp.zeros((C, Cp), jnp.float32).at[:, :num_classes].set(params["conv_w"])
    b_pw = jnp.zeros((1, Cp), jnp.float32).at[0, :num_classes].set(params["conv_b"])
    y = conv1x1_bias(x.reshape(N * H * W, C), w_pw, b_pw).reshape(N, H, W, Cp)

    # Bilinear upsample, align_corners=True: out = Mh @ Y @ Mw^T (per channel).
    Ho = int(math.floor(H * scale_factor))
    Wo = int(math.floor(W * scale_factor))
    mh = _interp_matrix(Ho, H)
    mw = _interp_matrix(Wo, W)
    z = h_interp(mh, y.reshape(N, H, W * Cp))                 # (N, Ho, W*Cp)
    z = w_interp(mw, z.reshape(N * Ho, W, Cp))                # (N*Ho, Wo, Cp)
    z = z.reshape(N, Ho, Wo, Cp)[..., :num_classes]
    return jnp.transpose(z, (0, 3, 1, 2))                     # -> NCHW


# ----------------------------------------------------------------------------
# Deterministic parameter init (inference-mode BN pre-folded to scale/bias)
# ----------------------------------------------------------------------------
def init_params(key, num_classes):
    ks = jax.random.split(key, 7)
    C = 128
    dw_w = (jax.random.normal(ks[0], (3, 3, C)) * math.sqrt(2.0 / 9.0)).astype(jnp.float32)
    gamma = jax.random.uniform(ks[1], (C,), minval=0.5, maxval=1.5)
    beta = jax.random.normal(ks[2], (C,)) * 0.1
    mean = jax.random.normal(ks[3], (C,)) * 0.1
    var = jax.random.uniform(ks[4], (C,), minval=0.5, maxval=1.5)
    dw_scale = (gamma * jax.lax.rsqrt(var + BN_EPS)).astype(jnp.float32)
    dw_bias = (beta - mean * dw_scale).astype(jnp.float32)
    conv_w = (jax.random.normal(ks[5], (C, num_classes)) * math.sqrt(2.0 / C)).astype(jnp.float32)
    conv_b = (jax.random.normal(ks[6], (num_classes,)) * 0.1).astype(jnp.float32)
    return {"dw_w": dw_w, "dw_scale": dw_scale, "dw_bias": dw_bias,
            "conv_w": conv_w, "conv_b": conv_b}


# ----------------------------------------------------------------------------
# Pure-JAX reference (lax.conv + gather-based bilinear) for correctness check
# ----------------------------------------------------------------------------
def _bilinear_aligned_ref(x, Ho, Wo):
    N, H, W, C = x.shape

    def coords(out, inp):
        if out == 1 or inp == 1:
            return jnp.zeros((out,), jnp.float32)
        return jnp.arange(out, dtype=jnp.float32) * ((inp - 1) / (out - 1))

    ys, xs = coords(Ho, H), coords(Wo, W)
    y0 = jnp.clip(jnp.floor(ys).astype(jnp.int32), 0, H - 1)
    x0 = jnp.clip(jnp.floor(xs).astype(jnp.int32), 0, W - 1)
    y1 = jnp.minimum(y0 + 1, H - 1)
    x1 = jnp.minimum(x0 + 1, W - 1)
    wy = (ys - y0.astype(jnp.float32))[None, :, None, None]
    wx = (xs - x0.astype(jnp.float32))[None, None, :, None]
    g = lambda yi, xi: x[:, yi][:, :, xi]
    top = g(y0, x0) * (1 - wx) + g(y0, x1) * wx
    bot = g(y1, x0) * (1 - wx) + g(y1, x1) * wx
    return top * (1 - wy) + bot * wy


def reference(x_nchw, params, *, num_classes, scale_factor):
    x = jnp.transpose(x_nchw, (0, 2, 3, 1)).astype(jnp.float32)
    N, H, W, C = x.shape
    dn = ("NHWC", "HWIO", "NHWC")
    prec = jax.lax.Precision.HIGHEST

    def sconv(y):
        w_dw = params["dw_w"].reshape(3, 3, 1, C)
        y = jax.lax.conv_general_dilated(y, w_dw, (1, 1), ((1, 1), (1, 1)),
                                         dimension_numbers=dn,
                                         feature_group_count=C, precision=prec)
        y = y * params["dw_scale"].reshape(1, 1, 1, C) + params["dw_bias"].reshape(1, 1, 1, C)
        return jnp.maximum(y, 0.0)

    y = sconv(sconv(x))
    w_pw = params["conv_w"].reshape(1, 1, C, num_classes)
    y = jax.lax.conv_general_dilated(y, w_pw, (1, 1), ((0, 0), (0, 0)),
                                     dimension_numbers=dn, precision=prec)
    y = y + params["conv_b"].reshape(1, 1, 1, num_classes)
    Ho = int(math.floor(H * scale_factor))
    Wo = int(math.floor(W * scale_factor))
    y = _bilinear_aligned_ref(y, Ho, Wo)
    return jnp.transpose(y, (0, 3, 1, 2))


if __name__ == "__main__":
    num_classes = 19
    scale_factor = 2
    key = jax.random.PRNGKey(0)
    kx, kp = jax.random.split(key)
    x = jax.random.normal(kx, (2, 128, 16, 16), dtype=jnp.float32)   # NCHW, C fixed at 128 by the module
    params = init_params(kp, num_classes)

    fwd = jax.jit(functools.partial(classifier_forward,
                                    num_classes=num_classes,
                                    scale_factor=scale_factor))
    out = jax.block_until_ready(fwd(x, params))
    assert out.shape == (2, num_classes, 32, 32), out.shape

    ref = reference(x, params, num_classes=num_classes, scale_factor=scale_factor)
    max_err = float(jnp.max(jnp.abs(out - ref)))
    assert jnp.allclose(out, ref, atol=1e-2, rtol=1e-2), max_err

    print("KERNEL_OK")
</pallas_src>

<mosaic_0001>
module attributes {stable_mosaic.version = 11 : i64} {
  func.func private @main(%arg0: i32) attributes {dimension_semantics = [#tpu.dimension_semantics<core_parallel>], iteration_bounds = array<i64: 2>, tpu.core_type = #tpu.core_type<sc_scalar_subcore>, window_params = []} {
    return
  }
}

module attributes {stable_mosaic.version = 11 : i64} {
  func.func private @main(%arg0: i32) attributes {dimension_semantics = [#tpu.dimension_semantics<core_parallel>], iteration_bounds = array<i64: 2>, tpu.core_type = #tpu.core_type<sc_scalar_subcore>, window_params = []} {
    return
  }
}

module attributes {stable_mosaic.version = 11 : i64} {
  func.func @_matmul_bias_kernel(%arg0: i32, %arg1: memref<256x128xf32, #tpu.memory_space<vmem>>, %arg2: memref<128x128xf32, #tpu.memory_space<vmem>>, %arg3: memref<1x128xf32, #tpu.memory_space<vmem>>, %arg4: memref<256x128xf32, #tpu.memory_space<vmem>>) attributes {dimension_semantics = [#tpu.dimension_semantics<parallel>], iteration_bounds = array<i64: 2>, scalar_prefetch = 0 : i64, scratch_operands = 0 : i64, tpu.core_type = #tpu.core_type<tc>, window_params = [{transform_indices = @transform_0, window_bounds = array<i64: 256, 128>}, {pipeline_mode = #tpu.pipeline_mode<synchronous>, transform_indices = @transform_1, window_bounds = array<i64: 128, 128>}, {pipeline_mode = #tpu.pipeline_mode<synchronous>, transform_indices = @transform_2, window_bounds = array<i64: 1, 128>}, {transform_indices = @transform_3, window_bounds = array<i64: 256, 128>}]} {
    %c0 = arith.constant 0 : index
    %c0_0 = arith.constant 0 : index
    %0 = vector.load %arg1[%c0, %c0_0] : memref<256x128xf32, #tpu.memory_space<vmem>>, vector<256x128xf32>
    %c0_1 = arith.constant 0 : index
    %c0_2 = arith.constant 0 : index
    %1 = vector.load %arg2[%c0_1, %c0_2] : memref<128x128xf32, #tpu.memory_space<vmem>>, vector<128x128xf32>
    %cst = arith.constant dense<0.000000e+00> : vector<256x128xf32>
    %2 = tpu.matmul %0, %1, %cst {dimension_numbers = #tpu.dot_dimension_numbers<[1], [0], [0], [1], [0, 0, 1, 1], [], []>} : vector<256x128xf32>, vector<128x128xf32>, vector<256x128xf32> -> vector<256x128xf32>
    %c0_3 = arith.constant 0 : index
    %c0_4 = arith.constant 0 : index
    %3 = vector.load %arg3[%c0_3, %c0_4] : memref<1x128xf32, #tpu.memory_space<vmem>>, vector<1x128xf32>
    %4 = vector.broadcast %3 : vector<1x128xf32> to vector<256x128xf32>
    %5 = arith.addf %2, %4 : vector<256x128xf32>
    %c0_5 = arith.constant 0 : index
    %c0_6 = arith.constant 0 : index
    %6 = vector.load %arg4[%c0_5, %c0_6] : memref<256x128xf32, #tpu.memory_space<vmem>>, vector<256x128xf32>
    tpu.vector_store %arg4[%c0_5, %c0_6], %5 {strides = array<i32>} : memref<256x128xf32, #tpu.memory_space<vmem>>, vector<256x128xf32>,
    return
  }
  func.func @transform_0(%arg0: i32) -> (i32, i32) {
    %c0_i32 = arith.constant 0 : i32
    %c0_i32_0 = arith.constant 0 : i32
    return %arg0, %c0_i32 : i32, i32
  }
  func.func @transform_1(%arg0: i32) -> (i32, i32) {
    %c0_i32 = arith.constant 0 : i32
    %c0_i32_0 = arith.constant 0 : i32
    %c0_i32_1 = arith.constant 0 : i32
    return %c0_i32, %c0_i32_0 : i32, i32
  }
  func.func @transform_2(%arg0: i32) -> (i32, i32) {
    %c0_i32 = arith.constant 0 : i32
    %c0_i32_0 = arith.constant 0 : i32
    %c0_i32_1 = arith.constant 0 : i32
    return %c0_i32, %c0_i32_0 : i32, i32
  }
  func.func @transform_3(%arg0: i32) -> (i32, i32) {
    %c0_i32 = arith.constant 0 : i32
    %c0_i32_0 = arith.constant 0 : i32
    return %arg0, %c0_i32 : i32, i32
  }
}

module attributes {stable_mosaic.version = 11 : i64} {
  func.func @_dw3x3_bn_relu_kernel(%arg0: i32, %arg1: i32, %arg2: memref<2x18x18x128xf32, #tpu.memory_space<any>>, %arg3: memref<9x1x128xf32, #tpu.memory_space<vmem>>, %arg4: memref<1x1x128xf32, #tpu.memory_space<vmem>>, %arg5: memref<1x16x16x128xf32, #tpu.memory_space<vmem>>, %arg6: memref<18x18x128xf32, #tpu.memory_space<vmem>>, %arg7: memref<1x!tpu.dma_semaphore, #tpu.memory_space<semaphore_mem>>) attributes {dimension_semantics = [#tpu.dimension_semantics<parallel>, #tpu.dimension_semantics<parallel>], iteration_bounds = array<i64: 2, 1>, scalar_prefetch = 0 : i64, scratch_operands = 2 : i64, tpu.core_type = #tpu.core_type<tc>, window_params = [{}, {pipeline_mode = #tpu.pipeline_mode<synchronous>, transform_indices = @transform_1, window_bounds = array<i64: 9, 1, 128>}, {pipeline_mode = #tpu.pipeline_mode<synchronous>, transform_indices = @transform_2, window_bounds = array<i64: 1, 1, 128>}, {transform_indices = @transform_3, window_bounds = array<i64: 1, 16, 16, 128>}]} {
    %c16_i32 = arith.constant 16 : i32
    %0 = arith.muli %arg1, %c16_i32 : i32
    %c0_i32 = arith.constant 0 : i32
    %c0_i32_0 = arith.constant 0 : i32
    %c0_i32_1 = arith.constant 0 : i32
    %1 = tpu.memref_slice %arg2[%arg0, %0, %c0_i32_0, %c0_i32_1] : memref<2x18x18x128xf32, #tpu.memory_space<any>> -> memref<1x18x18x128xf32, #tpu.memory_space<any>>
    %2 = tpu.memref_squeeze %1 : memref<1x18x18x128xf32, #tpu.memory_space<any>> -> memref<18x18x128xf32, #tpu.memory_space<any>>
    %3 = tpu.memref_slice %arg7[%c0_i32] : memref<1x!tpu.dma_semaphore, #tpu.memory_space<semaphore_mem>> -> memref<1x!tpu.dma_semaphore, #tpu.memory_space<semaphore_mem>>
    %4 = tpu.memref_squeeze %3 : memref<1x!tpu.dma_semaphore, #tpu.memory_space<semaphore_mem>> -> memref<!tpu.dma_semaphore, #tpu.memory_space<semaphore_mem>>
    tpu.enqueue_dma source(%2 : memref<18x18x128xf32, #tpu.memory_space<any>>) target(%arg6 : memref<18x18x128xf32, #tpu.memory_space<vmem>>) target_semaphore(%4 : memref<!tpu.dma_semaphore, #tpu.memory_space<semaphore_mem>>)
    %c0_i32_2 = arith.constant 0 : i32
    %c0_i32_3 = arith.constant 0 : i32
    %c0_i32_4 = arith.constant 0 : i32
    %5 = tpu.memref_slice %arg2[%arg0, %0, %c0_i32_3, %c0_i32_4] : memref<2x18x18x128xf32, #tpu.memory_space<any>> -> memref<1x18x18x128xf32, #tpu.memory_space<any>>
    %6 = tpu.memref_squeeze %5 : memref<1x18x18x128xf32, #tpu.memory_space<any>> -> memref<18x18x128xf32, #tpu.memory_space<any>>
    %7 = tpu.memref_slice %arg7[%c0_i32_2] : memref<1x!tpu.dma_semaphore, #tpu.memory_space<semaphore_mem>> -> memref<1x!tpu.dma_semaphore, #tpu.memory_space<semaphore_mem>>
    %8 = tpu.memref_squeeze %7 : memref<1x!tpu.dma_semaphore, #tpu.memory_space<semaphore_mem>> -> memref<!tpu.dma_semaphore, #tpu.memory_space<semaphore_mem>>
    tpu.wait_dma2 semaphore(%8 : memref<!tpu.dma_semaphore, #tpu.memory_space<semaphore_mem>>) src(%6 : memref<18x18x128xf32, #tpu.memory_space<any>>) dst(%arg6 : memref<18x18x128xf32, #tpu.memory_space<vmem>>)
    %c0 = arith.constant 0 : index
    %c0_5 = arith.constant 0 : index
    %c0_6 = arith.constant 0 : index
    %9 = vector.load %arg6[%c0, %c0_5, %c0_6] : memref<18x18x128xf32, #tpu.memory_space<vmem>>, vector<16x16x128xf32>
    %c0_7 = arith.constant 0 : index
    %c0_8 = arith.constant 0 : index
    %c0_9 = arith.constant 0 : index
    %10 = vector.load %arg3[%c0_7, %c0_8, %c0_9] : memref<9x1x128xf32, #tpu.memory_space<vmem>>, vector<1x1x128xf32>
    %11 = vector.shape_cast %10 : vector<1x1x128xf32> to vector<1x128xf32>
    %12 = vector.shape_cast %11 : vector<1x128xf32> to vector<1x1x128xf32>
    %13 = vector.broadcast %12 : vector<1x1x128xf32> to vector<16x16x128xf32>
    %14 = arith.mulf %9, %13 : vector<16x16x128xf32>
    %c0_10 = arith.constant 0 : index
    %c1 = arith.constant 1 : index
    %c0_11 = arith.constant 0 : index
    %15 = vector.load %arg6[%c0_10, %c1, %c0_11] : memref<18x18x128xf32, #tpu.memory_space<vmem>>, vector<16x16x128xf32>
    %c1_12 = arith.constant 1 : index
    %c0_13 = arith.constant 0 : index
    %c0_14 = arith.constant 0 : index
    %16 = vector.load %arg3[%c1_12, %c0_13, %c0_14] : memref<9x1x128xf32, #tpu.memory_space<vmem>>, vector<1x1x128xf32>
    %17 = vector.shape_cast %16 : vector<1x1x128xf32> to vector<1x128xf32>
    %18 = vector.shape_cast %17 : vector<1x128xf32> to vector<1x1x128xf32>
    %19 = vector.broadcast %18 : vector<1x1x128xf32> to vector<16x16x128xf32>
    %20 = arith.mulf %15, %19 : vector<16x16x128xf32>
    %21 = arith.addf %14, %20 : vector<16x16x128xf32>
    %c0_15 = arith.constant 0 : index
    %c2 = arith.constant 2 : index
    %c0_16 = arith.constant 0 : index
    %22 = vector.load %arg6[%c0_15, %c2, %c0_16] : memref<18x18x128xf32, #tpu.memory_space<vmem>>, vector<16x16x128xf32>
    %c2_17 = arith.constant 2 : index
    %c0_18 = arith.constant 0 : index
    %c0_19 = arith.constant 0 : index
    %23 = vector.load %arg3[%c2_17, %c0_18, %c0_19] : memref<9x1x128xf32, #tpu.memory_space<vmem>>, vector<1x1x128xf32>
    %24 = vector.shape_cast %23 : vector<1x1x128xf32> to vector<1x128xf32>
    %25 = vector.shape_cast %24 : vector<1x128xf32> to vector<1x1x128xf32>
    %26 = vector.broadcast %25 : vector<1x1x128xf32> to vector<16x16x128xf32>
    %27 = arith.mulf %22, %26 : vector<16x16x128xf32>
    %28 = arith.addf %21, %27 : vector<16x16x128xf32>
    %c1_20 = arith.constant 1 : index
    %c0_21 = arith.constant 0 : index
    %c0_22 = arith.constant 0 : index
    %29 = vector.load %arg6[%c1_20, %c0_21, %c0_22] : memref<18x18x128xf32, #tpu.memory_space<vmem>>, vector<16x16x128xf32>
    %c3 = arith.constant 3 : index
    %c0_23 = arith.constant 0 : index
    %c0_24 = arith.constant 0 : index
    %30 = vector.load %arg3[%c3, %c0_23, %c0_24] : memref<9x1x128xf32, #tpu.memory_space<vmem>>, vector<1x1x128xf32>
    %31 = vector.shape_cast %30 : vector<1x1x128xf32> to vector<1x128xf32>
    %32 = vector.shape_cast %31 : vector<1x128xf32> to vector<1x1x128xf32>
    %33 = vector.broadcast %32 : vector<1x1x128xf32> to vector<16x16x128xf32>
    %34 = arith.mulf %29, %33 : vector<16x16x128xf32>
    %35 = arith.addf %28, %34 : vector<16x16x128xf32>
    %c1_25 = arith.constant 1 : index
    %c1_26 = arith.constant 1 : index
    %c0_27 = arith.constant 0 : index
    %36 = vector.load %arg6[%c1_25, %c1_26, %c0_27] : memref<18x18x128xf32, #tpu.memory_space<vmem>>, vector<16x16x128xf32>
    %c4 = arith.constant 4 : index
    %c0_28 = arith.constant 0 : index
    %c0_29 = arith.constant 0 : index
    %37 = vector.load %arg3[%c4, %c0_28, %c0_29] : memref<9x1x128xf32, #tpu.memory_space<vmem>>, vector<1x1x128xf32>
    %38 = vector.shape_cast %37 : vector<1x1x128xf32> to vector<1x128xf32>
    %39 = vector.shape_cast %38 : vector<1x128xf32> to vector<1x1x128xf32>
    %40 = vector.broadcast %39 : vector<1x1x128xf32> to vector<16x16x128xf32>
    %41 = arith.mulf %36, %40 : vector<16x16x128xf32>
    %42 = arith.addf %35, %41 : vector<16x16x128xf32>
    %c1_30 = arith.constant 1 : index
    %c2_31 = arith.constant 2 : index
    %c0_32 = arith.constant 0 : index
    %43 = vector.load %arg6[%c1_30, %c2_31, %c0_32] : memref<18x18x128xf32, #tpu.memory_space<vmem>>, vector<16x16x128xf32>
    %c5 = arith.constant 5 : index
    %c0_33 = arith.constant 0 : index
    %c0_34 = arith.constant 0 : index
    %44 = vector.load %arg3[%c5, %c0_33, %c0_34] : memref<9x1x128xf32, #tpu.memory_space<vmem>>, vector<1x1x128xf32>
    %45 = vector.shape_cast %44 : vector<1x1x128xf32> to vector<1x128xf32>
    %46 = vector.shape_cast %45 : vector<1x128xf32> to vector<1x1x128xf32>
    %47 = vector.broadcast %46 : vector<1x1x128xf32> to vector<16x16x128xf32>
    %48 = arith.mulf %43, %47 : vector<16x16x128xf32>
    %49 = arith.addf %42, %48 : vector<16x16x128xf32>
    %c2_35 = arith.constant 2 : index
    %c0_36 = arith.constant 0 : index
    %c0_37 = arith.constant 0 : index
    %50 = vector.load %arg6[%c2_35, %c0_36, %c0_37] : memref<18x18x128xf32, #tpu.memory_space<vmem>>, vector<16x16x128xf32>
    %c6 = arith.constant 6 : index
    %c0_38 = arith.constant 0 : index
    %c0_39 = arith.constant 0 : index
    %51 = vector.load %arg3[%c6, %c0_38, %c0_39] : memref<9x1x128xf32, #tpu.memory_space<vmem>>, vector<1x1x128xf32>
    %52 = vector.shape_cast %51 : vector<1x1x128xf32> to vector<1x128xf32>
    %53 = vector.shape_cast %52 : vector<1x128xf32> to vector<1x1x128xf32>
    %54 = vector.broadcast %53 : vector<1x1x128xf32> to vector<16x16x128xf32>
    %55 = arith.mulf %50, %54 : vector<16x16x128xf32>
    %56 = arith.addf %49, %55 : vector<16x16x128xf32>
    %c2_40 = arith.constant 2 : index
    %c1_41 = arith.constant 1 : index
    %c0_42 = arith.constant 0 : index
    %57 = vector.load %arg6[%c2_40, %c1_41, %c0_42] : memref<18x18x128xf32, #tpu.memory_space<vmem>>, vector<16x16x128xf32>
    %c7 = arith.constant 7 : index
    %c0_43 = arith.constant 0 : index
    %c0_44 = arith.constant 0 : index
    %58 = vector.load %arg3[%c7, %c0_43, %c0_44] : memref<9x1x128xf32, #tpu.memory_space<vmem>>, vector<1x1x128xf32>
    %59 = vector.shape_cast %58 : vector<1x1x128xf32> to vector<1x128xf32>
    %60 = vector.shape_cast %59 : vector<1x128xf32> to vector<1x1x128xf32>
    %61 = vector.broadcast %60 : vector<1x1x128xf32> to vector<16x16x128xf32>
    %62 = arith.mulf %57, %61 : vector<16x16x128xf32>
    %63 = arith.addf %56, %62 : vector<16x16x128xf32>
    %c2_45 = arith.constant 2 : index
    %c2_46 = arith.constant 2 : index
    %c0_47 = arith.constant 0 : index
    %64 = vector.load %arg6[%c2_45, %c2_46, %c0_47] : memref<18x18x128xf32, #tpu.memory_space<vmem>>, vector<16x16x128xf32>
    %c8 = arith.constant 8 : index
    %c0_48 = arith.constant 0 : index
    %c0_49 = arith.constant 0 : index
    %65 = vector.load %arg3[%c8, %c0_48, %c0_49] : memref<9x1x128xf32, #tpu.memory_space<vmem>>, vector<1x1x128xf32>
    %66 = vector.shape_cast %65 : vector<1x1x128xf32> to vector<1x128xf32>
    %67 = vector.shape_cast %66 : vector<1x128xf32> to vector<1x1x128xf32>
    %68 = vector.broadcast %67 : vector<1x1x128xf32> to vector<16x16x128xf32>
    %69 = arith.mulf %64, %68 : vector<16x16x128xf32>
    %70 = arith.addf %63, %69 : vector<16x16x128xf32>
    %c0_50 = arith.constant 0 : index
    %c0_51 = arith.constant 0 : index
    %c0_52 = arith.constant 0 : index
    %71 = vector.load %arg4[%c0_50, %c0_51, %c0_52] : memref<1x1x128xf32, #tpu.memory_space<vmem>>, vector<1x1x128xf32>
    %72 = vector.shape_cast %71 : vector<1x1x128xf32> to vector<1x128xf32>
    %73 = vector.shape_cast %72 : vector<1x128xf32> to vector<1x1x128xf32>
    %74 = vector.broadcast %73 : vector<1x1x128xf32> to vector<16x16x128xf32>
    %75 = arith.addf %70, %74 : vector<16x16x128xf32>
    %cst = arith.constant 0.000000e+00 : f32
    %76 = vector.broadcast %cst : f32 to vector<16x16x128xf32>
    %77 = arith.maximumf %75, %76 : vector<16x16x128xf32>
    %c0_53 = arith.constant 0 : index
    %c0_54 = arith.constant 0 : index
    %c0_55 = arith.constant 0 : index
    %c0_56 = arith.constant 0 : index
    %78 = vector.load %arg5[%c0_53, %c0_54, %c0_55, %c0_56] : memref<1x16x16x128xf32, #tpu.memory_space<vmem>>, vector<1x16x16x128xf32>
    %79 = vector.shape_cast %78 : vector<1x16x16x128xf32> to vector<16x16x128xf32>
    %80 = vector.shape_cast %77 : vector<16x16x128xf32> to vector<1x16x16x128xf32>
    tpu.vector_store %arg5[%c0_53, %c0_54, %c0_55, %c0_56], %80 {strides = array<i32>} : memref<1x16x16x128xf32, #tpu.memory_space<vmem>>, vector<1x16x16x128xf32>,
    return
  }
  func.func @transform_1(%arg0: i32, %arg1: i32) -> (i32, i32, i32) {
    %c0_i32 = arith.constant 0 : i32
    %c0_i32_0 = arith.constant 0 : i32
    %c0_i32_1 = arith.constant 0 : i32
    %c0_i32_2 = arith.constant 0 : i32
    return %c0_i32, %c0_i32_0, %c0_i32_1 : i32, i32, i32
  }
  func.func @transform_2(%arg0: i32, %arg1: i32) -> (i32, i32, i32) {
    %c0_i32 = arith.constant 0 : i32
    %c0_i32_0 = arith.constant 0 : i32
    %c0_i32_1 = arith.constant 0 : i32
    %c0_i32_2 = arith.constant 0 : i32
    return %c0_i32, %c0_i32_0, %c0_i32_1 : i32, i32, i32
  }
  func.func @transform_3(%arg0: i32, %arg1: i32) -> (i32, i32, i32, i32) {
    %c0_i32 = arith.constant 0 : i32
    %c0_i32_0 = arith.constant 0 : i32
    %c0_i32_1 = arith.constant 0 : i32
    return %arg0, %arg1, %c0_i32, %c0_i32_0 : i32, i32, i32, i32
  }
}

module attributes {stable_mosaic.version = 11 : i64} {
  func.func @_h_interp_kernel(%arg0: i32, %arg1: i32, %arg2: i32, %arg3: memref<32x16xf32, #tpu.memory_space<vmem>>, %arg4: memref<1x16x2048xf32, #tpu.memory_space<vmem>>, %arg5: memref<1x32x2048xf32, #tpu.memory_space<vmem>>) attributes {dimension_semantics = [#tpu.dimension_semantics<parallel>, #tpu.dimension_semantics<parallel>, #tpu.dimension_semantics<parallel>], iteration_bounds = array<i64: 2, 1, 1>, scalar_prefetch = 0 : i64, scratch_operands = 0 : i64, tpu.core_type = #tpu.core_type<tc>, window_params = [{transform_indices = @transform_0, window_bounds = array<i64: 32, 16>}, {transform_indices = @transform_1, window_bounds = array<i64: 1, 16, 2048>}, {transform_indices = @transform_2, window_bounds = array<i64: 1, 32, 2048>}]} {
    %c0 = arith.constant 0 : index
    %c0_0 = arith.constant 0 : index
    %0 = vector.load %arg3[%c0, %c0_0] : memref<32x16xf32, #tpu.memory_space<vmem>>, vector<32x16xf32>
    %c0_1 = arith.constant 0 : index
    %c0_2 = arith.constant 0 : index
    %c0_3 = arith.constant 0 : index
    %1 = vector.load %arg4[%c0_1, %c0_2, %c0_3] : memref<1x16x2048xf32, #tpu.memory_space<vmem>>, vector<1x16x2048xf32>
    %2 = vector.shape_cast %1 : vector<1x16x2048xf32> to vector<16x2048xf32>
    %cst = arith.constant dense<0.000000e+00> : vector<32x2048xf32>
    %3 = tpu.matmul %0, %2, %cst {dimension_numbers = #tpu.dot_dimension_numbers<[1], [0], [0], [1], [0, 0, 1, 1], [], []>} : vector<32x16xf32>, vector<16x2048xf32>, vector<32x2048xf32> -> vector<32x2048xf32>
    %c0_4 = arith.constant 0 : index
    %c0_5 = arith.constant 0 : index
    %c0_6 = arith.constant 0 : index
    %4 = vector.load %arg5[%c0_4, %c0_5, %c0_6] : memref<1x32x2048xf32, #tpu.memory_space<vmem>>, vector<1x32x2048xf32>
    %5 = vector.shape_cast %4 : vector<1x32x2048xf32> to vector<32x2048xf32>
    %6 = vector.shape_cast %3 : vector<32x2048xf32> to vector<1x32x2048xf32>
    tpu.vector_store %arg5[%c0_4, %c0_5, %c0_6], %6 {strides = array<i32>} : memref<1x32x2048xf32, #tpu.memory_space<vmem>>, vector<1x32x2048xf32>,
    return
  }
  func.func @transform_0(%arg0: i32, %arg1: i32, %arg2: i32) -> (i32, i32) {
    %c0_i32 = arith.constant 0 : i32
    %c0_i32_0 = arith.constant 0 : i32
    return %arg1, %c0_i32 : i32, i32
  }
  func.func @transform_1(%arg0: i32, %arg1: i32, %arg2: i32) -> (i32, i32, i32) {
    %c0_i32 = arith.constant 0 : i32
    %c0_i32_0 = arith.constant 0 : i32
    return %arg0, %c0_i32, %arg2 : i32, i32, i32
  }
  func.func @transform_2(%arg0: i32, %arg1: i32, %arg2: i32) -> (i32, i32, i32) {
    %c0_i32 = arith.constant 0 : i32
    return %arg0, %arg1, %arg2 : i32, i32, i32
  }
}

module attributes {stable_mosaic.version = 11 : i64} {
  func.func @_w_interp_kernel(%arg0: i32, %arg1: memref<32x16xf32, #tpu.memory_space<vmem>>, %arg2: memref<8x16x128xf32, #tpu.memory_space<vmem>>, %arg3: memref<8x32x128xf32, #tpu.memory_space<vmem>>) attributes {dimension_semantics = [#tpu.dimension_semantics<parallel>], iteration_bounds = array<i64: 8>, scalar_prefetch = 0 : i64, scratch_operands = 0 : i64, tpu.core_type = #tpu.core_type<tc>, window_params = [{pipeline_mode = #tpu.pipeline_mode<synchronous>, transform_indices = @transform_0, window_bounds = array<i64: 32, 16>}, {transform_indices = @transform_1, window_bounds = array<i64: 8, 16, 128>}, {transform_indices = @transform_2, window_bounds = array<i64: 8, 32, 128>}]} {
    %c0 = arith.constant 0 : index
    %c0_0 = arith.constant 0 : index
    %0 = vector.load %arg1[%c0, %c0_0] : memref<32x16xf32, #tpu.memory_space<vmem>>, vector<32x16xf32>
    %c0_1 = arith.constant 0 : index
    %c0_2 = arith.constant 0 : index
    %c0_3 = arith.constant 0 : index
    %1 = vector.load %arg2[%c0_1, %c0_2, %c0_3] : memref<8x16x128xf32, #tpu.memory_space<vmem>>, vector<1x16x128xf32>
    %2 = vector.shape_cast %1 : vector<1x16x128xf32> to vector<16x128xf32>
    %cst = arith.constant dense<0.000000e+00> : vector<32x128xf32>
    %3 = tpu.matmul %0, %2, %cst {dimension_numbers = #tpu.dot_dimension_numbers<[1], [0], [0], [1], [0, 0, 1, 1], [], []>} : vector<32x16xf32>, vector<16x128xf32>, vector<32x128xf32> -> vector<32x128xf32>
    %c0_4 = arith.constant 0 : index
    %c0_5 = arith.constant 0 : index
    %c0_6 = arith.constant 0 : index
    %4 = vector.load %arg3[%c0_4, %c0_5, %c0_6] : memref<8x32x128xf32, #tpu.memory_space<vmem>>, vector<1x32x128xf32>
    %5 = vector.shape_cast %4 : vector<1x32x128xf32> to vector<32x128xf32>
    %6 = vector.shape_cast %3 : vector<32x128xf32> to vector<1x32x128xf32>
    tpu.vector_store %arg3[%c0_4, %c0_5, %c0_6], %6 {strides = array<i32>} : memref<8x32x128xf32, #tpu.memory_space<vmem>>, vector<1x32x128xf32>,
    %c1 = arith.constant 1 : index
    %c0_7 = arith.constant 0 : index
    %c0_8 = arith.constant 0 : index
    %7 = vector.load %arg2[%c1, %c0_7, %c0_8] : memref<8x16x128xf32, #tpu.memory_space<vmem>>, vector<1x16x128xf32>
    %8 = vector.shape_cast %7 : vector<1x16x128xf32> to vector<16x128xf32>
    %cst_9 = arith.constant dense<0.000000e+00> : vector<32x128xf32>
    %9 = tpu.matmul %0, %8, %cst_9 {dimension_numbers = #tpu.dot_dimension_numbers<[1], [0], [0], [1], [0, 0, 1, 1], [], []>} : vector<32x16xf32>, vector<16x128xf32>, vector<32x128xf32> -> vector<32x128xf32>
    %c1_10 = arith.constant 1 : index
    %c0_11 = arith.constant 0 : index
    %c0_12 = arith.constant 0 : index
    %10 = vector.load %arg3[%c1_10, %c0_11, %c0_12] : memref<8x32x128xf32, #tpu.memory_space<vmem>>, vector<1x32x128xf32>
    %11 = vector.shape_cast %10 : vector<1x32x128xf32> to vector<32x128xf32>
    %12 = vector.shape_cast %9 : vector<32x128xf32> to vector<1x32x128xf32>
    tpu.vector_store %arg3[%c1_10, %c0_11, %c0_12], %12 {strides = array<i32>} : memref<8x32x128xf32, #tpu.memory_space<vmem>>, vector<1x32x128xf32>,
    %c2 = arith.constant 2 : index
    %c0_13 = arith.constant 0 : index
    %c0_14 = arith.constant 0 : index
    %13 = vector.load %arg2[%c2, %c0_13, %c0_14] : memref<8x16x128xf32, #tpu.memory_space<vmem>>, vector<1x16x128xf32>
    %14 = vector.shape_cast %13 : vector<1x16x128xf32> to vector<16x128xf32>
    %cst_15 = arith.constant dense<0.000000e+00> : vector<32x128xf32>
    %15 = tpu.matmul %0, %14, %cst_15 {dimension_numbers = #tpu.dot_dimension_numbers<[1], [0], [0], [1], [0, 0, 1, 1], [], []>} : vector<32x16xf32>, vector<16x128xf32>, vector<32x128xf32> -> vector<32x128xf32>
    %c2_16 = arith.constant 2 : index
    %c0_17 = arith.constant 0 : index
    %c0_18 = arith.constant 0 : index
    %16 = vector.load %arg3[%c2_16, %c0_17, %c0_18] : memref<8x32x128xf32, #tpu.memory_space<vmem>>, vector<1x32x128xf32>
    %17 = vector.shape_cast %16 : vector<1x32x128xf32> to vector<32x128xf32>
    %18 = vector.shape_cast %15 : vector<32x128xf32> to vector<1x32x128xf32>
    tpu.vector_store %arg3[%c2_16, %c0_17, %c0_18], %18 {strides = array<i32>} : memref<8x32x128xf32, #tpu.memory_space<vmem>>, vector<1x32x128xf32>,
    %c3 = arith.constant 3 : index
    %c0_19 = arith.constant 0 : index
    %c0_20 = arith.constant 0 : index
    %19 = vector.load %arg2[%c3, %c0_19, %c0_20] : memref<8x16x128xf32, #tpu.memory_space<vmem>>, vector<1x16x128xf32>
    %20 = vector.shape_cast %19 : vector<1x16x128xf32> to vector<16x128xf32>
    %cst_21 = arith.constant dense<0.000000e+00> : vector<32x128xf32>
    %21 = tpu.matmul %0, %20, %cst_21 {dimension_numbers = #tpu.dot_dimension_numbers<[1], [0], [0], [1], [0, 0, 1, 1], [], []>} : vector<32x16xf32>, vector<16x128xf32>, vector<32x128xf32> -> vector<32x128xf32>
    %c3_22 = arith.constant 3 : index
    %c0_23 = arith.constant 0 : index
    %c0_24 = arith.constant 0 : index
    %22 = vector.load %arg3[%c3_22, %c0_23, %c0_24] : memref<8x32x128xf32, #tpu.memory_space<vmem>>, vector<1x32x128xf32>
    %23 = vector.shape_cast %22 : vector<1x32x128xf32> to vector<32x128xf32>
    %24 = vector.shape_cast %21 : vector<32x128xf32> to vector<1x32x128xf32>
    tpu.vector_store %arg3[%c3_22, %c0_23, %c0_24], %24 {strides = array<i32>} : memref<8x32x128xf32, #tpu.memory_space<vmem>>, vector<1x32x128xf32>,
    %c4 = arith.constant 4 : index
    %c0_25 = arith.constant 0 : index
    %c0_26 = arith.constant 0 : index
    %25 = vector.load %arg2[%c4, %c0_25, %c0_26] : memref<8x16x128xf32, #tpu.memory_space<vmem>>, vector<1x16x128xf32>
    %26 = vector.shape_cast %25 : vector<1x16x128xf32> to vector<16x128xf32>
    %cst_27 = arith.constant dense<0.000000e+00> : vector<32x128xf32>
    %27 = tpu.matmul %0, %26, %cst_27 {dimension_numbers = #tpu.dot_dimension_numbers<[1], [0], [0], [1], [0, 0, 1, 1], [], []>} : vector<32x16xf32>, vector<16x128xf32>, vector<32x128xf32> -> vector<32x128xf32>
    %c4_28 = arith.constant 4 : index
    %c0_29 = arith.constant 0 : index
    %c0_30 = arith.constant 0 : index
    %28 = vector.load %arg3[%c4_28, %c0_29, %c0_30] : memref<8x32x128xf32, #tpu.memory_space<vmem>>, vector<1x32x128xf32>
    %29 = vector.shape_cast %28 : vector<1x32x128xf32> to vector<32x128xf32>
    %30 = vector.shape_cast %27 : vector<32x128xf32> to vector<1x32x128xf32>
    tpu.vector_store %arg3[%c4_28, %c0_29, %c0_30], %30 {strides = array<i32>} : memref<8x32x128xf32, #tpu.memory_space<vmem>>, vector<1x32x128xf32>,
    %c5 = arith.constant 5 : index
    %c0_31 = arith.constant 0 : index
    %c0_32 = arith.constant 0 : index
    %31 = vector.load %arg2[%c5, %c0_31, %c0_32] : memref<8x16x128xf32, #tpu.memory_space<vmem>>, vector<1x16x128xf32>
    %32 = vector.shape_cast %31 : vector<1x16x128xf32> to vector<16x128xf32>
    %cst_33 = arith.constant dense<0.000000e+00> : vector<32x128xf32>
    %33 = tpu.matmul %0, %32, %cst_33 {dimension_numbers = #tpu.dot_dimension_numbers<[1], [0], [0], [1], [0, 0, 1, 1], [], []>} : vector<32x16xf32>, vector<16x128xf32>, vector<32x128xf32> -> vector<32x128xf32>
    %c5_34 = arith.constant 5 : index
    %c0_35 = arith.constant 0 : index
    %c0_36 = arith.constant 0 : index
    %34 = vector.load %arg3[%c5_34, %c0_35, %c0_36] : memref<8x32x128xf32, #tpu.memory_space<vmem>>, vector<1x32x128xf32>
    %35 = vector.shape_cast %34 : vector<1x32x128xf32> to vector<32x128xf32>
    %36 = vector.shape_cast %33 : vector<32x128xf32> to vector<1x32x128xf32>
    tpu.vector_store %arg3[%c5_34, %c0_35, %c0_36], %36 {strides = array<i32>} : memref<8x32x128xf32, #tpu.memory_space<vmem>>, vector<1x32x128xf32>,
    %c6 = arith.constant 6 : index
    %c0_37 = arith.constant 0 : index
    %c0_38 = arith.constant 0 : index
    %37 = vector.load %arg2[%c6, %c0_37, %c0_38] : memref<8x16x128xf32, #tpu.memory_space<vmem>>, vector<1x16x128xf32>
    %38 = vector.shape_cast %37 : vector<1x16x128xf32> to vector<16x128xf32>
    %cst_39 = arith.constant dense<0.000000e+00> : vector<32x128xf32>
    %39 = tpu.matmul %0, %38, %cst_39 {dimension_numbers = #tpu.dot_dimension_numbers<[1], [0], [0], [1], [0, 0, 1, 1], [], []>} : vector<32x16xf32>, vector<16x128xf32>, vector<32x128xf32> -> vector<32x128xf32>
    %c6_40 = arith.constant 6 : index
    %c0_41 = arith.constant 0 : index
    %c0_42 = arith.constant 0 : index
    %40 = vector.load %arg3[%c6_40, %c0_41, %c0_42] : memref<8x32x128xf32, #tpu.memory_space<vmem>>, vector<1x32x128xf32>
    %41 = vector.shape_cast %40 : vector<1x32x128xf32> to vector<32x128xf32>
    %42 = vector.shape_cast %39 : vector<32x128xf32> to vector<1x32x128xf32>
    tpu.vector_store %arg3[%c6_40, %c0_41, %c0_42], %42 {strides = array<i32>} : memref<8x32x128xf32, #tpu.memory_space<vmem>>, vector<1x32x128xf32>,
    %c7 = arith.constant 7 : index
    %c0_43 = arith.constant 0 : index
    %c0_44 = arith.constant 0 : index
    %43 = vector.load %arg2[%c7, %c0_43, %c0_44] : memref<8x16x128xf32, #tpu.memory_space<vmem>>, vector<1x16x128xf32>
    %44 = vector.shape_cast %43 : vector<1x16x128xf32> to vector<16x128xf32>
    %cst_45 = arith.constant dense<0.000000e+00> : vector<32x128xf32>
    %45 = tpu.matmul %0, %44, %cst_45 {dimension_numbers = #tpu.dot_dimension_numbers<[1], [0], [0], [1], [0, 0, 1, 1], [], []>} : vector<32x16xf32>, vector<16x128xf32>, vector<32x128xf32> -> vector<32x128xf32>
    %c7_46 = arith.constant 7 : index
    %c0_47 = arith.constant 0 : index
    %c0_48 = arith.constant 0 : index
    %46 = vector.load %arg3[%c7_46, %c0_47, %c0_48] : memref<8x32x128xf32, #tpu.memory_space<vmem>>, vector<1x32x128xf32>
    %47 = vector.shape_cast %46 : vector<1x32x128xf32> to vector<32x128xf32>
    %48 = vector.shape_cast %45 : vector<32x128xf32> to vector<1x32x128xf32>
    tpu.vector_store %arg3[%c7_46, %c0_47, %c0_48], %48 {strides = array<i32>} : memref<8x32x128xf32, #tpu.memory_space<vmem>>, vector<1x32x128xf32>,
    return
  }
  func.func @transform_0(%arg0: i32) -> (i32, i32) {
    %c0_i32 = arith.constant 0 : i32
    %c0_i32_0 = arith.constant 0 : i32
    %c0_i32_1 = arith.constant 0 : i32
    return %c0_i32, %c0_i32_0 : i32, i32
  }
  func.func @transform_1(%arg0: i32) -> (i32, i32, i32) {
    %c0_i32 = arith.constant 0 : i32
    %c0_i32_0 = arith.constant 0 : i32
    %c0_i32_1 = arith.constant 0 : i32
    return %arg0, %c0_i32, %c0_i32_0 : i32, i32, i32
  }
  func.func @transform_2(%arg0: i32) -> (i32, i32, i32) {
    %c0_i32 = arith.constant 0 : i32
    %c0_i32_0 = arith.constant 0 : i32
    %c0_i32_1 = arith.constant 0 : i32
    return %arg0, %c0_i32, %c0_i32_0 : i32, i32, i32
  }
}

</mosaic_0001>

<llo_original>
// kernel: classifier_forward.7
$region0: #{classifier_forward.7}
  #allocation0 [shape = 'u32[]', space=smem, size = 0x4, offset = 0x4, fixed_abs, tag = 'smem constant byte address 0x4 - core index']
  #allocation1 [shape = 'u32[144,128]{1,0:T(1,128)}', space=vmem, size = 0x12000, scoped, tag = 'internal scratch']
  %s0 = inlined_call_operand.hbm [shape: f32[512,128], index: 0, kind: input, shape index: {}]
  %s1 = inlined_call_operand.hbm [shape: f32[128,128], index: 1, kind: input, shape index: {}]
  %s2 = inlined_call_operand.hbm [shape: f32[1,128], index: 2, kind: input, shape index: {}]
  %s3 = inlined_call_operand.hbm [shape: f32[512,128], index: 3, kind: output, shape index: {}]
  %s4 = sld [smem:[#allocation0]]
  $region57: #{classifier_forward.7} parent=0
    _
  %s6 = ssub.s32 1, %s4
  %s7 = scalar_select 0, %s6, %s4
  $region1: #{classifier_forward.7} parent=0
    #allocation2 [shape = 'u8[262144]{0}', space=vmem, size = 0x40000, scoped, tag = 'input window, operand 0']
    #allocation3 [shape = 's32[2]{0}', space=sflag, size = 0x8, scoped, tag = 'scoped memory for classifier_forward.7']
    #allocation4 [shape = 's32[2]{0}', space=sflag, size = 0x8, scoped, tag = 'scoped memory for classifier_forward.7']
    #allocation5 [shape = 'u8[65536]{0}', space=vmem, size = 0x10000, scoped, tag = 'input window, operand 1, single buffered']
    #allocation6 [shape = 's32[1]{0}', space=sflag, size = 0x4, scoped, tag = 'scoped memory for classifier_forward.7']
    #allocation7 [shape = 'u8[512]{0}', space=vmem, size = 0x400, scoped, tag = 'input window, operand 2, single buffered']
    #allocation8 [shape = 'u8[262144]{0}', space=vmem, size = 0x40000, scoped, tag = 'output window, operand 0']
    %8 = vsyncpa [#allocation3], 0
    %s9 = scalar_lea.sflag [#allocation3], 1
    %10 = vsyncpa %s9, 0
    %11 = vsyncpa [#allocation6], 0
    %12 = vsyncpa [#allocation4], 0
    %s13 = scalar_lea.sflag [#allocation4], 1
    %14 = vsyncpa %s13, 0
    loop: start=0, step=1, limit=4
    $region2: #{classifier_forward.7} parent=1 // loop_pre_header
      _
    $region3: #{classifier_forward.7} parent=1 // loop_header
      %s16 = sphi 0, %s20
      %p17 = scmp.ge.s32.totalorder %s16, 4
      %s26 = sphi 0, %s28
      %s29 = sphi 0, %s26
      %s30 = sphi 0, %s29
      %s46 = sphi 0, %s30
      %s50 = sphi 0, %s50
      %s52 = sphi 0, %s50
      %s53 = sphi 0, %s52
      %s67 = sphi 0, %s53
      %s71 = sphi 0, %s71
      %s73 = sphi 0, %s71
      %s74 = sphi 0, %s73
      %s88 = sphi 0, %s74
      %s94 = sphi 0, %s96
      %s97 = sphi 0, %s94
      %s98 = sphi 0, %s97
      %s114 = sphi 0, %s98
    $region4: #{classifier_forward.7} parent=1 // loop_header_branch
      %19 = sbr.rel (%p17) target = $region8
    $region5: #{classifier_forward.7} parent=1 // loop_body
      %s21 = ssub.s32 %s16, 1
      %s22 = ssub.s32 %s16, 2
      %s23 = sadd.s32 %s16, 1
      %s24 = ssub.s32 %s16, %s23
      %p25 = scmp.eq.s32.totalorder %s24, 0
      %s27 = sadd.s32 %s26, 1
      %s28 = scalar_select %p25, %s26, %s27
      %p31 = pneg %p25
      %p32 = scmp.eq.s32.totalorder %s16, 1
      %p33 = por %p31, %p32
      %p34 = scmp.ne.s32.totalorder %s26, %s29
      %p35 = scmp.eq.s32.totalorder %s16, 0
      %p36 = por %p34, %p35
      %p37 = scmp.ne.s32.totalorder %s26, %s29
      %p38 = scmp.eq.s32.totalorder %s21, 1
      %p39 = por %p37, %p38
      %p40 = scmp.ne.s32.totalorder %s29, %s30
      %p41 = scmp.eq.s32.totalorder %s21, 0
      %p42 = por %p40, %p41
      %p43 = scmp.ne.s32.totalorder %s29, %s30
      %p44 = scmp.eq.s32.totalorder %s22, 1
      %p45 = por %p43, %p44
      %p47 = scmp.ne.s32.totalorder %s30, %s46
      %p48 = scmp.eq.s32.totalorder %s22, 0
      %p49 = por %p47, %p48
      %s51 = sadd.s32 %s50, 1
      %p54 = scmp.eq.s32.totalorder %s16, 1
      %p55 = scmp.ne.s32.totalorder %s50, %s52
      %p56 = scmp.eq.s32.totalorder %s16, 0
      %p57 = por %p55, %p56
      %p58 = scmp.ne.s32.totalorder %s50, %s52
      %p59 = scmp.eq.s32.totalorder %s21, 1
      %p60 = por %p58, %p59
      %p61 = scmp.ne.s32.totalorder %s52, %s53
      %p62 = scmp.eq.s32.totalorder %s21, 0
      %p63 = por %p61, %p62
      %p64 = scmp.ne.s32.totalorder %s52, %s53
      %p65 = scmp.eq.s32.totalorder %s22, 1
      %p66 = por %p64, %p65
      %p68 = scmp.ne.s32.totalorder %s53, %s67
      %p69 = scmp.eq.s32.totalorder %s22, 0
      %p70 = por %p68, %p69
      %s72 = sadd.s32 %s71, 1
      %p75 = scmp.eq.s32.totalorder %s16, 1
      %p76 = scmp.ne.s32.totalorder %s71, %s73
      %p77 = scmp.eq.s32.totalorder %s16, 0
      %p78 = por %p76, %p77
      %p79 = scmp.ne.s32.totalorder %s71, %s73
      %p80 = scmp.eq.s32.totalorder %s21, 1
      %p81 = por %p79, %p80
      %p82 = scmp.ne.s32.totalorder %s73, %s74
      %p83 = scmp.eq.s32.totalorder %s21, 0
      %p84 = por %p82, %p83
      %p85 = scmp.ne.s32.totalorder %s73, %s74
      %p86 = scmp.eq.s32.totalorder %s22, 1
      %p87 = por %p85, %p86
      %p89 = scmp.ne.s32.totalorder %s74, %s88
      %p90 = scmp.eq.s32.totalorder %s22, 0
      %p91 = por %p89, %p90
      %s92 = ssub.s32 %s16, %s23
      %p93 = scmp.eq.s32.totalorder %s92, 0
      %s95 = sadd.s32 %s94, 1
      %s96 = scalar_select %p93, %s94, %s95
      %p99 = pneg %p93
      %p100 = scmp.eq.s32.totalorder %s16, 1
      %p101 = por %p99, %p100
      %p102 = scmp.ne.s32.totalorder %s94, %s97
      %p103 = scmp.eq.s32.totalorder %s16, 0
      %p104 = por %p102, %p103
      %p105 = scmp.ne.s32.totalorder %s94, %s97
      %p106 = scmp.eq.s32.totalorder %s21, 1
      %p107 = por %p105, %p106
      %p108 = scmp.ne.s32.totalorder %s97, %s98
      %p109 = scmp.eq.s32.totalorder %s21, 0
      %p110 = por %p108, %p109
      %p111 = scmp.ne.s32.totalorder %s97, %s98
      %p112 = scmp.eq.s32.totalorder %s22, 1
      %p113 = por %p111, %p112
      %p115 = scmp.ne.s32.totalorder %s98, %s114
      %p116 = scmp.eq.s32.totalorder %s22, 0
      %p117 = por %p115, %p116
      %p118 = scmp.le.s32.totalorder 1, %s16
      %p119 = scmp.lt.s32.totalorder %s16, 3
      %p120 = pnand %p118, %p119
      %p121 = pneg %p120
      // Predicated region
      $region9: #{classifier_forward.7} parent=5 // pred_check
        _
      $region10: #{classifier_forward.7} parent=5 // pred_check_branch
        %123 = sbr.rel (%p120) target = $region12
      $region11: #{classifier_forward.7} parent=5 // pred_region
        %s124 = ssub.s32 %s16, 1
        // Predicated region
        $region13: #{classifier_forward.7} parent=11 // pred_check
          %p125 = pneg %p63
        $region14: #{classifier_forward.7} parent=11 // pred_check_branch
          %127 = sbr.rel (%p125) target = $region16
        $region15: #{classifier_forward.7} parent=11 // pred_region
          %s129 = ssub.s32 2048, 2048
          %130 = vsyncadd [#allocation6], %s129
          %s131 = sshll.u32 [#allocation5], 4
          %s132 = int_to_ptr.vmem [resolvable:$true] %s131
          %137 = dma.hbm_to_vmem [thread:$0]  %s1, 2048, %s132, [#allocation6], 128, 128, 8
        $region16: #{classifier_forward.7} parent=11 // pred_fallthru
          _
        // Predicated region
        $region17: #{classifier_forward.7} parent=11 // pred_check
          %p138 = pneg %p84
        $region18: #{classifier_forward.7} parent=11 // pred_check_branch
          %140 = sbr.rel (%p138) target = $region20
        $region19: #{classifier_forward.7} parent=11 // pred_region
          %s142 = ssub.s32 16, 16
          %143 = vsyncadd [#allocation6], %s142
          %s145 = sshll.u32 [#allocation7], 4
          %s146 = int_to_ptr.vmem [resolvable:$true] %s145
          %148 = dma.hbm_to_vmem [thread:$0]  %s2, 16, %s146, [#allocation6]
        $region20: #{classifier_forward.7} parent=11 // pred_fallthru
          _
      $region12: #{classifier_forward.7} parent=5 // pred_fallthru
        _
      %p149 = scmp.lt.s32.totalorder %s16, 2
      // Predicated region
      $region21: #{classifier_forward.7} parent=5 // pred_check
        %p150 = pneg %p149
      $region22: #{classifier_forward.7} parent=5 // pred_check_branch
        %152 = sbr.rel (%p150) target = $region24
      $region23: #{classifier_forward.7} parent=5 // pred_region
        // Predicated region
        $region25: #{classifier_forward.7} parent=23 // pred_check
          %p153 = pneg %p36
        $region26: #{classifier_forward.7} parent=23 // pred_check_branch
          %155 = sbr.rel (%p153) target = $region28
        $region27: #{classifier_forward.7} parent=23 // pred_region
          %s156 = sand.u32 %s26, 1
          %s157 = scalar_lea.sflag [#allocation3], %s156
          %s158 = sand.u32 %s26, 1
          %s159 = smul.addr %s158, 256
          %s160 = scalar_lea.vmem [#allocation2], %s159
          %s161 = smul.u32 32, %s16
          %s163 = ssub.s32 4096, 4096
          %164 = vsyncadd %s157, %s163
          %s165 = smul.addr %s161, 128
          %s166 = scalar_lea.hbm %s0, %s165
          %s167 = sshll.u32 %s160, 4
          %s168 = int_to_ptr.vmem [resolvable:$true] %s167
          %173 = dma.hbm_to_vmem [thread:$0]  %s166, 4096, %s168, %s157, 128, 128, 8
        $region28: #{classifier_forward.7} parent=23 // pred_fallthru
          _
      $region24: #{classifier_forward.7} parent=5 // pred_fallthru
        _
      %p174 = scmp.le.s32.totalorder 1, %s16
      %p175 = scmp.lt.s32.totalorder %s16, 3
      %p176 = pnand %p174, %p175
      %p177 = pneg %p176
      // Predicated region
      $region29: #{classifier_forward.7} parent=5 // pred_check
        _
      $region30: #{classifier_forward.7} parent=5 // pred_check_branch
        %179 = sbr.rel (%p176) target = $region32
      $region31: #{classifier_forward.7} parent=5 // pred_region
        %s180 = ssub.s32 %s16, 1
        %s181 = sand.u32 %s29, 1
        %s182 = scalar_lea.sflag [#allocation3], %s181
        %s183 = sand.u32 %s29, 1
        %s184 = smul.addr %s183, 256
        %s185 = scalar_lea.vmem [#allocation2], %s184
        // Predicated region
        $region33: #{classifier_forward.7} parent=31 // pred_check
          %p186 = pneg %p42
        $region34: #{classifier_forward.7} parent=31 // pred_check_branch
          %188 = sbr.rel (%p186) target = $region36
        $region35: #{classifier_forward.7} parent=31 // pred_region
          %189 = dma.done %s182, 4096
        $region36: #{classifier_forward.7} parent=31 // pred_fallthru
          _
        // Predicated region
        $region37: #{classifier_forward.7} parent=31 // pred_check
          %p190 = pneg %p63
        $region38: #{classifier_forward.7} parent=31 // pred_check_branch
          %192 = sbr.rel (%p190) target = $region40
        $region39: #{classifier_forward.7} parent=31 // pred_region
          %193 = dma.done [#allocation6], 2048
        $region40: #{classifier_forward.7} parent=31 // pred_fallthru
          _
        // Predicated region
        $region41: #{classifier_forward.7} parent=31 // pred_check
          %p194 = pneg %p84
        $region42: #{classifier_forward.7} parent=31 // pred_check_branch
          %196 = sbr.rel (%p194) target = $region44
        $region43: #{classifier_forward.7} parent=31 // pred_region
          %197 = dma.done [#allocation6], 16
        $region44: #{classifier_forward.7} parent=31 // pred_fallthru
          _
        %s198 = sand.u32 %s29, 1
        %s199 = scalar_lea.sflag [#allocation3], %s198
        %s200 = sand.u32 %s29, 1
        %s201 = smul.addr %s200, 256
        %s202 = scalar_lea.vmem [#allocation2], %s201
        %p203 = pneg %p42
        %p204 = pneg %p39
        %p205 = pneg %p63
        %p206 = pneg %p60
        %p207 = pneg %p84
        %p208 = pneg %p81
        %p209 = pneg %p110
        %p210 = pneg %p107
        %s211 = sand.u32 %s97, 1
        %s212 = scalar_lea.sflag [#allocation4], %s211
        %s213 = sand.u32 %s97, 1
        %s214 = smul.addr %s213, 256
        %s215 = scalar_lea.vmem [#allocation8], %s214
        %s216 = smul.u32 32, %s21
        %s217 = smul.u32 32, %s21
        %v218 = vld [vmem:[%s185] sm:$0xff]
        %v219 = vld [vmem:[%s185 + $0x8] sm:$0xff]
        %v220 = vld [vmem:[%s185 + $0x10] sm:$0xff]
        %v221 = vld [vmem:[%s185 + $0x18] sm:$0xff]
        %v222 = vld [vmem:[%s185 + $0x20] sm:$0xff]
        %v223 = vld [vmem:[%s185 + $0x28] sm:$0xff]
        %v224 = vld [vmem:[%s185 + $0x30] sm:$0xff]
        %v225 = vld [vmem:[%s185 + $0x38] sm:$0xff]
        %v226 = vld [vmem:[%s185 + $0x40] sm:$0xff]
        %v227 = vld [vmem:[%s185 + $0x48] sm:$0xff]
        %v228 = vld [vmem:[%s185 + $0x50] sm:$0xff]
        %v229 = vld [vmem:[%s185 + $0x58] sm:$0xff]
        %v230 = vld [vmem:[%s185 + $0x60] sm:$0xff]
        %v231 = vld [vmem:[%s185 + $0x68] sm:$0xff]
        %v232 = vld [vmem:[%s185 + $0x70] sm:$0xff]
        %v233 = vld [vmem:[%s185 + $0x78] sm:$0xff]
        %v234 = vld [vmem:[%s185 + $0x80] sm:$0xff]
        %v235 = vld [vmem:[%s185 + $0x88] sm:$0xff]
        %v236 = vld [vmem:[%s185 + $0x90] sm:$0xff]
        %v237 = vld [vmem:[%s185 + $0x98] sm:$0xff]
        %v238 = vld [vmem:[%s185 + $0xa0] sm:$0xff]
        %v239 = vld [vmem:[%s185 + $0xa8] sm:$0xff]
        %v240 = vld [vmem:[%s185 + $0xb0] sm:$0xff]
        %v241 = vld [vmem:[%s185 + $0xb8] sm:$0xff]
        %v242 = vld [vmem:[%s185 + $0xc0] sm:$0xff]
        %v243 = vld [vmem:[%s185 + $0xc8] sm:$0xff]
        %v244 = vld [vmem:[%s185 + $0xd0] sm:$0xff]
        %v245 = vld [vmem:[%s185 + $0xd8] sm:$0xff]
        %v246 = vld [vmem:[%s185 + $0xe0] sm:$0xff]
        %v247 = vld [vmem:[%s185 + $0xe8] sm:$0xff]
        %v248 = vld [vmem:[%s185 + $0xf0] sm:$0xff]
        %v249 = vld [vmem:[%s185 + $0xf8] sm:$0xff]
        %v250 = vld [vmem:[#allocation5] sm:$0xff]
        %v251 = vld [vmem:[#allocation5 + $0x8] sm:$0xff]
        %v252 = vld [vmem:[#allocation5 + $0x10] sm:$0xff]
        %v253 = vld [vmem:[#allocation5 + $0x18] sm:$0xff]
        %v254 = vld [vmem:[#allocation5 + $0x20] sm:$0xff]
        %v255 = vld [vmem:[#allocation5 + $0x28] sm:$0xff]
        %v256 = vld [vmem:[#allocation5 + $0x30] sm:$0xff]
        %v257 = vld [vmem:[#allocation5 + $0x38] sm:$0xff]
        %v258 = vld [vmem:[#allocation5 + $0x40] sm:$0xff]
        %v259 = vld [vmem:[#allocation5 + $0x48] sm:$0xff]
        %v260 = vld [vmem:[#allocation5 + $0x50] sm:$0xff]
        %v261 = vld [vmem:[#allocation5 + $0x58] sm:$0xff]
        %v262 = vld [vmem:[#allocation5 + $0x60] sm:$0xff]
        %v263 = vld [vmem:[#allocation5 + $0x68] sm:$0xff]
        %v264 = vld [vmem:[#allocation5 + $0x70] sm:$0xff]
        %v265 = vld [vmem:[#allocation5 + $0x78] sm:$0xff]
        %v266 = vld [vmem:[#allocation7] sm:$0x1]
        %v268 = vlaneseq
        %v269 = vshrl.u32 %v268, 7
        %v270 = vsub.s32 0, %v269
        %v271 = vrot.slane %v266, %v270
        %273 = vmatprep.subr.mxu0 0.0
        %274 = vmatpush1.msra.mxu0 %v250
        %275 = vmatprep.subr.mxu0 0.0
        %276 = vmatpush1.msra.mxu0 %v251
        %277 = vmatprep.subr.mxu0 0.0
        %278 = vmatpush1.msra.mxu0 %v252
        %279 = vmatprep.subr.mxu0 0.0
        %280 = vmatpush1.msra.mxu0 %v253
        %281 = vmatprep.subr.mxu0 0.0
        %282 = vmatpush1.msra.mxu0 %v254
        %283 = vmatprep.subr.mxu0 0.0
        %284 = vmatpush1.msra.mxu0 %v255
        %285 = vmatprep.subr.mxu0 0.0
        %286 = vmatpush1.msra.mxu0 %v256
        %287 = vmatprep.subr.mxu0 0.0
        %288 = vmatpush1.msra.mxu0 %v257
        %289 = vmatprep.subr.mxu0 0.0
        %290 = vmatpush1.msra.mxu0 %v258
        %291 = vmatprep.subr.mxu0 0.0
        %292 = vmatpush1.msra.mxu0 %v259
        %293 = vmatprep.subr.mxu0 0.0
        %294 = vmatpush1.msra.mxu0 %v260
        %295 = vmatprep.subr.mxu0 0.0
        %296 = vmatpush1.msra.mxu0 %v261
        %297 = vmatprep.subr.mxu0 0.0
        %298 = vmatpush1.msra.mxu0 %v262
        %299 = vmatprep.subr.mxu0 0.0
        %300 = vmatpush1.msra.mxu0 %v263
        %301 = vmatprep.subr.mxu0 0.0
        %302 = vmatpush1.msra.mxu0 %v264
        %303 = vmatprep.subr.mxu0 0.0
        %304 = vmatpush1.msra.mxu0 %v265
        %305 = vmatprep.subr.mxu0 0.0
        %306 = vmatpush1.msra.mxu0 0.0
        %307 = vmatprep.subr.mxu0 0.0
        %308 = vmatpush1.msra.mxu0 0.0
        %309 = vmatprep.subr.mxu0 0.0
        %310 = vmatpush1.msra.mxu0 0.0
        %311 = vmatprep.subr.mxu0 0.0
        %312 = vmatpush1.msra.mxu0 0.0
        %313 = vmatprep.subr.mxu0 0.0
        %314 = vmatpush1.msra.mxu0 0.0
        %315 = vmatprep.subr.mxu0 0.0
        %316 = vmatpush1.msra.mxu0 0.0
        %317 = vmatprep.subr.mxu0 0.0
        %318 = vmatpush1.msra.mxu0 0.0
        %319 = vmatprep.subr.mxu0 0.0
        %320 = vmatpush1.msra.mxu0 0.0
        %321 = vmatprep.subr.mxu0 0.0
        %322 = vmatpush1.msra.mxu0 0.0
        %323 = vmatprep.subr.mxu0 0.0
        %324 = vmatpush1.msra.mxu0 0.0
        %325 = vmatprep.subr.mxu0 0.0
        %326 = vmatpush1.msra.mxu0 0.0
        %327 = vmatprep.subr.mxu0 0.0
        %328 = vmatpush1.msra.mxu0 0.0
        %329 = vmatprep.subr.mxu0 0.0
        %330 = vmatpush1.msra.mxu0 0.0
        %331 = vmatprep.subr.mxu0 0.0
        %332 = vmatpush1.msra.mxu0 0.0
        %333 = vmatprep.subr.mxu0 0.0
        %334 = vmatpush1.msra.mxu0 0.0
        %335 = vmatprep.subr.mxu0 0.0
        %336 = vmatpush1.msra.mxu0 0.0
        %337 = vmatprep.mubr.f32.mxu0 0.0
        %338 = vmatmul.mubr.f32.gmra.mrb[0].mxu0 %v218
        %v339 = vpop.f32.mrb[0].mxu0
        %v340 = vadd.f32 %v271, %v339
        %v341 = vpop.f32.mrb[0].mxu0
        %342 = vmatprep.mubr.f32.mxu0 0.0
        %343 = vmatmul.mubr.f32.gmra.mrb[0].mxu0 %v219
        %v344 = vpop.f32.mrb[0].mxu0
        %v345 = vadd.f32 %v271, %v344
        %v346 = vpop.f32.mrb[0].mxu0
        %347 = vmatprep.mubr.f32.mxu0 0.0
        %348 = vmatmul.mubr.f32.gmra.mrb[0].mxu0 %v220
        %v349 = vpop.f32.mrb[0].mxu0
        %v350 = vadd.f32 %v271, %v349
        %v351 = vpop.f32.mrb[0].mxu0
        %352 = vmatprep.mubr.f32.mxu0 0.0
        %353 = vmatmul.mubr.f32.gmra.mrb[0].mxu0 %v221
        %v354 = vpop.f32.mrb[0].mxu0
        %v355 = vadd.f32 %v271, %v354
        %v356 = vpop.f32.mrb[0].mxu0
        %357 = vmatprep.mubr.f32.mxu0 0.0
        %358 = vmatmul.mubr.f32.gmra.mrb[0].mxu0 %v222
        %v359 = vpop.f32.mrb[0].mxu0
        %v360 = vadd.f32 %v271, %v359
        %v361 = vpop.f32.mrb[0].mxu0
        %362 = vmatprep.mubr.f32.mxu0 0.0
        %363 = vmatmul.mubr.f32.gmra.mrb[0].mxu0 %v223
        %v364 = vpop.f32.mrb[0].mxu0
        %v365 = vadd.f32 %v271, %v364
        %v366 = vpop.f32.mrb[0].mxu0
        %367 = vmatprep.mubr.f32.mxu0 0.0
        %368 = vmatmul.mubr.f32.gmra.mrb[0].mxu0 %v224
        %v369 = vpop.f32.mrb[0].mxu0
        %v370 = vadd.f32 %v271, %v369
        %v371 = vpop.f32.mrb[0].mxu0
        %372 = vmatprep.mubr.f32.mxu0 0.0
        %373 = vmatmul.mubr.f32.gmra.mrb[0].mxu0 %v225
        %v374 = vpop.f32.mrb[0].mxu0
        %v375 = vadd.f32 %v271, %v374
        %v376 = vpop.f32.mrb[0].mxu0
        %377 = vmatprep.mubr.f32.mxu0 0.0
        %378 = vmatmul.mubr.f32.gmra.mrb[0].mxu0 %v226
        %v379 = vpop.f32.mrb[0].mxu0
        %v380 = vadd.f32 %v271, %v379
        %v381 = vpop.f32.mrb[0].mxu0
        %382 = vmatprep.mubr.f32.mxu0 0.0
        %383 = vmatmul.mubr.f32.gmra.mrb[0].mxu0 %v227
        %v384 = vpop.f32.mrb[0].mxu0
        %v385 = vadd.f32 %v271, %v384
        %v386 = vpop.f32.mrb[0].mxu0
        %387 = vmatprep.mubr.f32.mxu0 0.0
        %388 = vmatmul.mubr.f32.gmra.mrb[0].mxu0 %v228
        %v389 = vpop.f32.mrb[0].mxu0
        %v390 = vadd.f32 %v271, %v389
        %v391 = vpop.f32.mrb[0].mxu0
        %392 = vmatprep.mubr.f32.mxu0 0.0
        %393 = vmatmul.mubr.f32.gmra.mrb[0].mxu0 %v229
        %v394 = vpop.f32.mrb[0].mxu0
        %v395 = vadd.f32 %v271, %v394
        %v396 = vpop.f32.mrb[0].mxu0
        %397 = vmatprep.mubr.f32.mxu0 0.0
        %398 = vmatmul.mubr.f32.gmra.mrb[0].mxu0 %v230
        %v399 = vpop.f32.mrb[0].mxu0
        %v400 = vadd.f32 %v271, %v399
        %v401 = vpop.f32.mrb[0].mxu0
        %402 = vmatprep.mubr.f32.mxu0 0.0
        %403 = vmatmul.mubr.f32.gmra.mrb[0].mxu0 %v231
        %v404 = vpop.f32.mrb[0].mxu0
        %v405 = vadd.f32 %v271, %v404
        %v406 = vpop.f32.mrb[0].mxu0
        %407 = vmatprep.mubr.f32.mxu0 0.0
        %408 = vmatmul.mubr.f32.gmra.mrb[0].mxu0 %v232
        %v409 = vpop.f32.mrb[0].mxu0
        %v410 = vadd.f32 %v271, %v409
        %v411 = vpop.f32.mrb[0].mxu0
        %412 = vmatprep.mubr.f32.mxu0 0.0
        %413 = vmatmul.mubr.f32.gmra.mrb[0].mxu0 %v233
        %v414 = vpop.f32.mrb[0].mxu0
        %v415 = vadd.f32 %v271, %v414
        %v416 = vpop.f32.mrb[0].mxu0
        %417 = vmatprep.mubr.f32.mxu0 0.0
        %418 = vmatmul.mubr.f32.gmra.mrb[0].mxu0 %v234
        %v419 = vpop.f32.mrb[0].mxu0
        %v420 = vadd.f32 %v271, %v419
        %v421 = vpop.f32.mrb[0].mxu0
        %422 = vmatprep.mubr.f32.mxu0 0.0
        %423 = vmatmul.mubr.f32.gmra.mrb[0].mxu0 %v235
        %v424 = vpop.f32.mrb[0].mxu0
        %v425 = vadd.f32 %v271, %v424
        %v426 = vpop.f32.mrb[0].mxu0
        %427 = vmatprep.mubr.f32.mxu0 0.0
        %428 = vmatmul.mubr.f32.gmra.mrb[0].mxu0 %v236
        %v429 = vpop.f32.mrb[0].mxu0
        %v430 = vadd.f32 %v271, %v429
        %v431 = vpop.f32.mrb[0].mxu0
        %432 = vmatprep.mubr.f32.mxu0 0.0
        %433 = vmatmul.mubr.f32.gmra.mrb[0].mxu0 %v237
        %v434 = vpop.f32.mrb[0].mxu0
        %v435 = vadd.f32 %v271, %v434
        %v436 = vpop.f32.mrb[0].mxu0
        %437 = vmatprep.mubr.f32.mxu0 0.0
        %438 = vmatmul.mubr.f32.gmra.mrb[0].mxu0 %v238
        %v439 = vpop.f32.mrb[0].mxu0
        %v440 = vadd.f32 %v271, %v439
        %v441 = vpop.f32.mrb[0].mxu0
        %442 = vmatprep.mubr.f32.mxu0 0.0
        %443 = vmatmul.mubr.f32.gmra.mrb[0].mxu0 %v239
        %v444 = vpop.f32.mrb[0].mxu0
        %v445 = vadd.f32 %v271, %v444
        %v446 = vpop.f32.mrb[0].mxu0
        %447 = vmatprep.mubr.f32.mxu0 0.0
        %448 = vmatmul.mubr.f32.gmra.mrb[0].mxu0 %v240
        %v449 = vpop.f32.mrb[0].mxu0
        %v450 = vadd.f32 %v271, %v449
        %v451 = vpop.f32.mrb[0].mxu0
        %452 = vmatprep.mubr.f32.mxu0 0.0
        %453 = vmatmul.mubr.f32.gmra.mrb[0].mxu0 %v241
        %v454 = vpop.f32.mrb[0].mxu0
        %v455 = vadd.f32 %v271, %v454
        %v456 = vpop.f32.mrb[0].mxu0
        %457 = vmatprep.mubr.f32.mxu0 0.0
        %458 = vmatmul.mubr.f32.gmra.mrb[0].mxu0 %v242
        %v459 = vpop.f32.mrb[0].mxu0
        %v460 = vadd.f32 %v271, %v459
        %v461 = vpop.f32.mrb[0].mxu0
        %462 = vmatprep.mubr.f32.mxu0 0.0
        %463 = vmatmul.mubr.f32.gmra.mrb[0].mxu0 %v243
        %v464 = vpop.f32.mrb[0].mxu0
        %v465 = vadd.f32 %v271, %v464
        %v466 = vpop.f32.mrb[0].mxu0
        %467 = vmatprep.mubr.f32.mxu0 0.0
        %468 = vmatmul.mubr.f32.gmra.mrb[0].mxu0 %v244
        %v469 = vpop.f32.mrb[0].mxu0
        %v470 = vadd.f32 %v271, %v469
        %v471 = vpop.f32.mrb[0].mxu0
        %472 = vmatprep.mubr.f32.mxu0 0.0
        %473 = vmatmul.mubr.f32.gmra.mrb[0].mxu0 %v245
        %v474 = vpop.f32.mrb[0].mxu0
        %v475 = vadd.f32 %v271, %v474
        %v476 = vpop.f32.mrb[0].mxu0
        %477 = vmatprep.mubr.f32.mxu0 0.0
        %478 = vmatmul.mubr.f32.gmra.mrb[0].mxu0 %v246
        %v479 = vpop.f32.mrb[0].mxu0
        %v480 = vadd.f32 %v271, %v479
        %v481 = vpop.f32.mrb[0].mxu0
        %482 = vmatprep.mubr.f32.mxu0 0.0
        %483 = vmatmul.mubr.f32.gmra.mrb[0].mxu0 %v247
        %v484 = vpop.f32.mrb[0].mxu0
        %v485 = vadd.f32 %v271, %v484
        %v486 = vpop.f32.mrb[0].mxu0
        %487 = vmatprep.mubr.f32.mxu0 0.0
        %488 = vmatmul.mubr.f32.gmra.mrb[0].mxu0 %v248
        %v489 = vpop.f32.mrb[0].mxu0
        %v490 = vadd.f32 %v271, %v489
        %v491 = vpop.f32.mrb[0].mxu0
        %492 = vmatprep.mubr.f32.mxu0 0.0
        %493 = vmatmul.mubr.f32.gmra.mrb[0].mxu0 %v249
        %v494 = vpop.f32.mrb[0].mxu0
        %v495 = vadd.f32 %v271, %v494
        %v496 = vpop.f32.mrb[0].mxu0
        %497 = vdwg.mxu0
        %498 = vst [vmem:[%s215] sm:$0xff] %v340
        %499 = vst [vmem:[%s215 + $0x8] sm:$0xff] %v345
        %500 = vst [vmem:[%s215 + $0x10] sm:$0xff] %v350
        %501 = vst [vmem:[%s215 + $0x18] sm:$0xff] %v355
        %502 = vst [vmem:[%s215 + $0x20] sm:$0xff] %v360
        %503 = vst [vmem:[%s215 + $0x28] sm:$0xff] %v365
        %504 = vst [vmem:[%s215 + $0x30] sm:$0xff] %v370
        %505 = vst [vmem:[%s215 + $0x38] sm:$0xff] %v375
        %506 = vst [vmem:[%s215 + $0x40] sm:$0xff] %v380
        %507 = vst [vmem:[%s215 + $0x48] sm:$0xff] %v385
        %508 = vst [vmem:[%s215 + $0x50] sm:$0xff] %v390
        %509 = vst [vmem:[%s215 + $0x58] sm:$0xff] %v395
        %510 = vst [vmem:[%s215 + $0x60] sm:$0xff] %v400
        %511 = vst [vmem:[%s215 + $0x68] sm:$0xff] %v405
        %512 = vst [vmem:[%s215 + $0x70] sm:$0xff] %v410
        %513 = vst [vmem:[%s215 + $0x78] sm:$0xff] %v415
        %514 = vst [vmem:[%s215 + $0x80] sm:$0xff] %v420
        %515 = vst [vmem:[%s215 + $0x88] sm:$0xff] %v425
        %516 = vst [vmem:[%s215 + $0x90] sm:$0xff] %v430
        %517 = vst [vmem:[%s215 + $0x98] sm:$0xff] %v435
        %518 = vst [vmem:[%s215 + $0xa0] sm:$0xff] %v440
        %519 = vst [vmem:[%s215 + $0xa8] sm:$0xff] %v445
        %520 = vst [vmem:[%s215 + $0xb0] sm:$0xff] %v450
        %521 = vst [vmem:[%s215 + $0xb8] sm:$0xff] %v455
        %522 = vst [vmem:[%s215 + $0xc0] sm:$0xff] %v460
        %523 = vst [vmem:[%s215 + $0xc8] sm:$0xff] %v465
        %524 = vst [vmem:[%s215 + $0xd0] sm:$0xff] %v470
        %525 = vst [vmem:[%s215 + $0xd8] sm:$0xff] %v475
        %526 = vst [vmem:[%s215 + $0xe0] sm:$0xff] %v480
        %527 = vst [vmem:[%s215 + $0xe8] sm:$0xff] %v485
        %528 = vst [vmem:[%s215 + $0xf0] sm:$0xff] %v490
        %529 = vst [vmem:[%s215 + $0xf8] sm:$0xff] %v495
        %s530 = sand.u32 %s97, 1
        %s531 = scalar_lea.sflag [#allocation4], %s530
        %s532 = sand.u32 %s97, 1
        %s533 = smul.addr %s532, 256
        %s534 = scalar_lea.vmem [#allocation8], %s533
        // Predicated region
        $region45: #{classifier_forward.7} parent=31 // pred_check
          %p535 = pneg %p107
        $region46: #{classifier_forward.7} parent=31 // pred_check_branch
          %537 = sbr.rel (%p535) target = $region48
        $region47: #{classifier_forward.7} parent=31 // pred_region
          %s538 = smul.u32 32, %s21
          %s540 = ssub.s32 4096, 4096
          %541 = vsyncadd %s531, %s540
          %s542 = smul.addr %s538, 128
          %s543 = scalar_lea.hbm %s3, %s542
          %s544 = sshll.u32 %s534, 4
          %s545 = int_to_ptr.vmem [resolvable:$true] %s544
          %550 = dma.vmem_to_hbm [thread:$0]  %s545, 4096, %s543, %s531, 128, 128, 8
        $region48: #{classifier_forward.7} parent=31 // pred_fallthru
          _
      $region32: #{classifier_forward.7} parent=5 // pred_fallthru
        _
      %p551 = scmp.le.s32.totalorder 2, %s16
      // Predicated region
      $region49: #{classifier_forward.7} parent=5 // pred_check
        %p552 = pneg %p551
      $region50: #{classifier_forward.7} parent=5 // pred_check_branch
        %554 = sbr.rel (%p552) target = $region52
      $region51: #{classifier_forward.7} parent=5 // pred_region
        %s555 = ssub.s32 %s16, 2
        // Predicated region
        $region53: #{classifier_forward.7} parent=51 // pred_check
          %p556 = pneg %p113
        $region54: #{classifier_forward.7} parent=51 // pred_check_branch
          %558 = sbr.rel (%p556) target = $region56
        $region55: #{classifier_forward.7} parent=51 // pred_region
          %s559 = sand.u32 %s98, 1
          %s560 = scalar_lea.sflag [#allocation4], %s559
          %s561 = sand.u32 %s98, 1
          %s562 = smul.addr %s561, 256
          %s563 = scalar_lea.vmem [#allocation8], %s562
          %564 = dma.done %s560, 4096
        $region56: #{classifier_forward.7} parent=51 // pred_fallthru
          _
      $region52: #{classifier_forward.7} parent=5 // pred_fallthru
        _
    $region6: #{classifier_forward.7} parent=1 // loop_footer
      %s20 = sadd.s32 1, %s16
    $region7: #{classifier_forward.7} parent=1 // loop_footer_branch
      %15 = sbr.rel target = $region3
    $region8: #{classifier_forward.7} parent=1 // loop_exit
      _
    %565 = vsyncpa [#allocation3], 1
    %s566 = scalar_lea.sflag [#allocation3], 1
    %567 = vsyncpa %s566, 1
    %568 = vsyncpa [#allocation6], 1
    %569 = vsyncpa [#allocation4], 1
    %s570 = scalar_lea.sflag [#allocation4], 1
    %571 = vsyncpa %s570, 1

// kernel: classifier_forward.5
$region0: #{classifier_forward.5}
  #allocation0 [shape = 'u32[]', space=smem, size = 0x4, offset = 0x4, fixed_abs, tag = 'smem constant byte address 0x4 - core index']
  #allocation1 [shape = 'u32[144,128]{1,0:T(1,128)}', space=vmem, size = 0x12000, scoped, tag = 'internal scratch']
  #allocation2 [shape = 'f32[18,18,128]{2,1,0:T(8,128)}', space=vmem, size = 0x36000, scoped, tag = 'scratch operand']
  #allocation3 [shape = 's32[1]{0}', space=sflag, size = 0x4, scoped, tag = 'scratch operand']
  #allocation10 [shape = 's32[]', space=sflag, size = 0x4, offset = 0, fixed_abs, tag = 'sflag constant byte address 0x0 - dummy sync flag']
  %s0 = inlined_call_operand.hbm [shape: f32[2,18,18,128], index: 0, kind: input, shape index: {}]
  %s1 = inlined_call_operand.hbm [shape: f32[9,1,128], index: 1, kind: input, shape index: {}]
  %s2 = inlined_call_operand.hbm [shape: f32[1,1,128], index: 2, kind: input, shape index: {}]
  %s3 = inlined_call_operand.hbm [shape: f32[2,16,16,128], index: 3, kind: output, shape index: {}]
  %s4 = sld [smem:[#allocation0]]
  $region49: #{classifier_forward.5} parent=0
    _
  %s6 = ssub.s32 1, %s4
  %s7 = scalar_select 0, %s6, %s4
  $region1: #{classifier_forward.5} parent=0
    #allocation4 [shape = 'u8[4608]{0}', space=vmem, size = 0x1400, scoped, tag = 'input window, operand 1, single buffered']
    #allocation5 [shape = 's32[2]{0}', space=sflag, size = 0x8, scoped, tag = 'scoped memory for classifier_forward.5']
    #allocation6 [shape = 's32[2]{0}', space=sflag, size = 0x8, scoped, tag = 'scoped memory for classifier_forward.5']
    #allocation7 [shape = 'u8[512]{0}', space=vmem, size = 0x400, scoped, tag = 'input window, operand 2, single buffered']
    #allocation8 [shape = 's32[1]{0}', space=sflag, size = 0x4, scoped, tag = 'scoped memory for classifier_forward.5']
    #allocation9 [shape = 'u8[262144]{0}', space=vmem, size = 0x40000, scoped, tag = 'output window, operand 0']
    %8 = vsyncpa [#allocation5], 0
    %9 = vsyncpa [#allocation8], 0
    %10 = vsyncpa [#allocation6], 0
    %s11 = scalar_lea.sflag [#allocation6], 1
    %12 = vsyncpa %s11, 0
    loop: start=0, step=1, limit=4
    $region2: #{classifier_forward.5} parent=1 // loop_pre_header
      _
    $region3: #{classifier_forward.5} parent=1 // loop_header
      %s14 = sphi 0, %s18
      %p15 = scmp.ge.s32.totalorder %s14, 4
      %s21 = sphi 0, %s33
      %s22 = sphi 0, %s29
      %s23 = sphi 0, %s21
      %s24 = sphi 0, %s22
      %s25 = sphi 0, %s23
      %s26 = sphi 0, %s24
      %s34 = sphi 0, %s34
      %s36 = sphi 0, %s34
      %s37 = sphi 0, %s36
      %s51 = sphi 0, %s37
      %s55 = sphi 0, %s55
      %s57 = sphi 0, %s55
      %s58 = sphi 0, %s57
      %s72 = sphi 0, %s58
      %s80 = sphi 0, %s82
      %s83 = sphi 0, %s80
      %s84 = sphi 0, %s83
      %s100 = sphi 0, %s84
    $region4: #{classifier_forward.5} parent=1 // loop_header_branch
      %17 = sbr.rel (%p15) target = $region8
    $region5: #{classifier_forward.5} parent=1 // loop_body
      %s19 = ssub.s32 %s14, 1
      %s20 = ssub.s32 %s14, 2
      %s27 = sadd.s32 1, %s22
      %p28 = scmp.ge.s32.totalorder %s27, 1
      %s29 = scalar_select %p28, 0, %s27
      %s30 = sadd.s32 1, %s21
      %s31 = scalar_select %p28, %s30, %s21
      %p32 = scmp.ge.s32.totalorder %s31, 2
      %s33 = scalar_select %p32, 0, %s31
      %s35 = sadd.s32 %s34, 1
      %p38 = scmp.eq.s32.totalorder %s14, 1
      %p39 = scmp.ne.s32.totalorder %s34, %s36
      %p40 = scmp.eq.s32.totalorder %s14, 0
      %p41 = por %p39, %p40
      %p42 = scmp.ne.s32.totalorder %s34, %s36
      %p43 = scmp.eq.s32.totalorder %s19, 1
      %p44 = por %p42, %p43
      %p45 = scmp.ne.s32.totalorder %s36, %s37
      %p46 = scmp.eq.s32.totalorder %s19, 0
      %p47 = por %p45, %p46
      %p48 = scmp.ne.s32.totalorder %s36, %s37
      %p49 = scmp.eq.s32.totalorder %s20, 1
      %p50 = por %p48, %p49
      %p52 = scmp.ne.s32.totalorder %s37, %s51
      %p53 = scmp.eq.s32.totalorder %s20, 0
      %p54 = por %p52, %p53
      %s56 = sadd.s32 %s55, 1
      %p59 = scmp.eq.s32.totalorder %s14, 1
      %p60 = scmp.ne.s32.totalorder %s55, %s57
      %p61 = scmp.eq.s32.totalorder %s14, 0
      %p62 = por %p60, %p61
      %p63 = scmp.ne.s32.totalorder %s55, %s57
      %p64 = scmp.eq.s32.totalorder %s19, 1
      %p65 = por %p63, %p64
      %p66 = scmp.ne.s32.totalorder %s57, %s58
      %p67 = scmp.eq.s32.totalorder %s19, 0
      %p68 = por %p66, %p67
      %p69 = scmp.ne.s32.totalorder %s57, %s58
      %p70 = scmp.eq.s32.totalorder %s20, 1
      %p71 = por %p69, %p70
      %p73 = scmp.ne.s32.totalorder %s58, %s72
      %p74 = scmp.eq.s32.totalorder %s20, 0
      %p75 = por %p73, %p74
      %s76 = ssub.s32 %s21, %s33
      %s77 = ssub.s32 %s22, %s29
      %s78 = sor.u32 %s76, %s77
      %p79 = scmp.eq.s32.totalorder %s78, 0
      %s81 = sadd.s32 %s80, 1
      %s82 = scalar_select %p79, %s80, %s81
      %p85 = pneg %p79
      %p86 = scmp.eq.s32.totalorder %s14, 1
      %p87 = por %p85, %p86
      %p88 = scmp.ne.s32.totalorder %s80, %s83
      %p89 = scmp.eq.s32.totalorder %s14, 0
      %p90 = por %p88, %p89
      %p91 = scmp.ne.s32.totalorder %s80, %s83
      %p92 = scmp.eq.s32.totalorder %s19, 1
      %p93 = por %p91, %p92
      %p94 = scmp.ne.s32.totalorder %s83, %s84
      %p95 = scmp.eq.s32.totalorder %s19, 0
      %p96 = por %p94, %p95
      %p97 = scmp.ne.s32.totalorder %s83, %s84
      %p98 = scmp.eq.s32.totalorder %s20, 1
      %p99 = por %p97, %p98
      %p101 = scmp.ne.s32.totalorder %s84, %s100
      %p102 = scmp.eq.s32.totalorder %s20, 0
      %p103 = por %p101, %p102
      %p104 = scmp.le.s32.totalorder 1, %s14
      %p105 = scmp.lt.s32.totalorder %s14, 3
      %p106 = pnand %p104, %p105
      %p107 = pneg %p106
      // Predicated region
      $region9: #{classifier_forward.5} parent=5 // pred_check
        _
      $region10: #{classifier_forward.5} parent=5 // pred_check_branch
        %109 = sbr.rel (%p106) target = $region12
      $region11: #{classifier_forward.5} parent=5 // pred_region
        %s110 = ssub.s32 %s14, 1
        // Predicated region
        $region13: #{classifier_forward.5} parent=11 // pred_check
          %p111 = pneg %p47
        $region14: #{classifier_forward.5} parent=11 // pred_check_branch
          %113 = sbr.rel (%p111) target = $region16
        $region15: #{classifier_forward.5} parent=11 // pred_region
          %s115 = ssub.s32 144, 144
          %116 = vsyncadd [#allocation5], %s115
          %s117 = sshll.u32 [#allocation4], 4
          %s118 = int_to_ptr.vmem [resolvable:$true] %s117
          %123 = dma.hbm_to_vmem [thread:$0]  %s1, 144, %s118, [#allocation5], 16, 16, 1
        $region16: #{classifier_forward.5} parent=11 // pred_fallthru
          _
        // Predicated region
        $region17: #{classifier_forward.5} parent=11 // pred_check
          %p124 = pneg %p68
        $region18: #{classifier_forward.5} parent=11 // pred_check_branch
          %126 = sbr.rel (%p124) target = $region20
        $region19: #{classifier_forward.5} parent=11 // pred_region
          %s128 = ssub.s32 16, 16
          %129 = vsyncadd [#allocation8], %s128
          %s131 = sshll.u32 [#allocation7], 4
          %s132 = int_to_ptr.vmem [resolvable:$true] %s131
          %134 = dma.hbm_to_vmem [thread:$0]  %s2, 16, %s132, [#allocation8]
        $region20: #{classifier_forward.5} parent=11 // pred_fallthru
          _
      $region12: #{classifier_forward.5} parent=5 // pred_fallthru
        _
      %p135 = scmp.lt.s32.totalorder %s14, 2
      // Predicated region
      $region21: #{classifier_forward.5} parent=5 // pred_check
        %p136 = pneg %p135
      $region22: #{classifier_forward.5} parent=5 // pred_check_branch
        %138 = sbr.rel (%p136) target = $region24
      $region23: #{classifier_forward.5} parent=5 // pred_region
        _
      $region24: #{classifier_forward.5} parent=5 // pred_fallthru
        _
      %p139 = scmp.le.s32.totalorder 1, %s14
      %p140 = scmp.lt.s32.totalorder %s14, 3
      %p141 = pnand %p139, %p140
      %p142 = pneg %p141
      // Predicated region
      $region25: #{classifier_forward.5} parent=5 // pred_check
        _
      $region26: #{classifier_forward.5} parent=5 // pred_check_branch
        %144 = sbr.rel (%p141) target = $region28
      $region27: #{classifier_forward.5} parent=5 // pred_region
        %s145 = ssub.s32 %s14, 1
        // Predicated region
        $region29: #{classifier_forward.5} parent=27 // pred_check
          %p146 = pneg %p47
        $region30: #{classifier_forward.5} parent=27 // pred_check_branch
          %148 = sbr.rel (%p146) target = $region32
        $region31: #{classifier_forward.5} parent=27 // pred_region
          %149 = dma.done [#allocation5], 144
        $region32: #{classifier_forward.5} parent=27 // pred_fallthru
          _
        // Predicated region
        $region33: #{classifier_forward.5} parent=27 // pred_check
          %p150 = pneg %p68
        $region34: #{classifier_forward.5} parent=27 // pred_check_branch
          %152 = sbr.rel (%p150) target = $region36
        $region35: #{classifier_forward.5} parent=27 // pred_region
          %153 = dma.done [#allocation8], 16
        $region36: #{classifier_forward.5} parent=27 // pred_fallthru
          _
        %p154 = pneg %p47
        %p155 = pneg %p44
        %p156 = pneg %p68
        %p157 = pneg %p65
        %p158 = pneg %p96
        %p159 = pneg %p93
        %s160 = sand.u32 %s83, 1
        %s161 = scalar_lea.sflag [#allocation6], %s160
        %s162 = sand.u32 %s83, 1
        %s163 = smul.addr %s162, 256
        %s164 = scalar_lea.vmem [#allocation9], %s163
        %s165 = smul.u32 16, %s24
        %s166 = smul.u32 %s24, 16
        %s167 = smul.u32 %s166, 24
        %s168 = smul.u32 %s23, 432
        %s169 = sadd.s32 %s167, %s168
        %s170 = smul.addr %s169, 16
        %s171 = scalar_lea.hbm %s0, %s170
        %s173 = sshll.u32 [#allocation2], 4
        %s174 = int_to_ptr.vmem [resolvable:$true] %s173
        %176 = dma.hbm_to_vmem [thread:$0]  %s171, 5184, %s174, [#allocation3], 384, 384, 18
        %s177 = smul.u32 18, 18
        %s178 = smul.u32 %s177, 1
        %s179 = sshll.u32 %s178, 4
        %180 = dma.done [#allocation3], %s179
        %v181 = vld [vmem:[#allocation2] sm:$0xff]
        %v182 = vld [vmem:[#allocation2 + $0x8] sm:$0xff]
        %v183 = vld [vmem:[#allocation2 + $0x18] sm:$0xff]
        %v184 = vld [vmem:[#allocation2 + $0x20] sm:$0xff]
        %v185 = vld [vmem:[#allocation2 + $0x30] sm:$0xff]
        %v186 = vld [vmem:[#allocation2 + $0x38] sm:$0xff]
        %v187 = vld [vmem:[#allocation2 + $0x48] sm:$0xff]
        %v188 = vld [vmem:[#allocation2 + $0x50] sm:$0xff]
        %v189 = vld [vmem:[#allocation2 + $0x60] sm:$0xff]
        %v190 = vld [vmem:[#allocation2 + $0x68] sm:$0xff]
        %v191 = vld [vmem:[#allocation2 + $0x78] sm:$0xff]
        %v192 = vld [vmem:[#allocation2 + $0x80] sm:$0xff]
        %v193 = vld [vmem:[#allocation2 + $0x90] sm:$0xff]
        %v194 = vld [vmem:[#allocation2 + $0x98] sm:$0xff]
        %v195 = vld [vmem:[#allocation2 + $0xa8] sm:$0xff]
        %v196 = vld [vmem:[#allocation2 + $0xb0] sm:$0xff]
        %v197 = vld [vmem:[#allocation2 + $0xc0] sm:$0xff]
        %v198 = vld [vmem:[#allocation2 + $0xc8] sm:$0xff]
        %v199 = vld [vmem:[#allocation2 + $0xd8] sm:$0xff]
        %v200 = vld [vmem:[#allocation2 + $0xe0] sm:$0xff]
        %v201 = vld [vmem:[#allocation2 + $0xf0] sm:$0xff]
        %v202 = vld [vmem:[#allocation2 + $0xf8] sm:$0xff]
        %v203 = vld [vmem:[#allocation2 + $0x108] sm:$0xff]
        %v204 = vld [vmem:[#allocation2 + $0x110] sm:$0xff]
        %v205 = vld [vmem:[#allocation2 + $0x120] sm:$0xff]
        %v206 = vld [vmem:[#allocation2 + $0x128] sm:$0xff]
        %v207 = vld [vmem:[#allocation2 + $0x138] sm:$0xff]
        %v208 = vld [vmem:[#allocation2 + $0x140] sm:$0xff]
        %v209 = vld [vmem:[#allocation2 + $0x150] sm:$0xff]
        %v210 = vld [vmem:[#allocation2 + $0x158] sm:$0xff]
        %v211 = vld [vmem:[#allocation2 + $0x168] sm:$0xff]
        %v212 = vld [vmem:[#allocation2 + $0x170] sm:$0xff]
        %v213 = vld [vmem:[#allocation4] sm:$0x1]
        %v215 = vlaneseq
        %v216 = vshrl.u32 %v215, 7
        %v217 = vsub.s32 0, %v216
        %v218 = vrot.slane %v213, %v217
        %v220 = vmul.f32 %v181, %v218
        %v221 = vmul.f32 %v182, %v218
        %v222 = vmul.f32 %v183, %v218
        %v223 = vmul.f32 %v184, %v218
        %v224 = vmul.f32 %v185, %v218
        %v225 = vmul.f32 %v186, %v218
        %v226 = vmul.f32 %v187, %v218
        %v227 = vmul.f32 %v188, %v218
        %v228 = vmul.f32 %v189, %v218
        %v229 = vmul.f32 %v190, %v218
        %v230 = vmul.f32 %v191, %v218
        %v231 = vmul.f32 %v192, %v218
        %v232 = vmul.f32 %v193, %v218
        %v233 = vmul.f32 %v194, %v218
        %v234 = vmul.f32 %v195, %v218
        %v235 = vmul.f32 %v196, %v218
        %v236 = vmul.f32 %v197, %v218
        %v237 = vmul.f32 %v198, %v218
        %v238 = vmul.f32 %v199, %v218
        %v239 = vmul.f32 %v200, %v218
        %v240 = vmul.f32 %v201, %v218
        %v241 = vmul.f32 %v202, %v218
        %v242 = vmul.f32 %v203, %v218
        %v243 = vmul.f32 %v204, %v218
        %v244 = vmul.f32 %v205, %v218
        %v245 = vmul.f32 %v206, %v218
        %v246 = vmul.f32 %v207, %v218
        %v247 = vmul.f32 %v208, %v218
        %v248 = vmul.f32 %v209, %v218
        %v249 = vmul.f32 %v210, %v218
        %v250 = vmul.f32 %v211, %v218
        %v251 = vmul.f32 %v212, %v218
        %v252 = vld [vmem:[#allocation2 + $0x1] sm:$0xff]
        %v253 = vld [vmem:[#allocation2 + $0x9] sm:$0xff]
        %v254 = vld [vmem:[#allocation2 + $0x19] sm:$0xff]
        %v255 = vld [vmem:[#allocation2 + $0x21] sm:$0xff]
        %v256 = vld [vmem:[#allocation2 + $0x31] sm:$0xff]
        %v257 = vld [vmem:[#allocation2 + $0x39] sm:$0xff]
        %v258 = vld [vmem:[#allocation2 + $0x49] sm:$0xff]
        %v259 = vld [vmem:[#allocation2 + $0x51] sm:$0xff]
        %v260 = vld [vmem:[#allocation2 + $0x61] sm:$0xff]
        %v261 = vld [vmem:[#allocation2 + $0x69] sm:$0xff]
        %v262 = vld [vmem:[#allocation2 + $0x79] sm:$0xff]
        %v263 = vld [vmem:[#allocation2 + $0x81] sm:$0xff]
        %v264 = vld [vmem:[#allocation2 + $0x91] sm:$0xff]
        %v265 = vld [vmem:[#allocation2 + $0x99] sm:$0xff]
        %v266 = vld [vmem:[#allocation2 + $0xa9] sm:$0xff]
        %v267 = vld [vmem:[#allocation2 + $0xb1] sm:$0xff]
        %v268 = vld [vmem:[#allocation2 + $0xc1] sm:$0xff]
        %v269 = vld [vmem:[#allocation2 + $0xc9] sm:$0xff]
        %v270 = vld [vmem:[#allocation2 + $0xd9] sm:$0xff]
        %v271 = vld [vmem:[#allocation2 + $0xe1] sm:$0xff]
        %v272 = vld [vmem:[#allocation2 + $0xf1] sm:$0xff]
        %v273 = vld [vmem:[#allocation2 + $0xf9] sm:$0xff]
        %v274 = vld [vmem:[#allocation2 + $0x109] sm:$0xff]
        %v275 = vld [vmem:[#allocation2 + $0x111] sm:$0xff]
        %v276 = vld [vmem:[#allocation2 + $0x121] sm:$0xff]
        %v277 = vld [vmem:[#allocation2 + $0x129] sm:$0xff]
        %v278 = vld [vmem:[#allocation2 + $0x139] sm:$0xff]
        %v279 = vld [vmem:[#allocation2 + $0x141] sm:$0xff]
        %v280 = vld [vmem:[#allocation2 + $0x151] sm:$0xff]
        %v281 = vld [vmem:[#allocation2 + $0x159] sm:$0xff]
        %v282 = vld [vmem:[#allocation2 + $0x169] sm:$0xff]
        %v283 = vld [vmem:[#allocation2 + $0x171] sm:$0xff]
        %s284 = scalar_lea.vmem [#allocation4], 1
        %v285 = vld [vmem:[%s284] sm:$0x1]
        %v287 = vlaneseq
        %v288 = vshrl.u32 %v287, 7
        %v289 = vsub.s32 0, %v288
        %v290 = vrot.slane %v285, %v289
        %v292 = vmul.f32 %v252, %v290
        %v293 = vmul.f32 %v253, %v290
        %v294 = vmul.f32 %v254, %v290
        %v295 = vmul.f32 %v255, %v290
        %v296 = vmul.f32 %v256, %v290
        %v297 = vmul.f32 %v257, %v290
        %v298 = vmul.f32 %v258, %v290
        %v299 = vmul.f32 %v259, %v290
        %v300 = vmul.f32 %v260, %v290
        %v301 = vmul.f32 %v261, %v290
        %v302 = vmul.f32 %v262, %v290
        %v303 = vmul.f32 %v263, %v290
        %v304 = vmul.f32 %v264, %v290
        %v305 = vmul.f32 %v265, %v290
        %v306 = vmul.f32 %v266, %v290
        %v307 = vmul.f32 %v267, %v290
        %v308 = vmul.f32 %v268, %v290
        %v309 = vmul.f32 %v269, %v290
        %v310 = vmul.f32 %v270, %v290
        %v311 = vmul.f32 %v271, %v290
        %v312 = vmul.f32 %v272, %v290
        %v313 = vmul.f32 %v273, %v290
        %v314 = vmul.f32 %v274, %v290
        %v315 = vmul.f32 %v275, %v290
        %v316 = vmul.f32 %v276, %v290
        %v317 = vmul.f32 %v277, %v290
        %v318 = vmul.f32 %v278, %v290
        %v319 = vmul.f32 %v279, %v290
        %v320 = vmul.f32 %v280, %v290
        %v321 = vmul.f32 %v281, %v290
        %v322 = vmul.f32 %v282, %v290
        %v323 = vmul.f32 %v283, %v290
        %v324 = vadd.f32 %v220, %v292
        %v325 = vadd.f32 %v221, %v293
        %v326 = vadd.f32 %v222, %v294
        %v327 = vadd.f32 %v223, %v295
        %v328 = vadd.f32 %v224, %v296
        %v329 = vadd.f32 %v225, %v297
        %v330 = vadd.f32 %v226, %v298
        %v331 = vadd.f32 %v227, %v299
        %v332 = vadd.f32 %v228, %v300
        %v333 = vadd.f32 %v229, %v301
        %v334 = vadd.f32 %v230, %v302
        %v335 = vadd.f32 %v231, %v303
        %v336 = vadd.f32 %v232, %v304
        %v337 = vadd.f32 %v233, %v305
        %v338 = vadd.f32 %v234, %v306
        %v339 = vadd.f32 %v235, %v307
        %v340 = vadd.f32 %v236, %v308
        %v341 = vadd.f32 %v237, %v309
        %v342 = vadd.f32 %v238, %v310
        %v343 = vadd.f32 %v239, %v311
        %v344 = vadd.f32 %v240, %v312
        %v345 = vadd.f32 %v241, %v313
        %v346 = vadd.f32 %v242, %v314
        %v347 = vadd.f32 %v243, %v315
        %v348 = vadd.f32 %v244, %v316
        %v349 = vadd.f32 %v245, %v317
        %v350 = vadd.f32 %v246, %v318
        %v351 = vadd.f32 %v247, %v319
        %v352 = vadd.f32 %v248, %v320
        %v353 = vadd.f32 %v249, %v321
        %v354 = vadd.f32 %v250, %v322
        %v355 = vadd.f32 %v251, %v323
        %v356 = vld [vmem:[#allocation2 + $0x2] sm:$0xff]
        %v357 = vld [vmem:[#allocation2 + $0xa] sm:$0xff]
        %v358 = vld [vmem:[#allocation2 + $0x1a] sm:$0xff]
        %v359 = vld [vmem:[#allocation2 + $0x22] sm:$0xff]
        %v360 = vld [vmem:[#allocation2 + $0x32] sm:$0xff]
        %v361 = vld [vmem:[#allocation2 + $0x3a] sm:$0xff]
        %v362 = vld [vmem:[#allocation2 + $0x4a] sm:$0xff]
        %v363 = vld [vmem:[#allocation2 + $0x52] sm:$0xff]
        %v364 = vld [vmem:[#allocation2 + $0x62] sm:$0xff]
        %v365 = vld [vmem:[#allocation2 + $0x6a] sm:$0xff]
        %v366 = vld [vmem:[#allocation2 + $0x7a] sm:$0xff]
        %v367 = vld [vmem:[#allocation2 + $0x82] sm:$0xff]
        %v368 = vld [vmem:[#allocation2 + $0x92] sm:$0xff]
        %v369 = vld [vmem:[#allocation2 + $0x9a] sm:$0xff]
        %v370 = vld [vmem:[#allocation2 + $0xaa] sm:$0xff]
        %v371 = vld [vmem:[#allocation2 + $0xb2] sm:$0xff]
        %v372 = vld [vmem:[#allocation2 + $0xc2] sm:$0xff]
        %v373 = vld [vmem:[#allocation2 + $0xca] sm:$0xff]
        %v374 = vld [vmem:[#allocation2 + $0xda] sm:$0xff]
        %v375 = vld [vmem:[#allocation2 + $0xe2] sm:$0xff]
        %v376 = vld [vmem:[#allocation2 + $0xf2] sm:$0xff]
        %v377 = vld [vmem:[#allocation2 + $0xfa] sm:$0xff]
        %v378 = vld [vmem:[#allocation2 + $0x10a] sm:$0xff]
        %v379 = vld [vmem:[#allocation2 + $0x112] sm:$0xff]
        %v380 = vld [vmem:[#allocation2 + $0x122] sm:$0xff]
        %v381 = vld [vmem:[#allocation2 + $0x12a] sm:$0xff]
        %v382 = vld [vmem:[#allocation2 + $0x13a] sm:$0xff]
        %v383 = vld [vmem:[#allocation2 + $0x142] sm:$0xff]
        %v384 = vld [vmem:[#allocation2 + $0x152] sm:$0xff]
        %v385 = vld [vmem:[#allocation2 + $0x15a] sm:$0xff]
        %v386 = vld [vmem:[#allocation2 + $0x16a] sm:$0xff]
        %v387 = vld [vmem:[#allocation2 + $0x172] sm:$0xff]
        %s388 = scalar_lea.vmem [#allocation4], 2
        %v389 = vld [vmem:[%s388] sm:$0x1]
        %v391 = vlaneseq
        %v392 = vshrl.u32 %v391, 7
        %v393 = vsub.s32 0, %v392
        %v394 = vrot.slane %v389, %v393
        %v396 = vmul.f32 %v356, %v394
        %v397 = vmul.f32 %v357, %v394
        %v398 = vmul.f32 %v358, %v394
        %v399 = vmul.f32 %v359, %v394
        %v400 = vmul.f32 %v360, %v394
        %v401 = vmul.f32 %v361, %v394
        %v402 = vmul.f32 %v362, %v394
        %v403 = vmul.f32 %v363, %v394
        %v404 = vmul.f32 %v364, %v394
        %v405 = vmul.f32 %v365, %v394
        %v406 = vmul.f32 %v366, %v394
        %v407 = vmul.f32 %v367, %v394
        %v408 = vmul.f32 %v368, %v394
        %v409 = vmul.f32 %v369, %v394
        %v410 = vmul.f32 %v370, %v394
        %v411 = vmul.f32 %v371, %v394
        %v412 = vmul.f32 %v372, %v394
        %v413 = vmul.f32 %v373, %v394
        %v414 = vmul.f32 %v374, %v394
        %v415 = vmul.f32 %v375, %v394
        %v416 = vmul.f32 %v376, %v394
        %v417 = vmul.f32 %v377, %v394
        %v418 = vmul.f32 %v378, %v394
        %v419 = vmul.f32 %v379, %v394
        %v420 = vmul.f32 %v380, %v394
        %v421 = vmul.f32 %v381, %v394
        %v422 = vmul.f32 %v382, %v394
        %v423 = vmul.f32 %v383, %v394
        %v424 = vmul.f32 %v384, %v394
        %v425 = vmul.f32 %v385, %v394
        %v426 = vmul.f32 %v386, %v394
        %v427 = vmul.f32 %v387, %v394
        %v428 = vadd.f32 %v324, %v396
        %v429 = vadd.f32 %v325, %v397
        %v430 = vadd.f32 %v326, %v398
        %v431 = vadd.f32 %v327, %v399
        %v432 = vadd.f32 %v328, %v400
        %v433 = vadd.f32 %v329, %v401
        %v434 = vadd.f32 %v330, %v402
        %v435 = vadd.f32 %v331, %v403
        %v436 = vadd.f32 %v332, %v404
        %v437 = vadd.f32 %v333, %v405
        %v438 = vadd.f32 %v334, %v406
        %v439 = vadd.f32 %v335, %v407
        %v440 = vadd.f32 %v336, %v408
        %v441 = vadd.f32 %v337, %v409
        %v442 = vadd.f32 %v338, %v410
        %v443 = vadd.f32 %v339, %v411
        %v444 = vadd.f32 %v340, %v412
        %v445 = vadd.f32 %v341, %v413
        %v446 = vadd.f32 %v342, %v414
        %v447 = vadd.f32 %v343, %v415
        %v448 = vadd.f32 %v344, %v416
        %v449 = vadd.f32 %v345, %v417
        %v450 = vadd.f32 %v346, %v418
        %v451 = vadd.f32 %v347, %v419
        %v452 = vadd.f32 %v348, %v420
        %v453 = vadd.f32 %v349, %v421
        %v454 = vadd.f32 %v350, %v422
        %v455 = vadd.f32 %v351, %v423
        %v456 = vadd.f32 %v352, %v424
        %v457 = vadd.f32 %v353, %v425
        %v458 = vadd.f32 %v354, %v426
        %v459 = vadd.f32 %v355, %v427
        %s460 = scalar_lea.vmem [#allocation2], 24
        %v461 = vld [vmem:[%s460] sm:$0xff]
        %v462 = vld [vmem:[%s460 + $0x8] sm:$0xff]
        %v463 = vld [vmem:[%s460 + $0x18] sm:$0xff]
        %v464 = vld [vmem:[%s460 + $0x20] sm:$0xff]
        %v465 = vld [vmem:[%s460 + $0x30] sm:$0xff]
        %v466 = vld [vmem:[%s460 + $0x38] sm:$0xff]
        %v467 = vld [vmem:[%s460 + $0x48] sm:$0xff]
        %v468 = vld [vmem:[%s460 + $0x50] sm:$0xff]
        %v469 = vld [vmem:[%s460 + $0x60] sm:$0xff]
        %v470 = vld [vmem:[%s460 + $0x68] sm:$0xff]
        %v471 = vld [vmem:[%s460 + $0x78] sm:$0xff]
        %v472 = vld [vmem:[%s460 + $0x80] sm:$0xff]
        %v473 = vld [vmem:[%s460 + $0x90] sm:$0xff]
        %v474 = vld [vmem:[%s460 + $0x98] sm:$0xff]
        %v475 = vld [vmem:[%s460 + $0xa8] sm:$0xff]
        %v476 = vld [vmem:[%s460 + $0xb0] sm:$0xff]
        %v477 = vld [vmem:[%s460 + $0xc0] sm:$0xff]
        %v478 = vld [vmem:[%s460 + $0xc8] sm:$0xff]
        %v479 = vld [vmem:[%s460 + $0xd8] sm:$0xff]
        %v480 = vld [vmem:[%s460 + $0xe0] sm:$0xff]
        %v481 = vld [vmem:[%s460 + $0xf0] sm:$0xff]
        %v482 = vld [vmem:[%s460 + $0xf8] sm:$0xff]
        %v483 = vld [vmem:[%s460 + $0x108] sm:$0xff]
        %v484 = vld [vmem:[%s460 + $0x110] sm:$0xff]
        %v485 = vld [vmem:[%s460 + $0x120] sm:$0xff]
        %v486 = vld [vmem:[%s460 + $0x128] sm:$0xff]
        %v487 = vld [vmem:[%s460 + $0x138] sm:$0xff]
        %v488 = vld [vmem:[%s460 + $0x140] sm:$0xff]
        %v489 = vld [vmem:[%s460 + $0x150] sm:$0xff]
        %v490 = vld [vmem:[%s460 + $0x158] sm:$0xff]
        %v491 = vld [vmem:[%s460 + $0x168] sm:$0xff]
        %v492 = vld [vmem:[%s460 + $0x170] sm:$0xff]
        %s493 = scalar_lea.vmem [#allocation4], 3
        %v494 = vld [vmem:[%s493] sm:$0x1]
        %v496 = vlaneseq
        %v497 = vshrl.u32 %v496, 7
        %v498 = vsub.s32 0, %v497
        %v499 = vrot.slane %v494, %v498
        %v501 = vmul.f32 %v461, %v499
        %v502 = vmul.f32 %v462, %v499
        %v503 = vmul.f32 %v463, %v499
        %v504 = vmul.f32 %v464, %v499
        %v505 = vmul.f32 %v465, %v499
        %v506 = vmul.f32 %v466, %v499
        %v507 = vmul.f32 %v467, %v499
        %v508 = vmul.f32 %v468, %v499
        %v509 = vmul.f32 %v469, %v499
        %v510 = vmul.f32 %v470, %v499
        %v511 = vmul.f32 %v471, %v499
        %v512 = vmul.f32 %v472, %v499
        %v513 = vmul.f32 %v473, %v499
        %v514 = vmul.f32 %v474, %v499
        %v515 = vmul.f32 %v475, %v499
        %v516 = vmul.f32 %v476, %v499
        %v517 = vmul.f32 %v477, %v499
        %v518 = vmul.f32 %v478, %v499
        %v519 = vmul.f32 %v479, %v499
        %v520 = vmul.f32 %v480, %v499
        %v521 = vmul.f32 %v481, %v499
        %v522 = vmul.f32 %v482, %v499
        %v523 = vmul.f32 %v483, %v499
        %v524 = vmul.f32 %v484, %v499
        %v525 = vmul.f32 %v485, %v499
        %v526 = vmul.f32 %v486, %v499
        %v527 = vmul.f32 %v487, %v499
        %v528 = vmul.f32 %v488, %v499
        %v529 = vmul.f32 %v489, %v499
        %v530 = vmul.f32 %v490, %v499
        %v531 = vmul.f32 %v491, %v499
        %v532 = vmul.f32 %v492, %v499
        %v533 = vadd.f32 %v428, %v501
        %v534 = vadd.f32 %v429, %v502
        %v535 = vadd.f32 %v430, %v503
        %v536 = vadd.f32 %v431, %v504
        %v537 = vadd.f32 %v432, %v505
        %v538 = vadd.f32 %v433, %v506
        %v539 = vadd.f32 %v434, %v507
        %v540 = vadd.f32 %v435, %v508
        %v541 = vadd.f32 %v436, %v509
        %v542 = vadd.f32 %v437, %v510
        %v543 = vadd.f32 %v438, %v511
        %v544 = vadd.f32 %v439, %v512
        %v545 = vadd.f32 %v440, %v513
        %v546 = vadd.f32 %v441, %v514
        %v547 = vadd.f32 %v442, %v515
        %v548 = vadd.f32 %v443, %v516
        %v549 = vadd.f32 %v444, %v517
        %v550 = vadd.f32 %v445, %v518
        %v551 = vadd.f32 %v446, %v519
        %v552 = vadd.f32 %v447, %v520
        %v553 = vadd.f32 %v448, %v521
        %v554 = vadd.f32 %v449, %v522
        %v555 = vadd.f32 %v450, %v523
        %v556 = vadd.f32 %v451, %v524
        %v557 = vadd.f32 %v452, %v525
        %v558 = vadd.f32 %v453, %v526
        %v559 = vadd.f32 %v454, %v527
        %v560 = vadd.f32 %v455, %v528
        %v561 = vadd.f32 %v456, %v529
        %v562 = vadd.f32 %v457, %v530
        %v563 = vadd.f32 %v458, %v531
        %v564 = vadd.f32 %v459, %v532
        %v565 = vld [vmem:[%s460 + $0x1] sm:$0xff]
        %v566 = vld [vmem:[%s460 + $0x9] sm:$0xff]
        %v567 = vld [vmem:[%s460 + $0x19] sm:$0xff]
        %v568 = vld [vmem:[%s460 + $0x21] sm:$0xff]
        %v569 = vld [vmem:[%s460 + $0x31] sm:$0xff]
        %v570 = vld [vmem:[%s460 + $0x39] sm:$0xff]
        %v571 = vld [vmem:[%s460 + $0x49] sm:$0xff]
        %v572 = vld [vmem:[%s460 + $0x51] sm:$0xff]
        %v573 = vld [vmem:[%s460 + $0x61] sm:$0xff]
        %v574 = vld [vmem:[%s460 + $0x69] sm:$0xff]
        %v575 = vld [vmem:[%s460 + $0x79] sm:$0xff]
        %v576 = vld [vmem:[%s460 + $0x81] sm:$0xff]
        %v577 = vld [vmem:[%s460 + $0x91] sm:$0xff]
        %v578 = vld [vmem:[%s460 + $0x99] sm:$0xff]
        %v579 = vld [vmem:[%s460 + $0xa9] sm:$0xff]
        %v580 = vld [vmem:[%s460 + $0xb1] sm:$0xff]
        %v581 = vld [vmem:[%s460 + $0xc1] sm:$0xff]
        %v582 = vld [vmem:[%s460 + $0xc9] sm:$0xff]
        %v583 = vld [vmem:[%s460 + $0xd9] sm:$0xff]
        %v584 = vld [vmem:[%s460 + $0xe1] sm:$0xff]
        %v585 = vld [vmem:[%s460 + $0xf1] sm:$0xff]
        %v586 = vld [vmem:[%s460 + $0xf9] sm:$0xff]
        %v587 = vld [vmem:[%s460 + $0x109] sm:$0xff]
        %v588 = vld [vmem:[%s460 + $0x111] sm:$0xff]
        %v589 = vld [vmem:[%s460 + $0x121] sm:$0xff]
        %v590 = vld [vmem:[%s460 + $0x129] sm:$0xff]
        %v591 = vld [vmem:[%s460 + $0x139] sm:$0xff]
        %v592 = vld [vmem:[%s460 + $0x141] sm:$0xff]
        %v593 = vld [vmem:[%s460 + $0x151] sm:$0xff]
        %v594 = vld [vmem:[%s460 + $0x159] sm:$0xff]
        %v595 = vld [vmem:[%s460 + $0x169] sm:$0xff]
        %v596 = vld [vmem:[%s460 + $0x171] sm:$0xff]
        %s597 = scalar_lea.vmem [#allocation4], 4
        %v598 = vld [vmem:[%s597] sm:$0x1]
        %v600 = vlaneseq
        %v601 = vshrl.u32 %v600, 7
        %v602 = vsub.s32 0, %v601
        %v603 = vrot.slane %v598, %v602
        %v605 = vmul.f32 %v565, %v603
        %v606 = vmul.f32 %v566, %v603
        %v607 = vmul.f32 %v567, %v603
        %v608 = vmul.f32 %v568, %v603
        %v609 = vmul.f32 %v569, %v603
        %v610 = vmul.f32 %v570, %v603
        %v611 = vmul.f32 %v571, %v603
        %v612 = vmul.f32 %v572, %v603
        %v613 = vmul.f32 %v573, %v603
        %v614 = vmul.f32 %v574, %v603
        %v615 = vmul.f32 %v575, %v603
        %v616 = vmul.f32 %v576, %v603
        %v617 = vmul.f32 %v577, %v603
        %v618 = vmul.f32 %v578, %v603
        %v619 = vmul.f32 %v579, %v603
        %v620 = vmul.f32 %v580, %v603
        %v621 = vmul.f32 %v581, %v603
        %v622 = vmul.f32 %v582, %v603
        %v623 = vmul.f32 %v583, %v603
        %v624 = vmul.f32 %v584, %v603
        %v625 = vmul.f32 %v585, %v603
        %v626 = vmul.f32 %v586, %v603
        %v627 = vmul.f32 %v587, %v603
        %v628 = vmul.f32 %v588, %v603
        %v629 = vmul.f32 %v589, %v603
        %v630 = vmul.f32 %v590, %v603
        %v631 = vmul.f32 %v591, %v603
        %v632 = vmul.f32 %v592, %v603
        %v633 = vmul.f32 %v593, %v603
        %v634 = vmul.f32 %v594, %v603
        %v635 = vmul.f32 %v595, %v603
        %v636 = vmul.f32 %v596, %v603
        %v637 = vadd.f32 %v533, %v605
        %v638 = vadd.f32 %v534, %v606
        %v639 = vadd.f32 %v535, %v607
        %v640 = vadd.f32 %v536, %v608
        %v641 = vadd.f32 %v537, %v609
        %v642 = vadd.f32 %v538, %v610
        %v643 = vadd.f32 %v539, %v611
        %v644 = vadd.f32 %v540, %v612
        %v645 = vadd.f32 %v541, %v613
        %v646 = vadd.f32 %v542, %v614
        %v647 = vadd.f32 %v543, %v615
        %v648 = vadd.f32 %v544, %v616
        %v649 = vadd.f32 %v545, %v617
        %v650 = vadd.f32 %v546, %v618
        %v651 = vadd.f32 %v547, %v619
        %v652 = vadd.f32 %v548, %v620
        %v653 = vadd.f32 %v549, %v621
        %v654 = vadd.f32 %v550, %v622
        %v655 = vadd.f32 %v551, %v623
        %v656 = vadd.f32 %v552, %v624
        %v657 = vadd.f32 %v553, %v625
        %v658 = vadd.f32 %v554, %v626
        %v659 = vadd.f32 %v555, %v627
        %v660 = vadd.f32 %v556, %v628
        %v661 = vadd.f32 %v557, %v629
        %v662 = vadd.f32 %v558, %v630
        %v663 = vadd.f32 %v559, %v631
        %v664 = vadd.f32 %v560, %v632
        %v665 = vadd.f32 %v561, %v633
        %v666 = vadd.f32 %v562, %v634
        %v667 = vadd.f32 %v563, %v635
        %v668 = vadd.f32 %v564, %v636
        %v669 = vld [vmem:[%s460 + $0x2] sm:$0xff]
        %v670 = vld [vmem:[%s460 + $0xa] sm:$0xff]
        %v671 = vld [vmem:[%s460 + $0x1a] sm:$0xff]
        %v672 = vld [vmem:[%s460 + $0x22] sm:$0xff]
        %v673 = vld [vmem:[%s460 + $0x32] sm:$0xff]
        %v674 = vld [vmem:[%s460 + $0x3a] sm:$0xff]
        %v675 = vld [vmem:[%s460 + $0x4a] sm:$0xff]
        %v676 = vld [vmem:[%s460 + $0x52] sm:$0xff]
        %v677 = vld [vmem:[%s460 + $0x62] sm:$0xff]
        %v678 = vld [vmem:[%s460 + $0x6a] sm:$0xff]
        %v679 = vld [vmem:[%s460 + $0x7a] sm:$0xff]
        %v680 = vld [vmem:[%s460 + $0x82] sm:$0xff]
        %v681 = vld [vmem:[%s460 + $0x92] sm:$0xff]
        %v682 = vld [vmem:[%s460 + $0x9a] sm:$0xff]
        %v683 = vld [vmem:[%s460 + $0xaa] sm:$0xff]
        %v684 = vld [vmem:[%s460 + $0xb2] sm:$0xff]
        %v685 = vld [vmem:[%s460 + $0xc2] sm:$0xff]
        %v686 = vld [vmem:[%s460 + $0xca] sm:$0xff]
        %v687 = vld [vmem:[%s460 + $0xda] sm:$0xff]
        %v688 = vld [vmem:[%s460 + $0xe2] sm:$0xff]
        %v689 = vld [vmem:[%s460 + $0xf2] sm:$0xff]
        %v690 = vld [vmem:[%s460 + $0xfa] sm:$0xff]
        %v691 = vld [vmem:[%s460 + $0x10a] sm:$0xff]
        %v692 = vld [vmem:[%s460 + $0x112] sm:$0xff]
        %v693 = vld [vmem:[%s460 + $0x122] sm:$0xff]
        %v694 = vld [vmem:[%s460 + $0x12a] sm:$0xff]
        %v695 = vld [vmem:[%s460 + $0x13a] sm:$0xff]
        %v696 = vld [vmem:[%s460 + $0x142] sm:$0xff]
        %v697 = vld [vmem:[%s460 + $0x152] sm:$0xff]
        %v698 = vld [vmem:[%s460 + $0x15a] sm:$0xff]
        %v699 = vld [vmem:[%s460 + $0x16a] sm:$0xff]
        %v700 = vld [vmem:[%s460 + $0x172] sm:$0xff]
        %s701 = scalar_lea.vmem [#allocation4], 5
        %v702 = vld [vmem:[%s701] sm:$0x1]
        %v704 = vlaneseq
        %v705 = vshrl.u32 %v704, 7
        %v706 = vsub.s32 0, %v705
        %v707 = vrot.slane %v702, %v706
        %v709 = vmul.f32 %v669, %v707
        %v710 = vmul.f32 %v670, %v707
        %v711 = vmul.f32 %v671, %v707
        %v712 = vmul.f32 %v672, %v707
        %v713 = vmul.f32 %v673, %v707
        %v714 = vmul.f32 %v674, %v707
        %v715 = vmul.f32 %v675, %v707
        %v716 = vmul.f32 %v676, %v707
        %v717 = vmul.f32 %v677, %v707
        %v718 = vmul.f32 %v678, %v707
        %v719 = vmul.f32 %v679, %v707
        %v720 = vmul.f32 %v680, %v707
        %v721 = vmul.f32 %v681, %v707
        %v722 = vmul.f32 %v682, %v707
        %v723 = vmul.f32 %v683, %v707
        %v724 = vmul.f32 %v684, %v707
        %v725 = vmul.f32 %v685, %v707
        %v726 = vmul.f32 %v686, %v707
        %v727 = vmul.f32 %v687, %v707
        %v728 = vmul.f32 %v688, %v707
        %v729 = vmul.f32 %v689, %v707
        %v730 = vmul.f32 %v690, %v707
        %v731 = vmul.f32 %v691, %v707
        %v732 = vmul.f32 %v692, %v707
        %v733 = vmul.f32 %v693, %v707
        %v734 = vmul.f32 %v694, %v707
        %v735 = vmul.f32 %v695, %v707
        %v736 = vmul.f32 %v696, %v707
        %v737 = vmul.f32 %v697, %v707
        %v738 = vmul.f32 %v698, %v707
        %v739 = vmul.f32 %v699, %v707
        %v740 = vmul.f32 %v700, %v707
        %v741 = vadd.f32 %v637, %v709
        %v742 = vadd.f32 %v638, %v710
        %v743 = vadd.f32 %v639, %v711
        %v744 = vadd.f32 %v640, %v712
        %v745 = vadd.f32 %v641, %v713
        %v746 = vadd.f32 %v642, %v714
        %v747 = vadd.f32 %v643, %v715
        %v748 = vadd.f32 %v644, %v716
        %v749 = vadd.f32 %v645, %v717
        %v750 = vadd.f32 %v646, %v718
        %v751 = vadd.f32 %v647, %v719
        %v752 = vadd.f32 %v648, %v720
        %v753 = vadd.f32 %v649, %v721
        %v754 = vadd.f32 %v650, %v722
        %v755 = vadd.f32 %v651, %v723
        %v756 = vadd.f32 %v652, %v724
        %v757 = vadd.f32 %v653, %v725
        %v758 = vadd.f32 %v654, %v726
        %v759 = vadd.f32 %v655, %v727
        %v760 = vadd.f32 %v656, %v728
        %v761 = vadd.f32 %v657, %v729
        %v762 = vadd.f32 %v658, %v730
        %v763 = vadd.f32 %v659, %v731
        %v764 = vadd.f32 %v660, %v732
        %v765 = vadd.f32 %v661, %v733
        %v766 = vadd.f32 %v662, %v734
        %v767 = vadd.f32 %v663, %v735
        %v768 = vadd.f32 %v664, %v736
        %v769 = vadd.f32 %v665, %v737
        %v770 = vadd.f32 %v666, %v738
        %v771 = vadd.f32 %v667, %v739
        %v772 = vadd.f32 %v668, %v740
        %s773 = scalar_lea.vmem [#allocation2], 48
        %v774 = vld [vmem:[%s773] sm:$0xff]
        %v775 = vld [vmem:[%s773 + $0x8] sm:$0xff]
        %v776 = vld [vmem:[%s773 + $0x18] sm:$0xff]
        %v777 = vld [vmem:[%s773 + $0x20] sm:$0xff]
        %v778 = vld [vmem:[%s773 + $0x30] sm:$0xff]
        %v779 = vld [vmem:[%s773 + $0x38] sm:$0xff]
        %v780 = vld [vmem:[%s773 + $0x48] sm:$0xff]
        %v781 = vld [vmem:[%s773 + $0x50] sm:$0xff]
        %v782 = vld [vmem:[%s773 + $0x60] sm:$0xff]
        %v783 = vld [vmem:[%s773 + $0x68] sm:$0xff]
        %v784 = vld [vmem:[%s773 + $0x78] sm:$0xff]
        %v785 = vld [vmem:[%s773 + $0x80] sm:$0xff]
        %v786 = vld [vmem:[%s773 + $0x90] sm:$0xff]
        %v787 = vld [vmem:[%s773 + $0x98] sm:$0xff]
        %v788 = vld [vmem:[%s773 + $0xa8] sm:$0xff]
        %v789 = vld [vmem:[%s773 + $0xb0] sm:$0xff]
        %v790 = vld [vmem:[%s773 + $0xc0] sm:$0xff]
        %v791 = vld [vmem:[%s773 + $0xc8] sm:$0xff]
        %v792 = vld [vmem:[%s773 + $0xd8] sm:$0xff]
        %v793 = vld [vmem:[%s773 + $0xe0] sm:$0xff]
        %v794 = vld [vmem:[%s773 + $0xf0] sm:$0xff]
        %v795 = vld [vmem:[%s773 + $0xf8] sm:$0xff]
        %v796 = vld [vmem:[%s773 + $0x108] sm:$0xff]
        %v797 = vld [vmem:[%s773 + $0x110] sm:$0xff]
        %v798 = vld [vmem:[%s773 + $0x120] sm:$0xff]
        %v799 = vld [vmem:[%s773 + $0x128] sm:$0xff]
        %v800 = vld [vmem:[%s773 + $0x138] sm:$0xff]
        %v801 = vld [vmem:[%s773 + $0x140] sm:$0xff]
        %v802 = vld [vmem:[%s773 + $0x150] sm:$0xff]
        %v803 = vld [vmem:[%s773 + $0x158] sm:$0xff]
        %v804 = vld [vmem:[%s773 + $0x168] sm:$0xff]
        %v805 = vld [vmem:[%s773 + $0x170] sm:$0xff]
        %s806 = scalar_lea.vmem [#allocation4], 6
        %v807 = vld [vmem:[%s806] sm:$0x1]
        %v809 = vlaneseq
        %v810 = vshrl.u32 %v809, 7
        %v811 = vsub.s32 0, %v810
        %v812 = vrot.slane %v807, %v811
        %v814 = vmul.f32 %v774, %v812
        %v815 = vmul.f32 %v775, %v812
        %v816 = vmul.f32 %v776, %v812
        %v817 = vmul.f32 %v777, %v812
        %v818 = vmul.f32 %v778, %v812
        %v819 = vmul.f32 %v779, %v812
        %v820 = vmul.f32 %v780, %v812
        %v821 = vmul.f32 %v781, %v812
        %v822 = vmul.f32 %v782, %v812
        %v823 = vmul.f32 %v783, %v812
        %v824 = vmul.f32 %v784, %v812
        %v825 = vmul.f32 %v785, %v812
        %v826 = vmul.f32 %v786, %v812
        %v827 = vmul.f32 %v787, %v812
        %v828 = vmul.f32 %v788, %v812
        %v829 = vmul.f32 %v789, %v812
        %v830 = vmul.f32 %v790, %v812
        %v831 = vmul.f32 %v791, %v812
        %v832 = vmul.f32 %v792, %v812
        %v833 = vmul.f32 %v793, %v812
        %v834 = vmul.f32 %v794, %v812
        %v835 = vmul.f32 %v795, %v812
        %v836 = vmul.f32 %v796, %v812
        %v837 = vmul.f32 %v797, %v812
        %v838 = vmul.f32 %v798, %v812
        %v839 = vmul.f32 %v799, %v812
        %v840 = vmul.f32 %v800, %v812
        %v841 = vmul.f32 %v801, %v812
        %v842 = vmul.f32 %v802, %v812
        %v843 = vmul.f32 %v803, %v812
        %v844 = vmul.f32 %v804, %v812
        %v845 = vmul.f32 %v805, %v812
        %v846 = vadd.f32 %v741, %v814
        %v847 = vadd.f32 %v742, %v815
        %v848 = vadd.f32 %v743, %v816
        %v849 = vadd.f32 %v744, %v817
        %v850 = vadd.f32 %v745, %v818
        %v851 = vadd.f32 %v746, %v819
        %v852 = vadd.f32 %v747, %v820
        %v853 = vadd.f32 %v748, %v821
        %v854 = vadd.f32 %v749, %v822
        %v855 = vadd.f32 %v750, %v823
        %v856 = vadd.f32 %v751, %v824
        %v857 = vadd.f32 %v752, %v825
        %v858 = vadd.f32 %v753, %v826
        %v859 = vadd.f32 %v754, %v827
        %v860 = vadd.f32 %v755, %v828
        %v861 = vadd.f32 %v756, %v829
        %v862 = vadd.f32 %v757, %v830
        %v863 = vadd.f32 %v758, %v831
        %v864 = vadd.f32 %v759, %v832
        %v865 = vadd.f32 %v760, %v833
        %v866 = vadd.f32 %v761, %v834
        %v867 = vadd.f32 %v762, %v835
        %v868 = vadd.f32 %v763, %v836
        %v869 = vadd.f32 %v764, %v837
        %v870 = vadd.f32 %v765, %v838
        %v871 = vadd.f32 %v766, %v839
        %v872 = vadd.f32 %v767, %v840
        %v873 = vadd.f32 %v768, %v841
        %v874 = vadd.f32 %v769, %v842
        %v875 = vadd.f32 %v770, %v843
        %v876 = vadd.f32 %v771, %v844
        %v877 = vadd.f32 %v772, %v845
        %v878 = vld [vmem:[%s773 + $0x1] sm:$0xff]
        %v879 = vld [vmem:[%s773 + $0x9] sm:$0xff]
        %v880 = vld [vmem:[%s773 + $0x19] sm:$0xff]
        %v881 = vld [vmem:[%s773 + $0x21] sm:$0xff]
        %v882 = vld [vmem:[%s773 + $0x31] sm:$0xff]
        %v883 = vld [vmem:[%s773 + $0x39] sm:$0xff]
        %v884 = vld [vmem:[%s773 + $0x49] sm:$0xff]
        %v885 = vld [vmem:[%s773 + $0x51] sm:$0xff]
        %v886 = vld [vmem:[%s773 + $0x61] sm:$0xff]
        %v887 = vld [vmem:[%s773 + $0x69] sm:$0xff]
        %v888 = vld [vmem:[%s773 + $0x79] sm:$0xff]
        %v889 = vld [vmem:[%s773 + $0x81] sm:$0xff]
        %v890 = vld [vmem:[%s773 + $0x91] sm:$0xff]
        %v891 = vld [vmem:[%s773 + $0x99] sm:$0xff]
        %v892 = vld [vmem:[%s773 + $0xa9] sm:$0xff]
        %v893 = vld [vmem:[%s773 + $0xb1] sm:$0xff]
        %v894 = vld [vmem:[%s773 + $0xc1] sm:$0xff]
        %v895 = vld [vmem:[%s773 + $0xc9] sm:$0xff]
        %v896 = vld [vmem:[%s773 + $0xd9] sm:$0xff]
        %v897 = vld [vmem:[%s773 + $0xe1] sm:$0xff]
        %v898 = vld [vmem:[%s773 + $0xf1] sm:$0xff]
        %v899 = vld [vmem:[%s773 + $0xf9] sm:$0xff]
        %v900 = vld [vmem:[%s773 + $0x109] sm:$0xff]
        %v901 = vld [vmem:[%s773 + $0x111] sm:$0xff]
        %v902 = vld [vmem:[%s773 + $0x121] sm:$0xff]
        %v903 = vld [vmem:[%s773 + $0x129] sm:$0xff]
        %v904 = vld [vmem:[%s773 + $0x139] sm:$0xff]
        %v905 = vld [vmem:[%s773 + $0x141] sm:$0xff]
        %v906 = vld [vmem:[%s773 + $0x151] sm:$0xff]
        %v907 = vld [vmem:[%s773 + $0x159] sm:$0xff]
        %v908 = vld [vmem:[%s773 + $0x169] sm:$0xff]
        %v909 = vld [vmem:[%s773 + $0x171] sm:$0xff]
        %s910 = scalar_lea.vmem [#allocation4], 7
        %v911 = vld [vmem:[%s910] sm:$0x1]
        %v913 = vlaneseq
        %v914 = vshrl.u32 %v913, 7
        %v915 = vsub.s32 0, %v914
        %v916 = vrot.slane %v911, %v915
        %v918 = vmul.f32 %v878, %v916
        %v919 = vmul.f32 %v879, %v916
        %v920 = vmul.f32 %v880, %v916
        %v921 = vmul.f32 %v881, %v916
        %v922 = vmul.f32 %v882, %v916
        %v923 = vmul.f32 %v883, %v916
        %v924 = vmul.f32 %v884, %v916
        %v925 = vmul.f32 %v885, %v916
        %v926 = vmul.f32 %v886, %v916
        %v927 = vmul.f32 %v887, %v916
        %v928 = vmul.f32 %v888, %v916
        %v929 = vmul.f32 %v889, %v916
        %v930 = vmul.f32 %v890, %v916
        %v931 = vmul.f32 %v891, %v916
        %v932 = vmul.f32 %v892, %v916
        %v933 = vmul.f32 %v893, %v916
        %v934 = vmul.f32 %v894, %v916
        %v935 = vmul.f32 %v895, %v916
        %v936 = vmul.f32 %v896, %v916
        %v937 = vmul.f32 %v897, %v916
        %v938 = vmul.f32 %v898, %v916
        %v939 = vmul.f32 %v899, %v916
        %v940 = vmul.f32 %v900, %v916
        %v941 = vmul.f32 %v901, %v916
        %v942 = vmul.f32 %v902, %v916
        %v943 = vmul.f32 %v903, %v916
        %v944 = vmul.f32 %v904, %v916
        %v945 = vmul.f32 %v905, %v916
        %v946 = vmul.f32 %v906, %v916
        %v947 = vmul.f32 %v907, %v916
        %v948 = vmul.f32 %v908, %v916
        %v949 = vmul.f32 %v909, %v916
        %v950 = vadd.f32 %v846, %v918
        %v951 = vadd.f32 %v847, %v919
        %v952 = vadd.f32 %v848, %v920
        %v953 = vadd.f32 %v849, %v921
        %v954 = vadd.f32 %v850, %v922
        %v955 = vadd.f32 %v851, %v923
        %v956 = vadd.f32 %v852, %v924
        %v957 = vadd.f32 %v853, %v925
        %v958 = vadd.f32 %v854, %v926
        %v959 = vadd.f32 %v855, %v927
        %v960 = vadd.f32 %v856, %v928
        %v961 = vadd.f32 %v857, %v929
        %v962 = vadd.f32 %v858, %v930
        %v963 = vadd.f32 %v859, %v931
        %v964 = vadd.f32 %v860, %v932
        %v965 = vadd.f32 %v861, %v933
        %v966 = vadd.f32 %v862, %v934
        %v967 = vadd.f32 %v863, %v935
        %v968 = vadd.f32 %v864, %v936
        %v969 = vadd.f32 %v865, %v937
        %v970 = vadd.f32 %v866, %v938
        %v971 = vadd.f32 %v867, %v939
        %v972 = vadd.f32 %v868, %v940
        %v973 = vadd.f32 %v869, %v941
        %v974 = vadd.f32 %v870, %v942
        %v975 = vadd.f32 %v871, %v943
        %v976 = vadd.f32 %v872, %v944
        %v977 = vadd.f32 %v873, %v945
        %v978 = vadd.f32 %v874, %v946
        %v979 = vadd.f32 %v875, %v947
        %v980 = vadd.f32 %v876, %v948
        %v981 = vadd.f32 %v877, %v949
        %v982 = vld [vmem:[%s773 + $0x2] sm:$0xff]
        %v983 = vld [vmem:[%s773 + $0xa] sm:$0xff]
        %v984 = vld [vmem:[%s773 + $0x1a] sm:$0xff]
        %v985 = vld [vmem:[%s773 + $0x22] sm:$0xff]
        %v986 = vld [vmem:[%s773 + $0x32] sm:$0xff]
        %v987 = vld [vmem:[%s773 + $0x3a] sm:$0xff]
        %v988 = vld [vmem:[%s773 + $0x4a] sm:$0xff]
        %v989 = vld [vmem:[%s773 + $0x52] sm:$0xff]
        %v990 = vld [vmem:[%s773 + $0x62] sm:$0xff]
        %v991 = vld [vmem:[%s773 + $0x6a] sm:$0xff]
        %v992 = vld [vmem:[%s773 + $0x7a] sm:$0xff]
        %v993 = vld [vmem:[%s773 + $0x82] sm:$0xff]
        %v994 = vld [vmem:[%s773 + $0x92] sm:$0xff]
        %v995 = vld [vmem:[%s773 + $0x9a] sm:$0xff]
        %v996 = vld [vmem:[%s773 + $0xaa] sm:$0xff]
        %v997 = vld [vmem:[%s773 + $0xb2] sm:$0xff]
        %v998 = vld [vmem:[%s773 + $0xc2] sm:$0xff]
        %v999 = vld [vmem:[%s773 + $0xca] sm:$0xff]
        %v1000 = vld [vmem:[%s773 + $0xda] sm:$0xff]
        %v1001 = vld [vmem:[%s773 + $0xe2] sm:$0xff]
        %v1002 = vld [vmem:[%s773 + $0xf2] sm:$0xff]
        %v1003 = vld [vmem:[%s773 + $0xfa] sm:$0xff]
        %v1004 = vld [vmem:[%s773 + $0x10a] sm:$0xff]
        %v1005 = vld [vmem:[%s773 + $0x112] sm:$0xff]
        %v1006 = vld [vmem:[%s773 + $0x122] sm:$0xff]
        %v1007 = vld [vmem:[%s773 + $0x12a] sm:$0xff]
        %v1008 = vld [vmem:[%s773 + $0x13a] sm:$0xff]
        %v1009 = vld [vmem:[%s773 + $0x142] sm:$0xff]
        %v1010 = vld [vmem:[%s773 + $0x152] sm:$0xff]
        %v1011 = vld [vmem:[%s773 + $0x15a] sm:$0xff]
        %v1012 = vld [vmem:[%s773 + $0x16a] sm:$0xff]
        %v1013 = vld [vmem:[%s773 + $0x172] sm:$0xff]
        %s1014 = scalar_lea.vmem [#allocation4], 8
        %v1015 = vld [vmem:[%s1014] sm:$0x1]
        %v1017 = vlaneseq
        %v1018 = vshrl.u32 %v1017, 7
        %v1019 = vsub.s32 0, %v1018
        %v1020 = vrot.slane %v1015, %v1019
        %v1022 = vmul.f32 %v982, %v1020
        %v1023 = vmul.f32 %v983, %v1020
        %v1024 = vmul.f32 %v984, %v1020
        %v1025 = vmul.f32 %v985, %v1020
        %v1026 = vmul.f32 %v986, %v1020
        %v1027 = vmul.f32 %v987, %v1020
        %v1028 = vmul.f32 %v988, %v1020
        %v1029 = vmul.f32 %v989, %v1020
        %v1030 = vmul.f32 %v990, %v1020
        %v1031 = vmul.f32 %v991, %v1020
        %v1032 = vmul.f32 %v992, %v1020
        %v1033 = vmul.f32 %v993, %v1020
        %v1034 = vmul.f32 %v994, %v1020
        %v1035 = vmul.f32 %v995, %v1020
        %v1036 = vmul.f32 %v996, %v1020
        %v1037 = vmul.f32 %v997, %v1020
        %v1038 = vmul.f32 %v998, %v1020
        %v1039 = vmul.f32 %v999, %v1020
        %v1040 = vmul.f32 %v1000, %v1020
        %v1041 = vmul.f32 %v1001, %v1020
        %v1042 = vmul.f32 %v1002, %v1020
        %v1043 = vmul.f32 %v1003, %v1020
        %v1044 = vmul.f32 %v1004, %v1020
        %v1045 = vmul.f32 %v1005, %v1020
        %v1046 = vmul.f32 %v1006, %v1020
        %v1047 = vmul.f32 %v1007, %v1020
        %v1048 = vmul.f32 %v1008, %v1020
        %v1049 = vmul.f32 %v1009, %v1020
        %v1050 = vmul.f32 %v1010, %v1020
        %v1051 = vmul.f32 %v1011, %v1020
        %v1052 = vmul.f32 %v1012, %v1020
        %v1053 = vmul.f32 %v1013, %v1020
        %v1054 = vadd.f32 %v950, %v1022
        %v1055 = vadd.f32 %v951, %v1023
        %v1056 = vadd.f32 %v952, %v1024
        %v1057 = vadd.f32 %v953, %v1025
        %v1058 = vadd.f32 %v954, %v1026
        %v1059 = vadd.f32 %v955, %v1027
        %v1060 = vadd.f32 %v956, %v1028
        %v1061 = vadd.f32 %v957, %v1029
        %v1062 = vadd.f32 %v958, %v1030
        %v1063 = vadd.f32 %v959, %v1031
        %v1064 = vadd.f32 %v960, %v1032
        %v1065 = vadd.f32 %v961, %v1033
        %v1066 = vadd.f32 %v962, %v1034
        %v1067 = vadd.f32 %v963, %v1035
        %v1068 = vadd.f32 %v964, %v1036
        %v1069 = vadd.f32 %v965, %v1037
        %v1070 = vadd.f32 %v966, %v1038
        %v1071 = vadd.f32 %v967, %v1039
        %v1072 = vadd.f32 %v968, %v1040
        %v1073 = vadd.f32 %v969, %v1041
        %v1074 = vadd.f32 %v970, %v1042
        %v1075 = vadd.f32 %v971, %v1043
        %v1076 = vadd.f32 %v972, %v1044
        %v1077 = vadd.f32 %v973, %v1045
        %v1078 = vadd.f32 %v974, %v1046
        %v1079 = vadd.f32 %v975, %v1047
        %v1080 = vadd.f32 %v976, %v1048
        %v1081 = vadd.f32 %v977, %v1049
        %v1082 = vadd.f32 %v978, %v1050
        %v1083 = vadd.f32 %v979, %v1051
        %v1084 = vadd.f32 %v980, %v1052
        %v1085 = vadd.f32 %v981, %v1053
        %v1086 = vld [vmem:[#allocation7] sm:$0x1]
        %v1088 = vlaneseq
        %v1089 = vshrl.u32 %v1088, 7
        %v1090 = vsub.s32 0, %v1089
        %v1091 = vrot.slane %v1086, %v1090
        %v1093 = vadd.f32 %v1054, %v1091
        %v1094 = vadd.f32 %v1055, %v1091
        %v1095 = vadd.f32 %v1056, %v1091
        %v1096 = vadd.f32 %v1057, %v1091
        %v1097 = vadd.f32 %v1058, %v1091
        %v1098 = vadd.f32 %v1059, %v1091
        %v1099 = vadd.f32 %v1060, %v1091
        %v1100 = vadd.f32 %v1061, %v1091
        %v1101 = vadd.f32 %v1062, %v1091
        %v1102 = vadd.f32 %v1063, %v1091
        %v1103 = vadd.f32 %v1064, %v1091
        %v1104 = vadd.f32 %v1065, %v1091
        %v1105 = vadd.f32 %v1066, %v1091
        %v1106 = vadd.f32 %v1067, %v1091
        %v1107 = vadd.f32 %v1068, %v1091
        %v1108 = vadd.f32 %v1069, %v1091
        %v1109 = vadd.f32 %v1070, %v1091
        %v1110 = vadd.f32 %v1071, %v1091
        %v1111 = vadd.f32 %v1072, %v1091
        %v1112 = vadd.f32 %v1073, %v1091
        %v1113 = vadd.f32 %v1074, %v1091
        %v1114 = vadd.f32 %v1075, %v1091
        %v1115 = vadd.f32 %v1076, %v1091
        %v1116 = vadd.f32 %v1077, %v1091
        %v1117 = vadd.f32 %v1078, %v1091
        %v1118 = vadd.f32 %v1079, %v1091
        %v1119 = vadd.f32 %v1080, %v1091
        %v1120 = vadd.f32 %v1081, %v1091
        %v1121 = vadd.f32 %v1082, %v1091
        %v1122 = vadd.f32 %v1083, %v1091
        %v1123 = vadd.f32 %v1084, %v1091
        %v1124 = vadd.f32 %v1085, %v1091
        %v1125 = vmax.f32 %v1093, 0.0
        %v1126 = vmax.f32 %v1094, 0.0
        %v1127 = vmax.f32 %v1095, 0.0
        %v1128 = vmax.f32 %v1096, 0.0
        %v1129 = vmax.f32 %v1097, 0.0
        %v1130 = vmax.f32 %v1098, 0.0
        %v1131 = vmax.f32 %v1099, 0.0
        %v1132 = vmax.f32 %v1100, 0.0
        %v1133 = vmax.f32 %v1101, 0.0
        %v1134 = vmax.f32 %v1102, 0.0
        %v1135 = vmax.f32 %v1103, 0.0
        %v1136 = vmax.f32 %v1104, 0.0
        %v1137 = vmax.f32 %v1105, 0.0
        %v1138 = vmax.f32 %v1106, 0.0
        %v1139 = vmax.f32 %v1107, 0.0
        %v1140 = vmax.f32 %v1108, 0.0
        %v1141 = vmax.f32 %v1109, 0.0
        %v1142 = vmax.f32 %v1110, 0.0
        %v1143 = vmax.f32 %v1111, 0.0
        %v1144 = vmax.f32 %v1112, 0.0
        %v1145 = vmax.f32 %v1113, 0.0
        %v1146 = vmax.f32 %v1114, 0.0
        %v1147 = vmax.f32 %v1115, 0.0
        %v1148 = vmax.f32 %v1116, 0.0
        %v1149 = vmax.f32 %v1117, 0.0
        %v1150 = vmax.f32 %v1118, 0.0
        %v1151 = vmax.f32 %v1119, 0.0
        %v1152 = vmax.f32 %v1120, 0.0
        %v1153 = vmax.f32 %v1121, 0.0
        %v1154 = vmax.f32 %v1122, 0.0
        %v1155 = vmax.f32 %v1123, 0.0
        %v1156 = vmax.f32 %v1124, 0.0
        %1157 = vst [vmem:[%s164] sm:$0xff] %v1125
        %1158 = vst [vmem:[%s164 + $0x8] sm:$0xff] %v1126
        %1159 = vst [vmem:[%s164 + $0x10] sm:$0xff] %v1127
        %1160 = vst [vmem:[%s164 + $0x18] sm:$0xff] %v1128
        %1161 = vst [vmem:[%s164 + $0x20] sm:$0xff] %v1129
        %1162 = vst [vmem:[%s164 + $0x28] sm:$0xff] %v1130
        %1163 = vst [vmem:[%s164 + $0x30] sm:$0xff] %v1131
        %1164 = vst [vmem:[%s164 + $0x38] sm:$0xff] %v1132
        %1165 = vst [vmem:[%s164 + $0x40] sm:$0xff] %v1133
        %1166 = vst [vmem:[%s164 + $0x48] sm:$0xff] %v1134
        %1167 = vst [vmem:[%s164 + $0x50] sm:$0xff] %v1135
        %1168 = vst [vmem:[%s164 + $0x58] sm:$0xff] %v1136
        %1169 = vst [vmem:[%s164 + $0x60] sm:$0xff] %v1137
        %1170 = vst [vmem:[%s164 + $0x68] sm:$0xff] %v1138
        %1171 = vst [vmem:[%s164 + $0x70] sm:$0xff] %v1139
        %1172 = vst [vmem:[%s164 + $0x78] sm:$0xff] %v1140
        %1173 = vst [vmem:[%s164 + $0x80] sm:$0xff] %v1141
        %1174 = vst [vmem:[%s164 + $0x88] sm:$0xff] %v1142
        %1175 = vst [vmem:[%s164 + $0x90] sm:$0xff] %v1143
        %1176 = vst [vmem:[%s164 + $0x98] sm:$0xff] %v1144
        %1177 = vst [vmem:[%s164 + $0xa0] sm:$0xff] %v1145
        %1178 = vst [vmem:[%s164 + $0xa8] sm:$0xff] %v1146
        %1179 = vst [vmem:[%s164 + $0xb0] sm:$0xff] %v1147
        %1180 = vst [vmem:[%s164 + $0xb8] sm:$0xff] %v1148
        %1181 = vst [vmem:[%s164 + $0xc0] sm:$0xff] %v1149
        %1182 = vst [vmem:[%s164 + $0xc8] sm:$0xff] %v1150
        %1183 = vst [vmem:[%s164 + $0xd0] sm:$0xff] %v1151
        %1184 = vst [vmem:[%s164 + $0xd8] sm:$0xff] %v1152
        %1185 = vst [vmem:[%s164 + $0xe0] sm:$0xff] %v1153
        %1186 = vst [vmem:[%s164 + $0xe8] sm:$0xff] %v1154
        %1187 = vst [vmem:[%s164 + $0xf0] sm:$0xff] %v1155
        %1188 = vst [vmem:[%s164 + $0xf8] sm:$0xff] %v1156
        %s1189 = sand.u32 %s83, 1
        %s1190 = scalar_lea.sflag [#allocation6], %s1189
        %s1191 = sand.u32 %s83, 1
        %s1192 = smul.addr %s1191, 256
        %s1193 = scalar_lea.vmem [#allocation9], %s1192
        // Predicated region
        $region37: #{classifier_forward.5} parent=27 // pred_check
          %p1194 = pneg %p93
        $region38: #{classifier_forward.5} parent=27 // pred_check_branch
          %1196 = sbr.rel (%p1194) target = $region40
        $region39: #{classifier_forward.5} parent=27 // pred_region
          %s1197 = smul.u32 16, %s24
          %s1199 = ssub.s32 4096, 4096
          %1200 = vsyncadd %s1190, %s1199
          %s1201 = smul.addr %s1197, 2
          %s1202 = smul.addr %s23, 32
          %s1203 = sadd.s32 %s1201, %s1202
          %s1204 = smul.addr %s1203, 128
          %s1205 = scalar_lea.hbm %s3, %s1204
          %s1206 = sshll.u32 %s1193, 4
          %s1207 = int_to_ptr.vmem [resolvable:$true] %s1206
          %1212 = dma.vmem_to_hbm [thread:$0]  %s1207, 4096, %s1205, %s1190, 128, 128, 8
        $region40: #{classifier_forward.5} parent=27 // pred_fallthru
          _
      $region28: #{classifier_forward.5} parent=5 // pred_fallthru
        _
      %p1213 = scmp.le.s32.totalorder 2, %s14
      // Predicated region
      $region41: #{classifier_forward.5} parent=5 // pred_check
        %p1214 = pneg %p1213
      $region42: #{classifier_forward.5} parent=5 // pred_check_branch
        %1216 = sbr.rel (%p1214) target = $region44
      $region43: #{classifier_forward.5} parent=5 // pred_region
        %s1217 = ssub.s32 %s14, 2
        // Predicated region
        $region45: #{classifier_forward.5} parent=43 // pred_check
          %p1218 = pneg %p99
        $region46: #{classifier_forward.5} parent=43 // pred_check_branch
          %1220 = sbr.rel (%p1218) target = $region48
        $region47: #{classifier_forward.5} parent=43 // pred_region
          %s1221 = sand.u32 %s84, 1
          %s1222 = scalar_lea.sflag [#allocation6], %s1221
          %s1223 = sand.u32 %s84, 1
          %s1224 = smul.addr %s1223, 256
          %s1225 = scalar_lea.vmem [#allocation9], %s1224
          %1226 = dma.done %s1222, 4096
        $region48: #{classifier_forward.5} parent=43 // pred_fallthru
          _
      $region44: #{classifier_forward.5} parent=5 // pred_fallthru
        _
    $region6: #{classifier_forward.5} parent=1 // loop_footer
      %s18 = sadd.s32 1, %s14
    $region7: #{classifier_forward.5} parent=1 // loop_footer_branch
      %13 = sbr.rel target = $region3
    $region8: #{classifier_forward.5} parent=1 // loop_exit
      _
    %1227 = vsyncpa [#allocation5], 1
    %s1228 = scalar_lea.sflag [#allocation5], 1
    %1229 = vsyncpa %s1228, 1
    %1230 = vsyncpa [#allocation8], 1
    %1231 = vsyncpa [#allocation6], 1
    %s1232 = scalar_lea.sflag [#allocation6], 1
    %1233 = vsyncpa %s1232, 1
  %1234 = vsyncmov [#allocation3]
  %s1235 = vpop.sfrf %1234
  %p1236 = scmp.eq.s32.totalorder %s1235, 0
  %p1237 = pneg %p1236
  %1239 = shalt.err (%p1237)

// kernel: classifier_forward.9
$region0: #{classifier_forward.9}
  #allocation0 [shape = 'u32[]', space=smem, size = 0x4, offset = 0x4, fixed_abs, tag = 'smem constant byte address 0x4 - core index']
  #allocation1 [shape = 'u32[144,128]{1,0:T(1,128)}', space=vmem, size = 0x12000, scoped, tag = 'internal scratch']
  %s0 = inlined_call_operand.hbm [shape: f32[32,16], index: 0, kind: input, shape index: {}]
  %s1 = inlined_call_operand.hbm [shape: f32[64,16,128], index: 1, kind: input, shape index: {}]
  %s2 = inlined_call_operand.hbm [shape: f32[64,32,128], index: 2, kind: output, shape index: {}]
  %s3 = sld [smem:[#allocation0]]
  $region49: #{classifier_forward.9} parent=0
    _
  %s5 = ssub.s32 1, %s3
  %s6 = scalar_select 0, %s5, %s3
  $region1: #{classifier_forward.9} parent=0
    #allocation2 [shape = 'u8[16384]{0}', space=vmem, size = 0x4000, scoped, tag = 'input window, operand 0, single buffered']
    #allocation3 [shape = 's32[2]{0}', space=sflag, size = 0x8, scoped, tag = 'scoped memory for classifier_forward.9']
    #allocation4 [shape = 's32[2]{0}', space=sflag, size = 0x8, scoped, tag = 'scoped memory for classifier_forward.9']
    #allocation5 [shape = 'u8[131072]{0}', space=vmem, size = 0x20000, scoped, tag = 'input window, operand 1']
    #allocation6 [shape = 's32[2]{0}', space=sflag, size = 0x8, scoped, tag = 'scoped memory for classifier_forward.9']
    #allocation7 [shape = 'u8[262144]{0}', space=vmem, size = 0x40000, scoped, tag = 'output window, operand 0']
    %7 = vsyncpa [#allocation3], 0
    %8 = vsyncpa [#allocation6], 0
    %s9 = scalar_lea.sflag [#allocation6], 1
    %10 = vsyncpa %s9, 0
    %11 = vsyncpa [#allocation4], 0
    %s12 = scalar_lea.sflag [#allocation4], 1
    %13 = vsyncpa %s12, 0
    loop: start=0, step=1, limit=10
    $region2: #{classifier_forward.9} parent=1 // loop_pre_header
      _
    $region3: #{classifier_forward.9} parent=1 // loop_header
      %s15 = sphi 0, %s19
      %p16 = scmp.ge.s32.totalorder %s15, 10
      %s23 = sphi 0, %s23
      %s25 = sphi 0, %s23
      %s26 = sphi 0, %s25
      %s40 = sphi 0, %s26
      %s46 = sphi 0, %s48
      %s49 = sphi 0, %s46
      %s50 = sphi 0, %s49
      %s66 = sphi 0, %s50
      %s72 = sphi 0, %s74
      %s75 = sphi 0, %s72
      %s76 = sphi 0, %s75
      %s92 = sphi 0, %s76
    $region4: #{classifier_forward.9} parent=1 // loop_header_branch
      %18 = sbr.rel (%p16) target = $region8
    $region5: #{classifier_forward.9} parent=1 // loop_body
      %s20 = ssub.s32 %s15, 1
      %s21 = ssub.s32 %s15, 2
      %s22 = sadd.s32 %s15, 1
      %s24 = sadd.s32 %s23, 1
      %p27 = scmp.eq.s32.totalorder %s15, 7
      %p28 = scmp.ne.s32.totalorder %s23, %s25
      %p29 = scmp.eq.s32.totalorder %s15, 0
      %p30 = por %p28, %p29
      %p31 = scmp.ne.s32.totalorder %s23, %s25
      %p32 = scmp.eq.s32.totalorder %s20, 7
      %p33 = por %p31, %p32
      %p34 = scmp.ne.s32.totalorder %s25, %s26
      %p35 = scmp.eq.s32.totalorder %s20, 0
      %p36 = por %p34, %p35
      %p37 = scmp.ne.s32.totalorder %s25, %s26
      %p38 = scmp.eq.s32.totalorder %s21, 7
      %p39 = por %p37, %p38
      %p41 = scmp.ne.s32.totalorder %s26, %s40
      %p42 = scmp.eq.s32.totalorder %s21, 0
      %p43 = por %p41, %p42
      %s44 = ssub.s32 %s15, %s22
      %p45 = scmp.eq.s32.totalorder %s44, 0
      %s47 = sadd.s32 %s46, 1
      %s48 = scalar_select %p45, %s46, %s47
      %p51 = pneg %p45
      %p52 = scmp.eq.s32.totalorder %s15, 7
      %p53 = por %p51, %p52
      %p54 = scmp.ne.s32.totalorder %s46, %s49
      %p55 = scmp.eq.s32.totalorder %s15, 0
      %p56 = por %p54, %p55
      %p57 = scmp.ne.s32.totalorder %s46, %s49
      %p58 = scmp.eq.s32.totalorder %s20, 7
      %p59 = por %p57, %p58
      %p60 = scmp.ne.s32.totalorder %s49, %s50
      %p61 = scmp.eq.s32.totalorder %s20, 0
      %p62 = por %p60, %p61
      %p63 = scmp.ne.s32.totalorder %s49, %s50
      %p64 = scmp.eq.s32.totalorder %s21, 7
      %p65 = por %p63, %p64
      %p67 = scmp.ne.s32.totalorder %s50, %s66
      %p68 = scmp.eq.s32.totalorder %s21, 0
      %p69 = por %p67, %p68
      %s70 = ssub.s32 %s15, %s22
      %p71 = scmp.eq.s32.totalorder %s70, 0
      %s73 = sadd.s32 %s72, 1
      %s74 = scalar_select %p71, %s72, %s73
      %p77 = pneg %p71
      %p78 = scmp.eq.s32.totalorder %s15, 7
      %p79 = por %p77, %p78
      %p80 = scmp.ne.s32.totalorder %s72, %s75
      %p81 = scmp.eq.s32.totalorder %s15, 0
      %p82 = por %p80, %p81
      %p83 = scmp.ne.s32.totalorder %s72, %s75
      %p84 = scmp.eq.s32.totalorder %s20, 7
      %p85 = por %p83, %p84
      %p86 = scmp.ne.s32.totalorder %s75, %s76
      %p87 = scmp.eq.s32.totalorder %s20, 0
      %p88 = por %p86, %p87
      %p89 = scmp.ne.s32.totalorder %s75, %s76
      %p90 = scmp.eq.s32.totalorder %s21, 7
      %p91 = por %p89, %p90
      %p93 = scmp.ne.s32.totalorder %s76, %s92
      %p94 = scmp.eq.s32.totalorder %s21, 0
      %p95 = por %p93, %p94
      %p96 = scmp.le.s32.totalorder 1, %s15
      %p97 = scmp.lt.s32.totalorder %s15, 9
      %p98 = pnand %p96, %p97
      %p99 = pneg %p98
      // Predicated region
      $region9: #{classifier_forward.9} parent=5 // pred_check
        _
      $region10: #{classifier_forward.9} parent=5 // pred_check_branch
        %101 = sbr.rel (%p98) target = $region12
      $region11: #{classifier_forward.9} parent=5 // pred_region
        %s102 = ssub.s32 %s15, 1
        // Predicated region
        $region13: #{classifier_forward.9} parent=11 // pred_check
          %p103 = pneg %p36
        $region14: #{classifier_forward.9} parent=11 // pred_check_branch
          %105 = sbr.rel (%p103) target = $region16
        $region15: #{classifier_forward.9} parent=11 // pred_region
          %s107 = ssub.s32 512, 512
          %108 = vsyncadd [#allocation3], %s107
          %s109 = sshll.u32 [#allocation2], 4
          %s110 = int_to_ptr.vmem [resolvable:$true] %s109
          %115 = dma.hbm_to_vmem [thread:$0]  %s0, 512, %s110, [#allocation3], 128, 128, 8
        $region16: #{classifier_forward.9} parent=11 // pred_fallthru
          _
      $region12: #{classifier_forward.9} parent=5 // pred_fallthru
        _
      %p116 = scmp.lt.s32.totalorder %s15, 8
      // Predicated region
      $region17: #{classifier_forward.9} parent=5 // pred_check
        %p117 = pneg %p116
      $region18: #{classifier_forward.9} parent=5 // pred_check_branch
        %119 = sbr.rel (%p117) target = $region20
      $region19: #{classifier_forward.9} parent=5 // pred_region
        // Predicated region
        $region21: #{classifier_forward.9} parent=19 // pred_check
          %p120 = pneg %p56
        $region22: #{classifier_forward.9} parent=19 // pred_check_branch
          %122 = sbr.rel (%p120) target = $region24
        $region23: #{classifier_forward.9} parent=19 // pred_region
          %s123 = sand.u32 %s46, 1
          %s124 = scalar_lea.sflag [#allocation6], %s123
          %s125 = sand.u32 %s46, 1
          %s126 = smul.addr %s125, 128
          %s127 = scalar_lea.vmem [#allocation5], %s126
          %s128 = smul.u32 8, %s15
          %s130 = ssub.s32 2048, 2048
          %131 = vsyncadd %s124, %s130
          %s132 = smul.addr %s128, 2
          %s133 = smul.addr %s132, 128
          %s134 = scalar_lea.hbm %s1, %s133
          %s135 = sshll.u32 %s127, 4
          %s136 = int_to_ptr.vmem [resolvable:$true] %s135
          %141 = dma.hbm_to_vmem [thread:$0]  %s134, 2048, %s136, %s124, 128, 128, 8
        $region24: #{classifier_forward.9} parent=19 // pred_fallthru
          _
      $region20: #{classifier_forward.9} parent=5 // pred_fallthru
        _
      %p142 = scmp.le.s32.totalorder 1, %s15
      %p143 = scmp.lt.s32.totalorder %s15, 9
      %p144 = pnand %p142, %p143
      %p145 = pneg %p144
      // Predicated region
      $region25: #{classifier_forward.9} parent=5 // pred_check
        _
      $region26: #{classifier_forward.9} parent=5 // pred_check_branch
        %147 = sbr.rel (%p144) target = $region28
      $region27: #{classifier_forward.9} parent=5 // pred_region
        %s148 = ssub.s32 %s15, 1
        // Predicated region
        $region29: #{classifier_forward.9} parent=27 // pred_check
          %p149 = pneg %p36
        $region30: #{classifier_forward.9} parent=27 // pred_check_branch
          %151 = sbr.rel (%p149) target = $region32
        $region31: #{classifier_forward.9} parent=27 // pred_region
          %152 = dma.done [#allocation3], 512
        $region32: #{classifier_forward.9} parent=27 // pred_fallthru
          _
        %s153 = sand.u32 %s49, 1
        %s154 = scalar_lea.sflag [#allocation6], %s153
        %s155 = sand.u32 %s49, 1
        %s156 = smul.addr %s155, 128
        %s157 = scalar_lea.vmem [#allocation5], %s156
        // Predicated region
        $region33: #{classifier_forward.9} parent=27 // pred_check
          %p158 = pneg %p62
        $region34: #{classifier_forward.9} parent=27 // pred_check_branch
          %160 = sbr.rel (%p158) target = $region36
        $region35: #{classifier_forward.9} parent=27 // pred_region
          %161 = dma.done %s154, 2048
        $region36: #{classifier_forward.9} parent=27 // pred_fallthru
          _
        %p162 = pneg %p36
        %p163 = pneg %p33
        %s164 = sand.u32 %s49, 1
        %s165 = scalar_lea.sflag [#allocation6], %s164
        %s166 = sand.u32 %s49, 1
        %s167 = smul.addr %s166, 128
        %s168 = scalar_lea.vmem [#allocation5], %s167
        %p169 = pneg %p62
        %p170 = pneg %p59
        %p171 = pneg %p88
        %p172 = pneg %p85
        %s173 = sand.u32 %s75, 1
        %s174 = scalar_lea.sflag [#allocation4], %s173
        %s175 = sand.u32 %s75, 1
        %s176 = smul.addr %s175, 256
        %s177 = scalar_lea.vmem [#allocation7], %s176
        %s178 = smul.u32 8, %s20
        %s179 = smul.u32 8, %s20
        %v180 = vld [vmem:[#allocation2] sm:$0xff]
        %v181 = vld [vmem:[#allocation2 + $0x8] sm:$0xff]
        %v182 = vld [vmem:[#allocation2 + $0x10] sm:$0xff]
        %v183 = vld [vmem:[#allocation2 + $0x18] sm:$0xff]
        %v184 = vld [vmem:[%s157] sm:$0xff]
        %v185 = vld [vmem:[%s157 + $0x8] sm:$0xff]
        %vm186 = vcmask 130048
        %v188 = vsel %vm186, %v180, 0
        %v191 = vsel %vm186, %v181, 0
        %v194 = vsel %vm186, %v182, 0
        %v197 = vsel %vm186, %v183, 0
        %199 = vmatprep.subr.mxu0 0.0
        %200 = vmatpush1.msra.mxu0 %v184
        %201 = vmatprep.subr.mxu0 0.0
        %202 = vmatpush1.msra.mxu0 %v185
        %203 = vmatprep.subr.mxu0 0.0
        %204 = vmatpush1.msra.mxu0 0.0
        %205 = vmatprep.subr.mxu0 0.0
        %206 = vmatpush1.msra.mxu0 0.0
        %207 = vmatprep.subr.mxu0 0.0
        %208 = vmatpush1.msra.mxu0 0.0
        %209 = vmatprep.subr.mxu0 0.0
        %210 = vmatpush1.msra.mxu0 0.0
        %211 = vmatprep.subr.mxu0 0.0
        %212 = vmatpush1.msra.mxu0 0.0
        %213 = vmatprep.subr.mxu0 0.0
        %214 = vmatpush1.msra.mxu0 0.0
        %215 = vmatprep.subr.mxu0 0.0
        %216 = vmatpush1.msra.mxu0 0.0
        %217 = vmatprep.subr.mxu0 0.0
        %218 = vmatpush1.msra.mxu0 0.0
        %219 = vmatprep.subr.mxu0 0.0
        %220 = vmatpush1.msra.mxu0 0.0
        %221 = vmatprep.subr.mxu0 0.0
        %222 = vmatpush1.msra.mxu0 0.0
        %223 = vmatprep.subr.mxu0 0.0
        %224 = vmatpush1.msra.mxu0 0.0
        %225 = vmatprep.subr.mxu0 0.0
        %226 = vmatpush1.msra.mxu0 0.0
        %227 = vmatprep.subr.mxu0 0.0
        %228 = vmatpush1.msra.mxu0 0.0
        %229 = vmatprep.subr.mxu0 0.0
        %230 = vmatpush1.msra.mxu0 0.0
        %231 = vmatprep.subr.mxu0 0.0
        %232 = vmatpush1.msra.mxu0 0.0
        %233 = vmatprep.subr.mxu0 0.0
        %234 = vmatpush1.msra.mxu0 0.0
        %235 = vmatprep.subr.mxu0 0.0
        %236 = vmatpush1.msra.mxu0 0.0
        %237 = vmatprep.subr.mxu0 0.0
        %238 = vmatpush1.msra.mxu0 0.0
        %239 = vmatprep.subr.mxu0 0.0
        %240 = vmatpush1.msra.mxu0 0.0
        %241 = vmatprep.subr.mxu0 0.0
        %242 = vmatpush1.msra.mxu0 0.0
        %243 = vmatprep.subr.mxu0 0.0
        %244 = vmatpush1.msra.mxu0 0.0
        %245 = vmatprep.subr.mxu0 0.0
        %246 = vmatpush1.msra.mxu0 0.0
        %247 = vmatprep.subr.mxu0 0.0
        %248 = vmatpush1.msra.mxu0 0.0
        %249 = vmatprep.subr.mxu0 0.0
        %250 = vmatpush1.msra.mxu0 0.0
        %251 = vmatprep.subr.mxu0 0.0
        %252 = vmatpush1.msra.mxu0 0.0
        %253 = vmatprep.subr.mxu0 0.0
        %254 = vmatpush1.msra.mxu0 0.0
        %255 = vmatprep.subr.mxu0 0.0
        %256 = vmatpush1.msra.mxu0 0.0
        %257 = vmatprep.subr.mxu0 0.0
        %258 = vmatpush1.msra.mxu0 0.0
        %259 = vmatprep.subr.mxu0 0.0
        %260 = vmatpush1.msra.mxu0 0.0
        %261 = vmatprep.subr.mxu0 0.0
        %262 = vmatpush1.msra.mxu0 0.0
        %263 = vmatprep.mubr.f32.mxu0 0.0
        %264 = vmatmul.mubr.f32.gmra.mrb[0].mxu0 %v188
        %v265 = vpop.f32.mrb[0].mxu0
        %v266 = vadd.f32 0.0, %v265
        %v267 = vpop.f32.mrb[0].mxu0
        %268 = vmatprep.mubr.f32.mxu0 0.0
        %269 = vmatmul.mubr.f32.gmra.mrb[0].mxu0 %v191
        %v270 = vpop.f32.mrb[0].mxu0
        %v271 = vadd.f32 0.0, %v270
        %v272 = vpop.f32.mrb[0].mxu0
        %273 = vmatprep.mubr.f32.mxu0 0.0
        %274 = vmatmul.mubr.f32.gmra.mrb[0].mxu0 %v194
        %v275 = vpop.f32.mrb[0].mxu0
        %v276 = vadd.f32 0.0, %v275
        %v277 = vpop.f32.mrb[0].mxu0
        %278 = vmatprep.mubr.f32.mxu0 0.0
        %279 = vmatmul.mubr.f32.gmra.mrb[0].mxu0 %v197
        %v280 = vpop.f32.mrb[0].mxu0
        %v281 = vadd.f32 0.0, %v280
        %v282 = vpop.f32.mrb[0].mxu0
        %283 = vdwg.mxu0
        %284 = vst [vmem:[%s177] sm:$0xff] %v266
        %285 = vst [vmem:[%s177 + $0x8] sm:$0xff] %v271
        %286 = vst [vmem:[%s177 + $0x10] sm:$0xff] %v276
        %287 = vst [vmem:[%s177 + $0x18] sm:$0xff] %v281
        %s288 = scalar_lea.vmem %s157, 16 [#allocation5]
        %v289 = vld [vmem:[%s288] sm:$0xff]
        %v290 = vld [vmem:[%s288 + $0x8] sm:$0xff]
        %291 = vmatprep.subr.mxu0 0.0
        %292 = vmatpush1.msra.mxu0 %v289
        %293 = vmatprep.subr.mxu0 0.0
        %294 = vmatpush1.msra.mxu0 %v290
        %295 = vmatprep.subr.mxu0 0.0
        %296 = vmatpush1.msra.mxu0 0.0
        %297 = vmatprep.subr.mxu0 0.0
        %298 = vmatpush1.msra.mxu0 0.0
        %299 = vmatprep.subr.mxu0 0.0
        %300 = vmatpush1.msra.mxu0 0.0
        %301 = vmatprep.subr.mxu0 0.0
        %302 = vmatpush1.msra.mxu0 0.0
        %303 = vmatprep.subr.mxu0 0.0
        %304 = vmatpush1.msra.mxu0 0.0
        %305 = vmatprep.subr.mxu0 0.0
        %306 = vmatpush1.msra.mxu0 0.0
        %307 = vmatprep.subr.mxu0 0.0
        %308 = vmatpush1.msra.mxu0 0.0
        %309 = vmatprep.subr.mxu0 0.0
        %310 = vmatpush1.msra.mxu0 0.0
        %311 = vmatprep.subr.mxu0 0.0
        %312 = vmatpush1.msra.mxu0 0.0
        %313 = vmatprep.subr.mxu0 0.0
        %314 = vmatpush1.msra.mxu0 0.0
        %315 = vmatprep.subr.mxu0 0.0
        %316 = vmatpush1.msra.mxu0 0.0
        %317 = vmatprep.subr.mxu0 0.0
        %318 = vmatpush1.msra.mxu0 0.0
        %319 = vmatprep.subr.mxu0 0.0
        %320 = vmatpush1.msra.mxu0 0.0
        %321 = vmatprep.subr.mxu0 0.0
        %322 = vmatpush1.msra.mxu0 0.0
        %323 = vmatprep.subr.mxu0 0.0
        %324 = vmatpush1.msra.mxu0 0.0
        %325 = vmatprep.subr.mxu0 0.0
        %326 = vmatpush1.msra.mxu0 0.0
        %327 = vmatprep.subr.mxu0 0.0
        %328 = vmatpush1.msra.mxu0 0.0
        %329 = vmatprep.subr.mxu0 0.0
        %330 = vmatpush1.msra.mxu0 0.0
        %331 = vmatprep.subr.mxu0 0.0
        %332 = vmatpush1.msra.mxu0 0.0
        %333 = vmatprep.subr.mxu0 0.0
        %334 = vmatpush1.msra.mxu0 0.0
        %335 = vmatprep.subr.mxu0 0.0
        %336 = vmatpush1.msra.mxu0 0.0
        %337 = vmatprep.subr.mxu0 0.0
        %338 = vmatpush1.msra.mxu0 0.0
        %339 = vmatprep.subr.mxu0 0.0
        %340 = vmatpush1.msra.mxu0 0.0
        %341 = vmatprep.subr.mxu0 0.0
        %342 = vmatpush1.msra.mxu0 0.0
        %343 = vmatprep.subr.mxu0 0.0
        %344 = vmatpush1.msra.mxu0 0.0
        %345 = vmatprep.subr.mxu0 0.0
        %346 = vmatpush1.msra.mxu0 0.0
        %347 = vmatprep.subr.mxu0 0.0
        %348 = vmatpush1.msra.mxu0 0.0
        %349 = vmatprep.subr.mxu0 0.0
        %350 = vmatpush1.msra.mxu0 0.0
        %351 = vmatprep.subr.mxu0 0.0
        %352 = vmatpush1.msra.mxu0 0.0
        %353 = vmatprep.subr.mxu0 0.0
        %354 = vmatpush1.msra.mxu0 0.0
        %355 = vmatprep.mubr.f32.mxu0 0.0
        %356 = vmatmul.mubr.f32.gmra.mrb[0].mxu0 %v188
        %v357 = vpop.f32.mrb[0].mxu0
        %v358 = vadd.f32 0.0, %v357
        %v359 = vpop.f32.mrb[0].mxu0
        %360 = vmatprep.mubr.f32.mxu0 0.0
        %361 = vmatmul.mubr.f32.gmra.mrb[0].mxu0 %v191
        %v362 = vpop.f32.mrb[0].mxu0
        %v363 = vadd.f32 0.0, %v362
        %v364 = vpop.f32.mrb[0].mxu0
        %365 = vmatprep.mubr.f32.mxu0 0.0
        %366 = vmatmul.mubr.f32.gmra.mrb[0].mxu0 %v194
        %v367 = vpop.f32.mrb[0].mxu0
        %v368 = vadd.f32 0.0, %v367
        %v369 = vpop.f32.mrb[0].mxu0
        %370 = vmatprep.mubr.f32.mxu0 0.0
        %371 = vmatmul.mubr.f32.gmra.mrb[0].mxu0 %v197
        %v372 = vpop.f32.mrb[0].mxu0
        %v373 = vadd.f32 0.0, %v372
        %v374 = vpop.f32.mrb[0].mxu0
        %375 = vdwg.mxu0
        %s376 = scalar_lea.vmem %s177, 32 [#allocation7]
        %377 = vst [vmem:[%s376] sm:$0xff] %v358
        %378 = vst [vmem:[%s376 + $0x8] sm:$0xff] %v363
        %379 = vst [vmem:[%s376 + $0x10] sm:$0xff] %v368
        %380 = vst [vmem:[%s376 + $0x18] sm:$0xff] %v373
        %s381 = scalar_lea.vmem %s157, 32 [#allocation5]
        %v382 = vld [vmem:[%s381] sm:$0xff]
        %v383 = vld [vmem:[%s381 + $0x8] sm:$0xff]
        %384 = vmatprep.subr.mxu0 0.0
        %385 = vmatpush1.msra.mxu0 %v382
        %386 = vmatprep.subr.mxu0 0.0
        %387 = vmatpush1.msra.mxu0 %v383
        %388 = vmatprep.subr.mxu0 0.0
        %389 = vmatpush1.msra.mxu0 0.0
        %390 = vmatprep.subr.mxu0 0.0
        %391 = vmatpush1.msra.mxu0 0.0
        %392 = vmatprep.subr.mxu0 0.0
        %393 = vmatpush1.msra.mxu0 0.0
        %394 = vmatprep.subr.mxu0 0.0
        %395 = vmatpush1.msra.mxu0 0.0
        %396 = vmatprep.subr.mxu0 0.0
        %397 = vmatpush1.msra.mxu0 0.0
        %398 = vmatprep.subr.mxu0 0.0
        %399 = vmatpush1.msra.mxu0 0.0
        %400 = vmatprep.subr.mxu0 0.0
        %401 = vmatpush1.msra.mxu0 0.0
        %402 = vmatprep.subr.mxu0 0.0
        %403 = vmatpush1.msra.mxu0 0.0
        %404 = vmatprep.subr.mxu0 0.0
        %405 = vmatpush1.msra.mxu0 0.0
        %406 = vmatprep.subr.mxu0 0.0
        %407 = vmatpush1.msra.mxu0 0.0
        %408 = vmatprep.subr.mxu0 0.0
        %409 = vmatpush1.msra.mxu0 0.0
        %410 = vmatprep.subr.mxu0 0.0
        %411 = vmatpush1.msra.mxu0 0.0
        %412 = vmatprep.subr.mxu0 0.0
        %413 = vmatpush1.msra.mxu0 0.0
        %414 = vmatprep.subr.mxu0 0.0
        %415 = vmatpush1.msra.mxu0 0.0
        %416 = vmatprep.subr.mxu0 0.0
        %417 = vmatpush1.msra.mxu0 0.0
        %418 = vmatprep.subr.mxu0 0.0
        %419 = vmatpush1.msra.mxu0 0.0
        %420 = vmatprep.subr.mxu0 0.0
        %421 = vmatpush1.msra.mxu0 0.0
        %422 = vmatprep.subr.mxu0 0.0
        %423 = vmatpush1.msra.mxu0 0.0
        %424 = vmatprep.subr.mxu0 0.0
        %425 = vmatpush1.msra.mxu0 0.0
        %426 = vmatprep.subr.mxu0 0.0
        %427 = vmatpush1.msra.mxu0 0.0
        %428 = vmatprep.subr.mxu0 0.0
        %429 = vmatpush1.msra.mxu0 0.0
        %430 = vmatprep.subr.mxu0 0.0
        %431 = vmatpush1.msra.mxu0 0.0
        %432 = vmatprep.subr.mxu0 0.0
        %433 = vmatpush1.msra.mxu0 0.0
        %434 = vmatprep.subr.mxu0 0.0
        %435 = vmatpush1.msra.mxu0 0.0
        %436 = vmatprep.subr.mxu0 0.0
        %437 = vmatpush1.msra.mxu0 0.0
        %438 = vmatprep.subr.mxu0 0.0
        %439 = vmatpush1.msra.mxu0 0.0
        %440 = vmatprep.subr.mxu0 0.0
        %441 = vmatpush1.msra.mxu0 0.0
        %442 = vmatprep.subr.mxu0 0.0
        %443 = vmatpush1.msra.mxu0 0.0
        %444 = vmatprep.subr.mxu0 0.0
        %445 = vmatpush1.msra.mxu0 0.0
        %446 = vmatprep.subr.mxu0 0.0
        %447 = vmatpush1.msra.mxu0 0.0
        %448 = vmatprep.mubr.f32.mxu0 0.0
        %449 = vmatmul.mubr.f32.gmra.mrb[0].mxu0 %v188
        %v450 = vpop.f32.mrb[0].mxu0
        %v451 = vadd.f32 0.0, %v450
        %v452 = vpop.f32.mrb[0].mxu0
        %453 = vmatprep.mubr.f32.mxu0 0.0
        %454 = vmatmul.mubr.f32.gmra.mrb[0].mxu0 %v191
        %v455 = vpop.f32.mrb[0].mxu0
        %v456 = vadd.f32 0.0, %v455
        %v457 = vpop.f32.mrb[0].mxu0
        %458 = vmatprep.mubr.f32.mxu0 0.0
        %459 = vmatmul.mubr.f32.gmra.mrb[0].mxu0 %v194
        %v460 = vpop.f32.mrb[0].mxu0
        %v461 = vadd.f32 0.0, %v460
        %v462 = vpop.f32.mrb[0].mxu0
        %463 = vmatprep.mubr.f32.mxu0 0.0
        %464 = vmatmul.mubr.f32.gmra.mrb[0].mxu0 %v197
        %v465 = vpop.f32.mrb[0].mxu0
        %v466 = vadd.f32 0.0, %v465
        %v467 = vpop.f32.mrb[0].mxu0
        %468 = vdwg.mxu0
        %s469 = scalar_lea.vmem %s177, 64 [#allocation7]
        %470 = vst [vmem:[%s469] sm:$0xff] %v451
        %471 = vst [vmem:[%s469 + $0x8] sm:$0xff] %v456
        %472 = vst [vmem:[%s469 + $0x10] sm:$0xff] %v461
        %473 = vst [vmem:[%s469 + $0x18] sm:$0xff] %v466
        %s474 = scalar_lea.vmem %s157, 48 [#allocation5]
        %v475 = vld [vmem:[%s474] sm:$0xff]
        %v476 = vld [vmem:[%s474 + $0x8] sm:$0xff]
        %477 = vmatprep.subr.mxu0 0.0
        %478 = vmatpush1.msra.mxu0 %v475
        %479 = vmatprep.subr.mxu0 0.0
        %480 = vmatpush1.msra.mxu0 %v476
        %481 = vmatprep.subr.mxu0 0.0
        %482 = vmatpush1.msra.mxu0 0.0
        %483 = vmatprep.subr.mxu0 0.0
        %484 = vmatpush1.msra.mxu0 0.0
        %485 = vmatprep.subr.mxu0 0.0
        %486 = vmatpush1.msra.mxu0 0.0
        %487 = vmatprep.subr.mxu0 0.0
        %488 = vmatpush1.msra.mxu0 0.0
        %489 = vmatprep.subr.mxu0 0.0
        %490 = vmatpush1.msra.mxu0 0.0
        %491 = vmatprep.subr.mxu0 0.0
        %492 = vmatpush1.msra.mxu0 0.0
        %493 = vmatprep.subr.mxu0 0.0
        %494 = vmatpush1.msra.mxu0 0.0
        %495 = vmatprep.subr.mxu0 0.0
        %496 = vmatpush1.msra.mxu0 0.0
        %497 = vmatprep.subr.mxu0 0.0
        %498 = vmatpush1.msra.mxu0 0.0
        %499 = vmatprep.subr.mxu0 0.0
        %500 = vmatpush1.msra.mxu0 0.0
        %501 = vmatprep.subr.mxu0 0.0
        %502 = vmatpush1.msra.mxu0 0.0
        %503 = vmatprep.subr.mxu0 0.0
        %504 = vmatpush1.msra.mxu0 0.0
        %505 = vmatprep.subr.mxu0 0.0
        %506 = vmatpush1.msra.mxu0 0.0
        %507 = vmatprep.subr.mxu0 0.0
        %508 = vmatpush1.msra.mxu0 0.0
        %509 = vmatprep.subr.mxu0 0.0
        %510 = vmatpush1.msra.mxu0 0.0
        %511 = vmatprep.subr.mxu0 0.0
        %512 = vmatpush1.msra.mxu0 0.0
        %513 = vmatprep.subr.mxu0 0.0
        %514 = vmatpush1.msra.mxu0 0.0
        %515 = vmatprep.subr.mxu0 0.0
        %516 = vmatpush1.msra.mxu0 0.0
        %517 = vmatprep.subr.mxu0 0.0
        %518 = vmatpush1.msra.mxu0 0.0
        %519 = vmatprep.subr.mxu0 0.0
        %520 = vmatpush1.msra.mxu0 0.0
        %521 = vmatprep.subr.mxu0 0.0
        %522 = vmatpush1.msra.mxu0 0.0
        %523 = vmatprep.subr.mxu0 0.0
        %524 = vmatpush1.msra.mxu0 0.0
        %525 = vmatprep.subr.mxu0 0.0
        %526 = vmatpush1.msra.mxu0 0.0
        %527 = vmatprep.subr.mxu0 0.0
        %528 = vmatpush1.msra.mxu0 0.0
        %529 = vmatprep.subr.mxu0 0.0
        %530 = vmatpush1.msra.mxu0 0.0
        %531 = vmatprep.subr.mxu0 0.0
        %532 = vmatpush1.msra.mxu0 0.0
        %533 = vmatprep.subr.mxu0 0.0
        %534 = vmatpush1.msra.mxu0 0.0
        %535 = vmatprep.subr.mxu0 0.0
        %536 = vmatpush1.msra.mxu0 0.0
        %537 = vmatprep.subr.mxu0 0.0
        %538 = vmatpush1.msra.mxu0 0.0
        %539 = vmatprep.subr.mxu0 0.0
        %540 = vmatpush1.msra.mxu0 0.0
        %541 = vmatprep.mubr.f32.mxu0 0.0
        %542 = vmatmul.mubr.f32.gmra.mrb[0].mxu0 %v188
        %v543 = vpop.f32.mrb[0].mxu0
        %v544 = vadd.f32 0.0, %v543
        %v545 = vpop.f32.mrb[0].mxu0
        %546 = vmatprep.mubr.f32.mxu0 0.0
        %547 = vmatmul.mubr.f32.gmra.mrb[0].mxu0 %v191
        %v548 = vpop.f32.mrb[0].mxu0
        %v549 = vadd.f32 0.0, %v548
        %v550 = vpop.f32.mrb[0].mxu0
        %551 = vmatprep.mubr.f32.mxu0 0.0
        %552 = vmatmul.mubr.f32.gmra.mrb[0].mxu0 %v194
        %v553 = vpop.f32.mrb[0].mxu0
        %v554 = vadd.f32 0.0, %v553
        %v555 = vpop.f32.mrb[0].mxu0
        %556 = vmatprep.mubr.f32.mxu0 0.0
        %557 = vmatmul.mubr.f32.gmra.mrb[0].mxu0 %v197
        %v558 = vpop.f32.mrb[0].mxu0
        %v559 = vadd.f32 0.0, %v558
        %v560 = vpop.f32.mrb[0].mxu0
        %561 = vdwg.mxu0
        %s562 = scalar_lea.vmem %s177, 96 [#allocation7]
        %563 = vst [vmem:[%s562] sm:$0xff] %v544
        %564 = vst [vmem:[%s562 + $0x8] sm:$0xff] %v549
        %565 = vst [vmem:[%s562 + $0x10] sm:$0xff] %v554
        %566 = vst [vmem:[%s562 + $0x18] sm:$0xff] %v559
        %s567 = scalar_lea.vmem %s157, 64 [#allocation5]
        %v568 = vld [vmem:[%s567] sm:$0xff]
        %v569 = vld [vmem:[%s567 + $0x8] sm:$0xff]
        %570 = vmatprep.subr.mxu0 0.0
        %571 = vmatpush1.msra.mxu0 %v568
        %572 = vmatprep.subr.mxu0 0.0
        %573 = vmatpush1.msra.mxu0 %v569
        %574 = vmatprep.subr.mxu0 0.0
        %575 = vmatpush1.msra.mxu0 0.0
        %576 = vmatprep.subr.mxu0 0.0
        %577 = vmatpush1.msra.mxu0 0.0
        %578 = vmatprep.subr.mxu0 0.0
        %579 = vmatpush1.msra.mxu0 0.0
        %580 = vmatprep.subr.mxu0 0.0
        %581 = vmatpush1.msra.mxu0 0.0
        %582 = vmatprep.subr.mxu0 0.0
        %583 = vmatpush1.msra.mxu0 0.0
        %584 = vmatprep.subr.mxu0 0.0
        %585 = vmatpush1.msra.mxu0 0.0
        %586 = vmatprep.subr.mxu0 0.0
        %587 = vmatpush1.msra.mxu0 0.0
        %588 = vmatprep.subr.mxu0 0.0
        %589 = vmatpush1.msra.mxu0 0.0
        %590 = vmatprep.subr.mxu0 0.0
        %591 = vmatpush1.msra.mxu0 0.0
        %592 = vmatprep.subr.mxu0 0.0
        %593 = vmatpush1.msra.mxu0 0.0
        %594 = vmatprep.subr.mxu0 0.0
        %595 = vmatpush1.msra.mxu0 0.0
        %596 = vmatprep.subr.mxu0 0.0
        %597 = vmatpush1.msra.mxu0 0.0
        %598 = vmatprep.subr.mxu0 0.0
        %599 = vmatpush1.msra.mxu0 0.0
        %600 = vmatprep.subr.mxu0 0.0
        %601 = vmatpush1.msra.mxu0 0.0
        %602 = vmatprep.subr.mxu0 0.0
        %603 = vmatpush1.msra.mxu0 0.0
        %604 = vmatprep.subr.mxu0 0.0
        %605 = vmatpush1.msra.mxu0 0.0
        %606 = vmatprep.subr.mxu0 0.0
        %607 = vmatpush1.msra.mxu0 0.0
        %608 = vmatprep.subr.mxu0 0.0
        %609 = vmatpush1.msra.mxu0 0.0
        %610 = vmatprep.subr.mxu0 0.0
        %611 = vmatpush1.msra.mxu0 0.0
        %612 = vmatprep.subr.mxu0 0.0
        %613 = vmatpush1.msra.mxu0 0.0
        %614 = vmatprep.subr.mxu0 0.0
        %615 = vmatpush1.msra.mxu0 0.0
        %616 = vmatprep.subr.mxu0 0.0
        %617 = vmatpush1.msra.mxu0 0.0
        %618 = vmatprep.subr.mxu0 0.0
        %619 = vmatpush1.msra.mxu0 0.0
        %620 = vmatprep.subr.mxu0 0.0
        %621 = vmatpush1.msra.mxu0 0.0
        %622 = vmatprep.subr.mxu0 0.0
        %623 = vmatpush1.msra.mxu0 0.0
        %624 = vmatprep.subr.mxu0 0.0
        %625 = vmatpush1.msra.mxu0 0.0
        %626 = vmatprep.subr.mxu0 0.0
        %627 = vmatpush1.msra.mxu0 0.0
        %628 = vmatprep.subr.mxu0 0.0
        %629 = vmatpush1.msra.mxu0 0.0
        %630 = vmatprep.subr.mxu0 0.0
        %631 = vmatpush1.msra.mxu0 0.0
        %632 = vmatprep.subr.mxu0 0.0
        %633 = vmatpush1.msra.mxu0 0.0
        %634 = vmatprep.mubr.f32.mxu0 0.0
        %635 = vmatmul.mubr.f32.gmra.mrb[0].mxu0 %v188
        %v636 = vpop.f32.mrb[0].mxu0
        %v637 = vadd.f32 0.0, %v636
        %v638 = vpop.f32.mrb[0].mxu0
        %639 = vmatprep.mubr.f32.mxu0 0.0
        %640 = vmatmul.mubr.f32.gmra.mrb[0].mxu0 %v191
        %v641 = vpop.f32.mrb[0].mxu0
        %v642 = vadd.f32 0.0, %v641
        %v643 = vpop.f32.mrb[0].mxu0
        %644 = vmatprep.mubr.f32.mxu0 0.0
        %645 = vmatmul.mubr.f32.gmra.mrb[0].mxu0 %v194
        %v646 = vpop.f32.mrb[0].mxu0
        %v647 = vadd.f32 0.0, %v646
        %v648 = vpop.f32.mrb[0].mxu0
        %649 = vmatprep.mubr.f32.mxu0 0.0
        %650 = vmatmul.mubr.f32.gmra.mrb[0].mxu0 %v197
        %v651 = vpop.f32.mrb[0].mxu0
        %v652 = vadd.f32 0.0, %v651
        %v653 = vpop.f32.mrb[0].mxu0
        %654 = vdwg.mxu0
        %s655 = scalar_lea.vmem %s177, 128 [#allocation7]
        %656 = vst [vmem:[%s655] sm:$0xff] %v637
        %657 = vst [vmem:[%s655 + $0x8] sm:$0xff] %v642
        %658 = vst [vmem:[%s655 + $0x10] sm:$0xff] %v647
        %659 = vst [vmem:[%s655 + $0x18] sm:$0xff] %v652
        %s660 = scalar_lea.vmem %s157, 80 [#allocation5]
        %v661 = vld [vmem:[%s660] sm:$0xff]
        %v662 = vld [vmem:[%s660 + $0x8] sm:$0xff]
        %663 = vmatprep.subr.mxu0 0.0
        %664 = vmatpush1.msra.mxu0 %v661
        %665 = vmatprep.subr.mxu0 0.0
        %666 = vmatpush1.msra.mxu0 %v662
        %667 = vmatprep.subr.mxu0 0.0
        %668 = vmatpush1.msra.mxu0 0.0
        %669 = vmatprep.subr.mxu0 0.0
        %670 = vmatpush1.msra.mxu0 0.0
        %671 = vmatprep.subr.mxu0 0.0
        %672 = vmatpush1.msra.mxu0 0.0
        %673 = vmatprep.subr.mxu0 0.0
        %674 = vmatpush1.msra.mxu0 0.0
        %675 = vmatprep.subr.mxu0 0.0
        %676 = vmatpush1.msra.mxu0 0.0
        %677 = vmatprep.subr.mxu0 0.0
        %678 = vmatpush1.msra.mxu0 0.0
        %679 = vmatprep.subr.mxu0 0.0
        %680 = vmatpush1.msra.mxu0 0.0
        %681 = vmatprep.subr.mxu0 0.0
        %682 = vmatpush1.msra.mxu0 0.0
        %683 = vmatprep.subr.mxu0 0.0
        %684 = vmatpush1.msra.mxu0 0.0
        %685 = vmatprep.subr.mxu0 0.0
        %686 = vmatpush1.msra.mxu0 0.0
        %687 = vmatprep.subr.mxu0 0.0
        %688 = vmatpush1.msra.mxu0 0.0
        %689 = vmatprep.subr.mxu0 0.0
        %690 = vmatpush1.msra.mxu0 0.0
        %691 = vmatprep.subr.mxu0 0.0
        %692 = vmatpush1.msra.mxu0 0.0
        %693 = vmatprep.subr.mxu0 0.0
        %694 = vmatpush1.msra.mxu0 0.0
        %695 = vmatprep.subr.mxu0 0.0
        %696 = vmatpush1.msra.mxu0 0.0
        %697 = vmatprep.subr.mxu0 0.0
        %698 = vmatpush1.msra.mxu0 0.0
        %699 = vmatprep.subr.mxu0 0.0
        %700 = vmatpush1.msra.mxu0 0.0
        %701 = vmatprep.subr.mxu0 0.0
        %702 = vmatpush1.msra.mxu0 0.0
        %703 = vmatprep.subr.mxu0 0.0
        %704 = vmatpush1.msra.mxu0 0.0
        %705 = vmatprep.subr.mxu0 0.0
        %706 = vmatpush1.msra.mxu0 0.0
        %707 = vmatprep.subr.mxu0 0.0
        %708 = vmatpush1.msra.mxu0 0.0
        %709 = vmatprep.subr.mxu0 0.0
        %710 = vmatpush1.msra.mxu0 0.0
        %711 = vmatprep.subr.mxu0 0.0
        %712 = vmatpush1.msra.mxu0 0.0
        %713 = vmatprep.subr.mxu0 0.0
        %714 = vmatpush1.msra.mxu0 0.0
        %715 = vmatprep.subr.mxu0 0.0
        %716 = vmatpush1.msra.mxu0 0.0
        %717 = vmatprep.subr.mxu0 0.0
        %718 = vmatpush1.msra.mxu0 0.0
        %719 = vmatprep.subr.mxu0 0.0
        %720 = vmatpush1.msra.mxu0 0.0
        %721 = vmatprep.subr.mxu0 0.0
        %722 = vmatpush1.msra.mxu0 0.0
        %723 = vmatprep.subr.mxu0 0.0
        %724 = vmatpush1.msra.mxu0 0.0
        %725 = vmatprep.subr.mxu0 0.0
        %726 = vmatpush1.msra.mxu0 0.0
        %727 = vmatprep.mubr.f32.mxu0 0.0
        %728 = vmatmul.mubr.f32.gmra.mrb[0].mxu0 %v188
        %v729 = vpop.f32.mrb[0].mxu0
        %v730 = vadd.f32 0.0, %v729
        %v731 = vpop.f32.mrb[0].mxu0
        %732 = vmatprep.mubr.f32.mxu0 0.0
        %733 = vmatmul.mubr.f32.gmra.mrb[0].mxu0 %v191
        %v734 = vpop.f32.mrb[0].mxu0
        %v735 = vadd.f32 0.0, %v734
        %v736 = vpop.f32.mrb[0].mxu0
        %737 = vmatprep.mubr.f32.mxu0 0.0
        %738 = vmatmul.mubr.f32.gmra.mrb[0].mxu0 %v194
        %v739 = vpop.f32.mrb[0].mxu0
        %v740 = vadd.f32 0.0, %v739
        %v741 = vpop.f32.mrb[0].mxu0
        %742 = vmatprep.mubr.f32.mxu0 0.0
        %743 = vmatmul.mubr.f32.gmra.mrb[0].mxu0 %v197
        %v744 = vpop.f32.mrb[0].mxu0
        %v745 = vadd.f32 0.0, %v744
        %v746 = vpop.f32.mrb[0].mxu0
        %747 = vdwg.mxu0
        %s748 = scalar_lea.vmem %s177, 160 [#allocation7]
        %749 = vst [vmem:[%s748] sm:$0xff] %v730
        %750 = vst [vmem:[%s748 + $0x8] sm:$0xff] %v735
        %751 = vst [vmem:[%s748 + $0x10] sm:$0xff] %v740
        %752 = vst [vmem:[%s748 + $0x18] sm:$0xff] %v745
        %s753 = scalar_lea.vmem %s157, 96 [#allocation5]
        %v754 = vld [vmem:[%s753] sm:$0xff]
        %v755 = vld [vmem:[%s753 + $0x8] sm:$0xff]
        %756 = vmatprep.subr.mxu0 0.0
        %757 = vmatpush1.msra.mxu0 %v754
        %758 = vmatprep.subr.mxu0 0.0
        %759 = vmatpush1.msra.mxu0 %v755
        %760 = vmatprep.subr.mxu0 0.0
        %761 = vmatpush1.msra.mxu0 0.0
        %762 = vmatprep.subr.mxu0 0.0
        %763 = vmatpush1.msra.mxu0 0.0
        %764 = vmatprep.subr.mxu0 0.0
        %765 = vmatpush1.msra.mxu0 0.0
        %766 = vmatprep.subr.mxu0 0.0
        %767 = vmatpush1.msra.mxu0 0.0
        %768 = vmatprep.subr.mxu0 0.0
        %769 = vmatpush1.msra.mxu0 0.0
        %770 = vmatprep.subr.mxu0 0.0
        %771 = vmatpush1.msra.mxu0 0.0
        %772 = vmatprep.subr.mxu0 0.0
        %773 = vmatpush1.msra.mxu0 0.0
        %774 = vmatprep.subr.mxu0 0.0
        %775 = vmatpush1.msra.mxu0 0.0
        %776 = vmatprep.subr.mxu0 0.0
        %777 = vmatpush1.msra.mxu0 0.0
        %778 = vmatprep.subr.mxu0 0.0
        %779 = vmatpush1.msra.mxu0 0.0
        %780 = vmatprep.subr.mxu0 0.0
        %781 = vmatpush1.msra.mxu0 0.0
        %782 = vmatprep.subr.mxu0 0.0
        %783 = vmatpush1.msra.mxu0 0.0
        %784 = vmatprep.subr.mxu0 0.0
        %785 = vmatpush1.msra.mxu0 0.0
        %786 = vmatprep.subr.mxu0 0.0
        %787 = vmatpush1.msra.mxu0 0.0
        %788 = vmatprep.subr.mxu0 0.0
        %789 = vmatpush1.msra.mxu0 0.0
        %790 = vmatprep.subr.mxu0 0.0
        %791 = vmatpush1.msra.mxu0 0.0
        %792 = vmatprep.subr.mxu0 0.0
        %793 = vmatpush1.msra.mxu0 0.0
        %794 = vmatprep.subr.mxu0 0.0
        %795 = vmatpush1.msra.mxu0 0.0
        %796 = vmatprep.subr.mxu0 0.0
        %797 = vmatpush1.msra.mxu0 0.0
        %798 = vmatprep.subr.mxu0 0.0
        %799 = vmatpush1.msra.mxu0 0.0
        %800 = vmatprep.subr.mxu0 0.0
        %801 = vmatpush1.msra.mxu0 0.0
        %802 = vmatprep.subr.mxu0 0.0
        %803 = vmatpush1.msra.mxu0 0.0
        %804 = vmatprep.subr.mxu0 0.0
        %805 = vmatpush1.msra.mxu0 0.0
        %806 = vmatprep.subr.mxu0 0.0
        %807 = vmatpush1.msra.mxu0 0.0
        %808 = vmatprep.subr.mxu0 0.0
        %809 = vmatpush1.msra.mxu0 0.0
        %810 = vmatprep.subr.mxu0 0.0
        %811 = vmatpush1.msra.mxu0 0.0
        %812 = vmatprep.subr.mxu0 0.0
        %813 = vmatpush1.msra.mxu0 0.0
        %814 = vmatprep.subr.mxu0 0.0
        %815 = vmatpush1.msra.mxu0 0.0
        %816 = vmatprep.subr.mxu0 0.0
        %817 = vmatpush1.msra.mxu0 0.0
        %818 = vmatprep.subr.mxu0 0.0
        %819 = vmatpush1.msra.mxu0 0.0
        %820 = vmatprep.mubr.f32.mxu0 0.0
        %821 = vmatmul.mubr.f32.gmra.mrb[0].mxu0 %v188
        %v822 = vpop.f32.mrb[0].mxu0
        %v823 = vadd.f32 0.0, %v822
        %v824 = vpop.f32.mrb[0].mxu0
        %825 = vmatprep.mubr.f32.mxu0 0.0
        %826 = vmatmul.mubr.f32.gmra.mrb[0].mxu0 %v191
        %v827 = vpop.f32.mrb[0].mxu0
        %v828 = vadd.f32 0.0, %v827
        %v829 = vpop.f32.mrb[0].mxu0
        %830 = vmatprep.mubr.f32.mxu0 0.0
        %831 = vmatmul.mubr.f32.gmra.mrb[0].mxu0 %v194
        %v832 = vpop.f32.mrb[0].mxu0
        %v833 = vadd.f32 0.0, %v832
        %v834 = vpop.f32.mrb[0].mxu0
        %835 = vmatprep.mubr.f32.mxu0 0.0
        %836 = vmatmul.mubr.f32.gmra.mrb[0].mxu0 %v197
        %v837 = vpop.f32.mrb[0].mxu0
        %v838 = vadd.f32 0.0, %v837
        %v839 = vpop.f32.mrb[0].mxu0
        %840 = vdwg.mxu0
        %s841 = scalar_lea.vmem %s177, 192 [#allocation7]
        %842 = vst [vmem:[%s841] sm:$0xff] %v823
        %843 = vst [vmem:[%s841 + $0x8] sm:$0xff] %v828
        %844 = vst [vmem:[%s841 + $0x10] sm:$0xff] %v833
        %845 = vst [vmem:[%s841 + $0x18] sm:$0xff] %v838
        %s846 = scalar_lea.vmem %s157, 112 [#allocation5]
        %v847 = vld [vmem:[%s846] sm:$0xff]
        %v848 = vld [vmem:[%s846 + $0x8] sm:$0xff]
        %849 = vmatprep.subr.mxu0 0.0
        %850 = vmatpush1.msra.mxu0 %v847
        %851 = vmatprep.subr.mxu0 0.0
        %852 = vmatpush1.msra.mxu0 %v848
        %853 = vmatprep.subr.mxu0 0.0
        %854 = vmatpush1.msra.mxu0 0.0
        %855 = vmatprep.subr.mxu0 0.0
        %856 = vmatpush1.msra.mxu0 0.0
        %857 = vmatprep.subr.mxu0 0.0
        %858 = vmatpush1.msra.mxu0 0.0
        %859 = vmatprep.subr.mxu0 0.0
        %860 = vmatpush1.msra.mxu0 0.0
        %861 = vmatprep.subr.mxu0 0.0
        %862 = vmatpush1.msra.mxu0 0.0
        %863 = vmatprep.subr.mxu0 0.0
        %864 = vmatpush1.msra.mxu0 0.0
        %865 = vmatprep.subr.mxu0 0.0
        %866 = vmatpush1.msra.mxu0 0.0
        %867 = vmatprep.subr.mxu0 0.0
        %868 = vmatpush1.msra.mxu0 0.0
        %869 = vmatprep.subr.mxu0 0.0
        %870 = vmatpush1.msra.mxu0 0.0
        %871 = vmatprep.subr.mxu0 0.0
        %872 = vmatpush1.msra.mxu0 0.0
        %873 = vmatprep.subr.mxu0 0.0
        %874 = vmatpush1.msra.mxu0 0.0
        %875 = vmatprep.subr.mxu0 0.0
        %876 = vmatpush1.msra.mxu0 0.0
        %877 = vmatprep.subr.mxu0 0.0
        %878 = vmatpush1.msra.mxu0 0.0
        %879 = vmatprep.subr.mxu0 0.0
        %880 = vmatpush1.msra.mxu0 0.0
        %881 = vmatprep.subr.mxu0 0.0
        %882 = vmatpush1.msra.mxu0 0.0
        %883 = vmatprep.subr.mxu0 0.0
        %884 = vmatpush1.msra.mxu0 0.0
        %885 = vmatprep.subr.mxu0 0.0
        %886 = vmatpush1.msra.mxu0 0.0
        %887 = vmatprep.subr.mxu0 0.0
        %888 = vmatpush1.msra.mxu0 0.0
        %889 = vmatprep.subr.mxu0 0.0
        %890 = vmatpush1.msra.mxu0 0.0
        %891 = vmatprep.subr.mxu0 0.0
        %892 = vmatpush1.msra.mxu0 0.0
        %893 = vmatprep.subr.mxu0 0.0
        %894 = vmatpush1.msra.mxu0 0.0
        %895 = vmatprep.subr.mxu0 0.0
        %896 = vmatpush1.msra.mxu0 0.0
        %897 = vmatprep.subr.mxu0 0.0
        %898 = vmatpush1.msra.mxu0 0.0
        %899 = vmatprep.subr.mxu0 0.0
        %900 = vmatpush1.msra.mxu0 0.0
        %901 = vmatprep.subr.mxu0 0.0
        %902 = vmatpush1.msra.mxu0 0.0
        %903 = vmatprep.subr.mxu0 0.0
        %904 = vmatpush1.msra.mxu0 0.0
        %905 = vmatprep.subr.mxu0 0.0
        %906 = vmatpush1.msra.mxu0 0.0
        %907 = vmatprep.subr.mxu0 0.0
        %908 = vmatpush1.msra.mxu0 0.0
        %909 = vmatprep.subr.mxu0 0.0
        %910 = vmatpush1.msra.mxu0 0.0
        %911 = vmatprep.subr.mxu0 0.0
        %912 = vmatpush1.msra.mxu0 0.0
        %913 = vmatprep.mubr.f32.mxu0 0.0
        %914 = vmatmul.mubr.f32.gmra.mrb[0].mxu0 %v188
        %v915 = vpop.f32.mrb[0].mxu0
        %v916 = vadd.f32 0.0, %v915
        %v917 = vpop.f32.mrb[0].mxu0
        %918 = vmatprep.mubr.f32.mxu0 0.0
        %919 = vmatmul.mubr.f32.gmra.mrb[0].mxu0 %v191
        %v920 = vpop.f32.mrb[0].mxu0
        %v921 = vadd.f32 0.0, %v920
        %v922 = vpop.f32.mrb[0].mxu0
        %923 = vmatprep.mubr.f32.mxu0 0.0
        %924 = vmatmul.mubr.f32.gmra.mrb[0].mxu0 %v194
        %v925 = vpop.f32.mrb[0].mxu0
        %v926 = vadd.f32 0.0, %v925
        %v927 = vpop.f32.mrb[0].mxu0
        %928 = vmatprep.mubr.f32.mxu0 0.0
        %929 = vmatmul.mubr.f32.gmra.mrb[0].mxu0 %v197
        %v930 = vpop.f32.mrb[0].mxu0
        %v931 = vadd.f32 0.0, %v930
        %v932 = vpop.f32.mrb[0].mxu0
        %933 = vdwg.mxu0
        %s934 = scalar_lea.vmem %s177, 224 [#allocation7]
        %935 = vst [vmem:[%s934] sm:$0xff] %v916
        %936 = vst [vmem:[%s934 + $0x8] sm:$0xff] %v921
        %937 = vst [vmem:[%s934 + $0x10] sm:$0xff] %v926
        %938 = vst [vmem:[%s934 + $0x18] sm:$0xff] %v931
        %s939 = sand.u32 %s75, 1
        %s940 = scalar_lea.sflag [#allocation4], %s939
        %s941 = sand.u32 %s75, 1
        %s942 = smul.addr %s941, 256
        %s943 = scalar_lea.vmem [#allocation7], %s942
        // Predicated region
        $region37: #{classifier_forward.9} parent=27 // pred_check
          %p944 = pneg %p85
        $region38: #{classifier_forward.9} parent=27 // pred_check_branch
          %946 = sbr.rel (%p944) target = $region40
        $region39: #{classifier_forward.9} parent=27 // pred_region
          %s947 = smul.u32 8, %s20
          %s949 = ssub.s32 4096, 4096
          %950 = vsyncadd %s940, %s949
          %s951 = smul.addr %s947, 4
          %s952 = smul.addr %s951, 128
          %s953 = scalar_lea.hbm %s2, %s952
          %s954 = sshll.u32 %s943, 4
          %s955 = int_to_ptr.vmem [resolvable:$true] %s954
          %960 = dma.vmem_to_hbm [thread:$0]  %s955, 4096, %s953, %s940, 128, 128, 8
        $region40: #{classifier_forward.9} parent=27 // pred_fallthru
          _
      $region28: #{classifier_forward.9} parent=5 // pred_fallthru
        _
      %p961 = scmp.le.s32.totalorder 2, %s15
      // Predicated region
      $region41: #{classifier_forward.9} parent=5 // pred_check
        %p962 = pneg %p961
      $region42: #{classifier_forward.9} parent=5 // pred_check_branch
        %964 = sbr.rel (%p962) target = $region44
      $region43: #{classifier_forward.9} parent=5 // pred_region
        %s965 = ssub.s32 %s15, 2
        // Predicated region
        $region45: #{classifier_forward.9} parent=43 // pred_check
          %p966 = pneg %p91
        $region46: #{classifier_forward.9} parent=43 // pred_check_branch
          %968 = sbr.rel (%p966) target = $region48
        $region47: #{classifier_forward.9} parent=43 // pred_region
          %s969 = sand.u32 %s76, 1
          %s970 = scalar_lea.sflag [#allocation4], %s969
          %s971 = sand.u32 %s76, 1
          %s972 = smul.addr %s971, 256
          %s973 = scalar_lea.vmem [#allocation7], %s972
          %974 = dma.done %s970, 4096
        $region48: #{classifier_forward.9} parent=43 // pred_fallthru
          _
      $region44: #{classifier_forward.9} parent=5 // pred_fallthru
        _
    $region6: #{classifier_forward.9} parent=1 // loop_footer
      %s19 = sadd.s32 1, %s15
    $region7: #{classifier_forward.9} parent=1 // loop_footer_branch
      %14 = sbr.rel target = $region3
    $region8: #{classifier_forward.9} parent=1 // loop_exit
      _
    %975 = vsyncpa [#allocation3], 1
    %s976 = scalar_lea.sflag [#allocation3], 1
    %977 = vsyncpa %s976, 1
    %978 = vsyncpa [#allocation6], 1
    %s979 = scalar_lea.sflag [#allocation6], 1
    %980 = vsyncpa %s979, 1
    %981 = vsyncpa [#allocation4], 1
    %s982 = scalar_lea.sflag [#allocation4], 1
    %983 = vsyncpa %s982, 1

// kernel: classifier_forward.8
$region0: #{classifier_forward.8}
  #allocation0 [shape = 'u32[]', space=smem, size = 0x4, offset = 0x4, fixed_abs, tag = 'smem constant byte address 0x4 - core index']
  #allocation1 [shape = 'u32[144,128]{1,0:T(1,128)}', space=vmem, size = 0x12000, scoped, tag = 'internal scratch']
  %s0 = inlined_call_operand.hbm [shape: f32[32,16], index: 0, kind: input, shape index: {}]
  %s1 = inlined_call_operand.hbm [shape: f32[2,16,2048], index: 1, kind: input, shape index: {}]
  %s2 = inlined_call_operand.hbm [shape: f32[2,32,2048], index: 2, kind: output, shape index: {}]
  %s3 = sld [smem:[#allocation0]]
  $region49: #{classifier_forward.8} parent=0
    _
  %s5 = ssub.s32 1, %s3
  %s6 = scalar_select 0, %s5, %s3
  $region1: #{classifier_forward.8} parent=0
    #allocation2 [shape = 'u8[16384]{0}', space=vmem, size = 0x4000, scoped, tag = 'input window, operand 0, single buffered']
    #allocation3 [shape = 's32[2]{0}', space=sflag, size = 0x8, scoped, tag = 'scoped memory for classifier_forward.8']
    #allocation4 [shape = 's32[2]{0}', space=sflag, size = 0x8, scoped, tag = 'scoped memory for classifier_forward.8']
    #allocation5 [shape = 'u8[262144]{0}', space=vmem, size = 0x40000, scoped, tag = 'input window, operand 1']
    #allocation6 [shape = 's32[2]{0}', space=sflag, size = 0x8, scoped, tag = 'scoped memory for classifier_forward.8']
    #allocation7 [shape = 'u8[524288]{0}', space=vmem, size = 0x80000, scoped, tag = 'output window, operand 0']
    %7 = vsyncpa [#allocation3], 0
    %8 = vsyncpa [#allocation6], 0
    %s9 = scalar_lea.sflag [#allocation6], 1
    %10 = vsyncpa %s9, 0
    %11 = vsyncpa [#allocation4], 0
    %s12 = scalar_lea.sflag [#allocation4], 1
    %13 = vsyncpa %s12, 0
    loop: start=0, step=1, limit=4
    $region2: #{classifier_forward.8} parent=1 // loop_pre_header
      _
    $region3: #{classifier_forward.8} parent=1 // loop_header
      %s15 = sphi 0, %s19
      %p16 = scmp.ge.s32.totalorder %s15, 4
      %s22 = sphi 0, %s41
      %s23 = sphi 0, %s37
      %s24 = sphi 0, %s33
      %s25 = sphi 0, %s22
      %s26 = sphi 0, %s23
      %s27 = sphi 0, %s24
      %s28 = sphi 0, %s25
      %s29 = sphi 0, %s26
      %s30 = sphi 0, %s27
      %s44 = sphi 0, %s46
      %s47 = sphi 0, %s44
      %s48 = sphi 0, %s47
      %s64 = sphi 0, %s48
      %s72 = sphi 0, %s74
      %s75 = sphi 0, %s72
      %s76 = sphi 0, %s75
      %s92 = sphi 0, %s76
      %s102 = sphi 0, %s104
      %s105 = sphi 0, %s102
      %s106 = sphi 0, %s105
      %s122 = sphi 0, %s106
    $region4: #{classifier_forward.8} parent=1 // loop_header_branch
      %18 = sbr.rel (%p16) target = $region8
    $region5: #{classifier_forward.8} parent=1 // loop_body
      %s20 = ssub.s32 %s15, 1
      %s21 = ssub.s32 %s15, 2
      %s31 = sadd.s32 1, %s24
      %p32 = scmp.ge.s32.totalorder %s31, 1
      %s33 = scalar_select %p32, 0, %s31
      %s34 = sadd.s32 1, %s23
      %s35 = scalar_select %p32, %s34, %s23
      %p36 = scmp.ge.s32.totalorder %s35, 1
      %s37 = scalar_select %p36, 0, %s35
      %s38 = sadd.s32 1, %s22
      %s39 = scalar_select %p36, %s38, %s22
      %p40 = scmp.ge.s32.totalorder %s39, 2
      %s41 = scalar_select %p40, 0, %s39
      %s42 = ssub.s32 %s23, %s37
      %p43 = scmp.eq.s32.totalorder %s42, 0
      %s45 = sadd.s32 %s44, 1
      %s46 = scalar_select %p43, %s44, %s45
      %p49 = pneg %p43
      %p50 = scmp.eq.s32.totalorder %s15, 1
      %p51 = por %p49, %p50
      %p52 = scmp.ne.s32.totalorder %s44, %s47
      %p53 = scmp.eq.s32.totalorder %s15, 0
      %p54 = por %p52, %p53
      %p55 = scmp.ne.s32.totalorder %s44, %s47
      %p56 = scmp.eq.s32.totalorder %s20, 1
      %p57 = por %p55, %p56
      %p58 = scmp.ne.s32.totalorder %s47, %s48
      %p59 = scmp.eq.s32.totalorder %s20, 0
      %p60 = por %p58, %p59
      %p61 = scmp.ne.s32.totalorder %s47, %s48
      %p62 = scmp.eq.s32.totalorder %s21, 1
      %p63 = por %p61, %p62
      %p65 = scmp.ne.s32.totalorder %s48, %s64
      %p66 = scmp.eq.s32.totalorder %s21, 0
      %p67 = por %p65, %p66
      %s68 = ssub.s32 %s22, %s41
      %s69 = ssub.s32 %s24, %s33
      %s70 = sor.u32 %s68, %s69
      %p71 = scmp.eq.s32.totalorder %s70, 0
      %s73 = sadd.s32 %s72, 1
      %s74 = scalar_select %p71, %s72, %s73
      %p77 = pneg %p71
      %p78 = scmp.eq.s32.totalorder %s15, 1
      %p79 = por %p77, %p78
      %p80 = scmp.ne.s32.totalorder %s72, %s75
      %p81 = scmp.eq.s32.totalorder %s15, 0
      %p82 = por %p80, %p81
      %p83 = scmp.ne.s32.totalorder %s72, %s75
      %p84 = scmp.eq.s32.totalorder %s20, 1
      %p85 = por %p83, %p84
      %p86 = scmp.ne.s32.totalorder %s75, %s76
      %p87 = scmp.eq.s32.totalorder %s20, 0
      %p88 = por %p86, %p87
      %p89 = scmp.ne.s32.totalorder %s75, %s76
      %p90 = scmp.eq.s32.totalorder %s21, 1
      %p91 = por %p89, %p90
      %p93 = scmp.ne.s32.totalorder %s76, %s92
      %p94 = scmp.eq.s32.totalorder %s21, 0
      %p95 = por %p93, %p94
      %s96 = ssub.s32 %s22, %s41
      %s97 = ssub.s32 %s23, %s37
      %s98 = sor.u32 %s96, %s97
      %s99 = ssub.s32 %s24, %s33
      %s100 = sor.u32 %s98, %s99
      %p101 = scmp.eq.s32.totalorder %s100, 0
      %s103 = sadd.s32 %s102, 1
      %s104 = scalar_select %p101, %s102, %s103
      %p107 = pneg %p101
      %p108 = scmp.eq.s32.totalorder %s15, 1
      %p109 = por %p107, %p108
      %p110 = scmp.ne.s32.totalorder %s102, %s105
      %p111 = scmp.eq.s32.totalorder %s15, 0
      %p112 = por %p110, %p111
      %p113 = scmp.ne.s32.totalorder %s102, %s105
      %p114 = scmp.eq.s32.totalorder %s20, 1
      %p115 = por %p113, %p114
      %p116 = scmp.ne.s32.totalorder %s105, %s106
      %p117 = scmp.eq.s32.totalorder %s20, 0
      %p118 = por %p116, %p117
      %p119 = scmp.ne.s32.totalorder %s105, %s106
      %p120 = scmp.eq.s32.totalorder %s21, 1
      %p121 = por %p119, %p120
      %p123 = scmp.ne.s32.totalorder %s106, %s122
      %p124 = scmp.eq.s32.totalorder %s21, 0
      %p125 = por %p123, %p124
      %p126 = scmp.le.s32.totalorder 1, %s15
      %p127 = scmp.lt.s32.totalorder %s15, 3
      %p128 = pnand %p126, %p127
      %p129 = pneg %p128
      // Predicated region
      $region9: #{classifier_forward.8} parent=5 // pred_check
        _
      $region10: #{classifier_forward.8} parent=5 // pred_check_branch
        %131 = sbr.rel (%p128) target = $region12
      $region11: #{classifier_forward.8} parent=5 // pred_region
        %s132 = ssub.s32 %s15, 1
        // Predicated region
        $region13: #{classifier_forward.8} parent=11 // pred_check
          %p133 = pneg %p60
        $region14: #{classifier_forward.8} parent=11 // pred_check_branch
          %135 = sbr.rel (%p133) target = $region16
        $region15: #{classifier_forward.8} parent=11 // pred_region
          %s136 = smul.u32 4, %s26
          %s138 = ssub.s32 512, 512
          %139 = vsyncadd [#allocation3], %s138
          %s140 = smul.addr %s136, 128
          %s141 = scalar_lea.hbm %s0, %s140
          %s142 = sshll.u32 [#allocation2], 4
          %s143 = int_to_ptr.vmem [resolvable:$true] %s142
          %148 = dma.hbm_to_vmem [thread:$0]  %s141, 512, %s143, [#allocation3], 128, 128, 8
        $region16: #{classifier_forward.8} parent=11 // pred_fallthru
          _
      $region12: #{classifier_forward.8} parent=5 // pred_fallthru
        _
      %p149 = scmp.lt.s32.totalorder %s15, 2
      // Predicated region
      $region17: #{classifier_forward.8} parent=5 // pred_check
        %p150 = pneg %p149
      $region18: #{classifier_forward.8} parent=5 // pred_check_branch
        %152 = sbr.rel (%p150) target = $region20
      $region19: #{classifier_forward.8} parent=5 // pred_region
        // Predicated region
        $region21: #{classifier_forward.8} parent=19 // pred_check
          %p153 = pneg %p82
        $region22: #{classifier_forward.8} parent=19 // pred_check_branch
          %155 = sbr.rel (%p153) target = $region24
        $region23: #{classifier_forward.8} parent=19 // pred_region
          %s156 = sand.u32 %s72, 1
          %s157 = scalar_lea.sflag [#allocation6], %s156
          %s158 = sand.u32 %s72, 1
          %s159 = smul.addr %s158, 256
          %s160 = scalar_lea.vmem [#allocation5], %s159
          %s161 = smul.u32 16, %s24
          %s163 = ssub.s32 4096, 4096
          %164 = vsyncadd %s157, %s163
          %s165 = smul.addr %s22, 32
          %s166 = sadd.s32 %s161, %s165
          %s167 = smul.addr %s166, 128
          %s168 = scalar_lea.hbm %s1, %s167
          %s169 = sshll.u32 %s160, 4
          %s170 = int_to_ptr.vmem [resolvable:$true] %s169
          %175 = dma.hbm_to_vmem [thread:$0]  %s168, 4096, %s170, %s157, 2048, 2048, 128
        $region24: #{classifier_forward.8} parent=19 // pred_fallthru
          _
      $region20: #{classifier_forward.8} parent=5 // pred_fallthru
        _
      %p176 = scmp.le.s32.totalorder 1, %s15
      %p177 = scmp.lt.s32.totalorder %s15, 3
      %p178 = pnand %p176, %p177
      %p179 = pneg %p178
      // Predicated region
      $region25: #{classifier_forward.8} parent=5 // pred_check
        _
      $region26: #{classifier_forward.8} parent=5 // pred_check_branch
        %181 = sbr.rel (%p178) target = $region28
      $region27: #{classifier_forward.8} parent=5 // pred_region
        %s182 = ssub.s32 %s15, 1
        // Predicated region
        $region29: #{classifier_forward.8} parent=27 // pred_check
          %p183 = pneg %p60
        $region30: #{classifier_forward.8} parent=27 // pred_check_branch
          %185 = sbr.rel (%p183) target = $region32
        $region31: #{classifier_forward.8} parent=27 // pred_region
          %186 = dma.done [#allocation3], 512
        $region32: #{classifier_forward.8} parent=27 // pred_fallthru
          _
        %s187 = sand.u32 %s75, 1
        %s188 = scalar_lea.sflag [#allocation6], %s187
        %s189 = sand.u32 %s75, 1
        %s190 = smul.addr %s189, 256
        %s191 = scalar_lea.vmem [#allocation5], %s190
        // Predicated region
        $region33: #{classifier_forward.8} parent=27 // pred_check
          %p192 = pneg %p88
        $region34: #{classifier_forward.8} parent=27 // pred_check_branch
          %194 = sbr.rel (%p192) target = $region36
        $region35: #{classifier_forward.8} parent=27 // pred_region
          %195 = dma.done %s188, 4096
        $region36: #{classifier_forward.8} parent=27 // pred_fallthru
          _
        %p196 = pneg %p60
        %p197 = pneg %p57
        %s198 = sand.u32 %s75, 1
        %s199 = scalar_lea.sflag [#allocation6], %s198
        %s200 = sand.u32 %s75, 1
        %s201 = smul.addr %s200, 256
        %s202 = scalar_lea.vmem [#allocation5], %s201
        %p203 = pneg %p88
        %p204 = pneg %p85
        %p205 = pneg %p118
        %p206 = pneg %p115
        %s207 = sand.u32 %s105, 1
        %s208 = scalar_lea.sflag [#allocation4], %s207
        %s209 = sand.u32 %s105, 1
        %s210 = smul.addr %s209, 512
        %s211 = scalar_lea.vmem [#allocation7], %s210
        %s212 = smul.u32 4, %s26
        %s213 = smul.u32 16, %s27
        %s214 = smul.u32 4, %s26
        %s215 = smul.u32 16, %s27
        %v216 = vld [vmem:[#allocation2] sm:$0xff]
        %v217 = vld [vmem:[#allocation2 + $0x8] sm:$0xff]
        %v218 = vld [vmem:[#allocation2 + $0x10] sm:$0xff]
        %v219 = vld [vmem:[#allocation2 + $0x18] sm:$0xff]
        %v220 = vld [vmem:[%s191] sm:$0xff]
        %v221 = vld [vmem:[%s191 + $0x8] sm:$0xff]
        %v222 = vld [vmem:[%s191 + $0x10] sm:$0xff]
        %v223 = vld [vmem:[%s191 + $0x18] sm:$0xff]
        %v224 = vld [vmem:[%s191 + $0x20] sm:$0xff]
        %v225 = vld [vmem:[%s191 + $0x28] sm:$0xff]
        %v226 = vld [vmem:[%s191 + $0x30] sm:$0xff]
        %v227 = vld [vmem:[%s191 + $0x38] sm:$0xff]
        %v228 = vld [vmem:[%s191 + $0x40] sm:$0xff]
        %v229 = vld [vmem:[%s191 + $0x48] sm:$0xff]
        %v230 = vld [vmem:[%s191 + $0x50] sm:$0xff]
        %v231 = vld [vmem:[%s191 + $0x58] sm:$0xff]
        %v232 = vld [vmem:[%s191 + $0x60] sm:$0xff]
        %v233 = vld [vmem:[%s191 + $0x68] sm:$0xff]
        %v234 = vld [vmem:[%s191 + $0x70] sm:$0xff]
        %v235 = vld [vmem:[%s191 + $0x78] sm:$0xff]
        %v236 = vld [vmem:[%s191 + $0x80] sm:$0xff]
        %v237 = vld [vmem:[%s191 + $0x88] sm:$0xff]
        %v238 = vld [vmem:[%s191 + $0x90] sm:$0xff]
        %v239 = vld [vmem:[%s191 + $0x98] sm:$0xff]
        %v240 = vld [vmem:[%s191 + $0xa0] sm:$0xff]
        %v241 = vld [vmem:[%s191 + $0xa8] sm:$0xff]
        %v242 = vld [vmem:[%s191 + $0xb0] sm:$0xff]
        %v243 = vld [vmem:[%s191 + $0xb8] sm:$0xff]
        %v244 = vld [vmem:[%s191 + $0xc0] sm:$0xff]
        %v245 = vld [vmem:[%s191 + $0xc8] sm:$0xff]
        %v246 = vld [vmem:[%s191 + $0xd0] sm:$0xff]
        %v247 = vld [vmem:[%s191 + $0xd8] sm:$0xff]
        %v248 = vld [vmem:[%s191 + $0xe0] sm:$0xff]
        %v249 = vld [vmem:[%s191 + $0xe8] sm:$0xff]
        %v250 = vld [vmem:[%s191 + $0xf0] sm:$0xff]
        %v251 = vld [vmem:[%s191 + $0xf8] sm:$0xff]
        %vm252 = vcmask 130048
        %v254 = vsel %vm252, %v216, 0
        %v257 = vsel %vm252, %v217, 0
        %v260 = vsel %vm252, %v218, 0
        %v263 = vsel %vm252, %v219, 0
        %265 = vmatprep.subr.mxu0 %v221
        %266 = vmatpush1.msra.mxu0 %v220
        %267 = vmatprep.subr.mxu0 %v237
        %268 = vmatpush1.msra.mxu0 %v236
        %269 = vmatprep.subr.mxu0 0.0
        %270 = vmatpush1.msra.mxu0 0.0
        %271 = vmatprep.subr.mxu0 0.0
        %272 = vmatpush1.msra.mxu0 0.0
        %273 = vmatprep.subr.mxu0 0.0
        %274 = vmatpush1.msra.mxu0 0.0
        %275 = vmatprep.subr.mxu0 0.0
        %276 = vmatpush1.msra.mxu0 0.0
        %277 = vmatprep.subr.mxu0 0.0
        %278 = vmatpush1.msra.mxu0 0.0
        %279 = vmatprep.subr.mxu0 0.0
        %280 = vmatpush1.msra.mxu0 0.0
        %281 = vmatprep.subr.mxu0 0.0
        %282 = vmatpush1.msra.mxu0 0.0
        %283 = vmatprep.subr.mxu0 0.0
        %284 = vmatpush1.msra.mxu0 0.0
        %285 = vmatprep.subr.mxu0 0.0
        %286 = vmatpush1.msra.mxu0 0.0
        %287 = vmatprep.subr.mxu0 0.0
        %288 = vmatpush1.msra.mxu0 0.0
        %289 = vmatprep.subr.mxu0 0.0
        %290 = vmatpush1.msra.mxu0 0.0
        %291 = vmatprep.subr.mxu0 0.0
        %292 = vmatpush1.msra.mxu0 0.0
        %293 = vmatprep.subr.mxu0 0.0
        %294 = vmatpush1.msra.mxu0 0.0
        %295 = vmatprep.subr.mxu0 0.0
        %296 = vmatpush1.msra.mxu0 0.0
        %297 = vmatprep.subr.mxu0 0.0
        %298 = vmatpush1.msra.mxu0 0.0
        %299 = vmatprep.subr.mxu0 0.0
        %300 = vmatpush1.msra.mxu0 0.0
        %301 = vmatprep.subr.mxu0 0.0
        %302 = vmatpush1.msra.mxu0 0.0
        %303 = vmatprep.subr.mxu0 0.0
        %304 = vmatpush1.msra.mxu0 0.0
        %305 = vmatprep.subr.mxu0 0.0
        %306 = vmatpush1.msra.mxu0 0.0
        %307 = vmatprep.subr.mxu0 0.0
        %308 = vmatpush1.msra.mxu0 0.0
        %309 = vmatprep.subr.mxu0 0.0
        %310 = vmatpush1.msra.mxu0 0.0
        %311 = vmatprep.subr.mxu0 0.0
        %312 = vmatpush1.msra.mxu0 0.0
        %313 = vmatprep.subr.mxu0 0.0
        %314 = vmatpush1.msra.mxu0 0.0
        %315 = vmatprep.subr.mxu0 0.0
        %316 = vmatpush1.msra.mxu0 0.0
        %317 = vmatprep.subr.mxu0 0.0
        %318 = vmatpush1.msra.mxu0 0.0
        %319 = vmatprep.subr.mxu0 0.0
        %320 = vmatpush1.msra.mxu0 0.0
        %321 = vmatprep.subr.mxu0 0.0
        %322 = vmatpush1.msra.mxu0 0.0
        %323 = vmatprep.subr.mxu0 0.0
        %324 = vmatpush1.msra.mxu0 0.0
        %325 = vmatprep.subr.mxu0 0.0
        %326 = vmatpush1.msra.mxu0 0.0
        %327 = vmatprep.subr.mxu0 0.0
        %328 = vmatpush1.msra.mxu0 0.0
        %329 = vmatprep.mubr.f32.mxu0 0.0
        %330 = vmatmul.mubr.f32.gmra.mrb[0].mxu0 %v254
        %v331 = vpop.f32.mrb[0].mxu0
        %v332 = vadd.f32 0.0, %v331
        %v333 = vpop.f32.mrb[0].mxu0
        %v334 = vadd.f32 0.0, %v333
        %335 = vmatprep.mubr.f32.mxu0 0.0
        %336 = vmatmul.mubr.f32.gmra.mrb[0].mxu0 %v257
        %v337 = vpop.f32.mrb[0].mxu0
        %v338 = vadd.f32 0.0, %v337
        %v339 = vpop.f32.mrb[0].mxu0
        %v340 = vadd.f32 0.0, %v339
        %341 = vmatprep.mubr.f32.mxu0 0.0
        %342 = vmatmul.mubr.f32.gmra.mrb[0].mxu0 %v260
        %v343 = vpop.f32.mrb[0].mxu0
        %v344 = vadd.f32 0.0, %v343
        %v345 = vpop.f32.mrb[0].mxu0
        %v346 = vadd.f32 0.0, %v345
        %347 = vmatprep.mubr.f32.mxu0 0.0
        %348 = vmatmul.mubr.f32.gmra.mrb[0].mxu0 %v263
        %v349 = vpop.f32.mrb[0].mxu0
        %v350 = vadd.f32 0.0, %v349
        %v351 = vpop.f32.mrb[0].mxu0
        %v352 = vadd.f32 0.0, %v351
        %353 = vdwg.mxu0
        %354 = vmatprep.subr.mxu0 %v223
        %355 = vmatpush1.msra.mxu0 %v222
        %356 = vmatprep.subr.mxu0 %v239
        %357 = vmatpush1.msra.mxu0 %v238
        %358 = vmatprep.subr.mxu0 0.0
        %359 = vmatpush1.msra.mxu0 0.0
        %360 = vmatprep.subr.mxu0 0.0
        %361 = vmatpush1.msra.mxu0 0.0
        %362 = vmatprep.subr.mxu0 0.0
        %363 = vmatpush1.msra.mxu0 0.0
        %364 = vmatprep.subr.mxu0 0.0
        %365 = vmatpush1.msra.mxu0 0.0
        %366 = vmatprep.subr.mxu0 0.0
        %367 = vmatpush1.msra.mxu0 0.0
        %368 = vmatprep.subr.mxu0 0.0
        %369 = vmatpush1.msra.mxu0 0.0
        %370 = vmatprep.subr.mxu0 0.0
        %371 = vmatpush1.msra.mxu0 0.0
        %372 = vmatprep.subr.mxu0 0.0
        %373 = vmatpush1.msra.mxu0 0.0
        %374 = vmatprep.subr.mxu0 0.0
        %375 = vmatpush1.msra.mxu0 0.0
        %376 = vmatprep.subr.mxu0 0.0
        %377 = vmatpush1.msra.mxu0 0.0
        %378 = vmatprep.subr.mxu0 0.0
        %379 = vmatpush1.msra.mxu0 0.0
        %380 = vmatprep.subr.mxu0 0.0
        %381 = vmatpush1.msra.mxu0 0.0
        %382 = vmatprep.subr.mxu0 0.0
        %383 = vmatpush1.msra.mxu0 0.0
        %384 = vmatprep.subr.mxu0 0.0
        %385 = vmatpush1.msra.mxu0 0.0
        %386 = vmatprep.subr.mxu0 0.0
        %387 = vmatpush1.msra.mxu0 0.0
        %388 = vmatprep.subr.mxu0 0.0
        %389 = vmatpush1.msra.mxu0 0.0
        %390 = vmatprep.subr.mxu0 0.0
        %391 = vmatpush1.msra.mxu0 0.0
        %392 = vmatprep.subr.mxu0 0.0
        %393 = vmatpush1.msra.mxu0 0.0
        %394 = vmatprep.subr.mxu0 0.0
        %395 = vmatpush1.msra.mxu0 0.0
        %396 = vmatprep.subr.mxu0 0.0
        %397 = vmatpush1.msra.mxu0 0.0
        %398 = vmatprep.subr.mxu0 0.0
        %399 = vmatpush1.msra.mxu0 0.0
        %400 = vmatprep.subr.mxu0 0.0
        %401 = vmatpush1.msra.mxu0 0.0
        %402 = vmatprep.subr.mxu0 0.0
        %403 = vmatpush1.msra.mxu0 0.0
        %404 = vmatprep.subr.mxu0 0.0
        %405 = vmatpush1.msra.mxu0 0.0
        %406 = vmatprep.subr.mxu0 0.0
        %407 = vmatpush1.msra.mxu0 0.0
        %408 = vmatprep.subr.mxu0 0.0
        %409 = vmatpush1.msra.mxu0 0.0
        %410 = vmatprep.subr.mxu0 0.0
        %411 = vmatpush1.msra.mxu0 0.0
        %412 = vmatprep.subr.mxu0 0.0
        %413 = vmatpush1.msra.mxu0 0.0
        %414 = vmatprep.subr.mxu0 0.0
        %415 = vmatpush1.msra.mxu0 0.0
        %416 = vmatprep.subr.mxu0 0.0
        %417 = vmatpush1.msra.mxu0 0.0
        %418 = vmatprep.mubr.f32.mxu0 0.0
        %419 = vmatmul.mubr.f32.gmra.mrb[0].mxu0 %v254
        %v420 = vpop.f32.mrb[0].mxu0
        %v421 = vadd.f32 0.0, %v420
        %v422 = vpop.f32.mrb[0].mxu0
        %v423 = vadd.f32 0.0, %v422
        %424 = vmatprep.mubr.f32.mxu0 0.0
        %425 = vmatmul.mubr.f32.gmra.mrb[0].mxu0 %v257
        %v426 = vpop.f32.mrb[0].mxu0
        %v427 = vadd.f32 0.0, %v426
        %v428 = vpop.f32.mrb[0].mxu0
        %v429 = vadd.f32 0.0, %v428
        %430 = vmatprep.mubr.f32.mxu0 0.0
        %431 = vmatmul.mubr.f32.gmra.mrb[0].mxu0 %v260
        %v432 = vpop.f32.mrb[0].mxu0
        %v433 = vadd.f32 0.0, %v432
        %v434 = vpop.f32.mrb[0].mxu0
        %v435 = vadd.f32 0.0, %v434
        %436 = vmatprep.mubr.f32.mxu0 0.0
        %437 = vmatmul.mubr.f32.gmra.mrb[0].mxu0 %v263
        %v438 = vpop.f32.mrb[0].mxu0
        %v439 = vadd.f32 0.0, %v438
        %v440 = vpop.f32.mrb[0].mxu0
        %v441 = vadd.f32 0.0, %v440
        %442 = vdwg.mxu0
        %443 = vmatprep.subr.mxu0 %v225
        %444 = vmatpush1.msra.mxu0 %v224
        %445 = vmatprep.subr.mxu0 %v241
        %446 = vmatpush1.msra.mxu0 %v240
        %447 = vmatprep.subr.mxu0 0.0
        %448 = vmatpush1.msra.mxu0 0.0
        %449 = vmatprep.subr.mxu0 0.0
        %450 = vmatpush1.msra.mxu0 0.0
        %451 = vmatprep.subr.mxu0 0.0
        %452 = vmatpush1.msra.mxu0 0.0
        %453 = vmatprep.subr.mxu0 0.0
        %454 = vmatpush1.msra.mxu0 0.0
        %455 = vmatprep.subr.mxu0 0.0
        %456 = vmatpush1.msra.mxu0 0.0
        %457 = vmatprep.subr.mxu0 0.0
        %458 = vmatpush1.msra.mxu0 0.0
        %459 = vmatprep.subr.mxu0 0.0
        %460 = vmatpush1.msra.mxu0 0.0
        %461 = vmatprep.subr.mxu0 0.0
        %462 = vmatpush1.msra.mxu0 0.0
        %463 = vmatprep.subr.mxu0 0.0
        %464 = vmatpush1.msra.mxu0 0.0
        %465 = vmatprep.subr.mxu0 0.0
        %466 = vmatpush1.msra.mxu0 0.0
        %467 = vmatprep.subr.mxu0 0.0
        %468 = vmatpush1.msra.mxu0 0.0
        %469 = vmatprep.subr.mxu0 0.0
        %470 = vmatpush1.msra.mxu0 0.0
        %471 = vmatprep.subr.mxu0 0.0
        %472 = vmatpush1.msra.mxu0 0.0
        %473 = vmatprep.subr.mxu0 0.0
        %474 = vmatpush1.msra.mxu0 0.0
        %475 = vmatprep.subr.mxu0 0.0
        %476 = vmatpush1.msra.mxu0 0.0
        %477 = vmatprep.subr.mxu0 0.0
        %478 = vmatpush1.msra.mxu0 0.0
        %479 = vmatprep.subr.mxu0 0.0
        %480 = vmatpush1.msra.mxu0 0.0
        %481 = vmatprep.subr.mxu0 0.0
        %482 = vmatpush1.msra.mxu0 0.0
        %483 = vmatprep.subr.mxu0 0.0
        %484 = vmatpush1.msra.mxu0 0.0
        %485 = vmatprep.subr.mxu0 0.0
        %486 = vmatpush1.msra.mxu0 0.0
        %487 = vmatprep.subr.mxu0 0.0
        %488 = vmatpush1.msra.mxu0 0.0
        %489 = vmatprep.subr.mxu0 0.0
        %490 = vmatpush1.msra.mxu0 0.0
        %491 = vmatprep.subr.mxu0 0.0
        %492 = vmatpush1.msra.mxu0 0.0
        %493 = vmatprep.subr.mxu0 0.0
        %494 = vmatpush1.msra.mxu0 0.0
        %495 = vmatprep.subr.mxu0 0.0
        %496 = vmatpush1.msra.mxu0 0.0
        %497 = vmatprep.subr.mxu0 0.0
        %498 = vmatpush1.msra.mxu0 0.0
        %499 = vmatprep.subr.mxu0 0.0
        %500 = vmatpush1.msra.mxu0 0.0
        %501 = vmatprep.subr.mxu0 0.0
        %502 = vmatpush1.msra.mxu0 0.0
        %503 = vmatprep.subr.mxu0 0.0
        %504 = vmatpush1.msra.mxu0 0.0
        %505 = vmatprep.subr.mxu0 0.0
        %506 = vmatpush1.msra.mxu0 0.0
        %507 = vmatprep.mubr.f32.mxu0 0.0
        %508 = vmatmul.mubr.f32.gmra.mrb[0].mxu0 %v254
        %v509 = vpop.f32.mrb[0].mxu0
        %v510 = vadd.f32 0.0, %v509
        %v511 = vpop.f32.mrb[0].mxu0
        %v512 = vadd.f32 0.0, %v511
        %513 = vmatprep.mubr.f32.mxu0 0.0
        %514 = vmatmul.mubr.f32.gmra.mrb[0].mxu0 %v257
        %v515 = vpop.f32.mrb[0].mxu0
        %v516 = vadd.f32 0.0, %v515
        %v517 = vpop.f32.mrb[0].mxu0
        %v518 = vadd.f32 0.0, %v517
        %519 = vmatprep.mubr.f32.mxu0 0.0
        %520 = vmatmul.mubr.f32.gmra.mrb[0].mxu0 %v260
        %v521 = vpop.f32.mrb[0].mxu0
        %v522 = vadd.f32 0.0, %v521
        %v523 = vpop.f32.mrb[0].mxu0
        %v524 = vadd.f32 0.0, %v523
        %525 = vmatprep.mubr.f32.mxu0 0.0
        %526 = vmatmul.mubr.f32.gmra.mrb[0].mxu0 %v263
        %v527 = vpop.f32.mrb[0].mxu0
        %v528 = vadd.f32 0.0, %v527
        %v529 = vpop.f32.mrb[0].mxu0
        %v530 = vadd.f32 0.0, %v529
        %531 = vdwg.mxu0
        %532 = vmatprep.subr.mxu0 %v227
        %533 = vmatpush1.msra.mxu0 %v226
        %534 = vmatprep.subr.mxu0 %v243
        %535 = vmatpush1.msra.mxu0 %v242
        %536 = vmatprep.subr.mxu0 0.0
        %537 = vmatpush1.msra.mxu0 0.0
        %538 = vmatprep.subr.mxu0 0.0
        %539 = vmatpush1.msra.mxu0 0.0
        %540 = vmatprep.subr.mxu0 0.0
        %541 = vmatpush1.msra.mxu0 0.0
        %542 = vmatprep.subr.mxu0 0.0
        %543 = vmatpush1.msra.mxu0 0.0
        %544 = vmatprep.subr.mxu0 0.0
        %545 = vmatpush1.msra.mxu0 0.0
        %546 = vmatprep.subr.mxu0 0.0
        %547 = vmatpush1.msra.mxu0 0.0
        %548 = vmatprep.subr.mxu0 0.0
        %549 = vmatpush1.msra.mxu0 0.0
        %550 = vmatprep.subr.mxu0 0.0
        %551 = vmatpush1.msra.mxu0 0.0
        %552 = vmatprep.subr.mxu0 0.0
        %553 = vmatpush1.msra.mxu0 0.0
        %554 = vmatprep.subr.mxu0 0.0
        %555 = vmatpush1.msra.mxu0 0.0
        %556 = vmatprep.subr.mxu0 0.0
        %557 = vmatpush1.msra.mxu0 0.0
        %558 = vmatprep.subr.mxu0 0.0
        %559 = vmatpush1.msra.mxu0 0.0
        %560 = vmatprep.subr.mxu0 0.0
        %561 = vmatpush1.msra.mxu0 0.0
        %562 = vmatprep.subr.mxu0 0.0
        %563 = vmatpush1.msra.mxu0 0.0
        %564 = vmatprep.subr.mxu0 0.0
        %565 = vmatpush1.msra.mxu0 0.0
        %566 = vmatprep.subr.mxu0 0.0
        %567 = vmatpush1.msra.mxu0 0.0
        %568 = vmatprep.subr.mxu0 0.0
        %569 = vmatpush1.msra.mxu0 0.0
        %570 = vmatprep.subr.mxu0 0.0
        %571 = vmatpush1.msra.mxu0 0.0
        %572 = vmatprep.subr.mxu0 0.0
        %573 = vmatpush1.msra.mxu0 0.0
        %574 = vmatprep.subr.mxu0 0.0
        %575 = vmatpush1.msra.mxu0 0.0
        %576 = vmatprep.subr.mxu0 0.0
        %577 = vmatpush1.msra.mxu0 0.0
        %578 = vmatprep.subr.mxu0 0.0
        %579 = vmatpush1.msra.mxu0 0.0
        %580 = vmatprep.subr.mxu0 0.0
        %581 = vmatpush1.msra.mxu0 0.0
        %582 = vmatprep.subr.mxu0 0.0
        %583 = vmatpush1.msra.mxu0 0.0
        %584 = vmatprep.subr.mxu0 0.0
        %585 = vmatpush1.msra.mxu0 0.0
        %586 = vmatprep.subr.mxu0 0.0
        %587 = vmatpush1.msra.mxu0 0.0
        %588 = vmatprep.subr.mxu0 0.0
        %589 = vmatpush1.msra.mxu0 0.0
        %590 = vmatprep.subr.mxu0 0.0
        %591 = vmatpush1.msra.mxu0 0.0
        %592 = vmatprep.subr.mxu0 0.0
        %593 = vmatpush1.msra.mxu0 0.0
        %594 = vmatprep.subr.mxu0 0.0
        %595 = vmatpush1.msra.mxu0 0.0
        %596 = vmatprep.mubr.f32.mxu0 0.0
        %597 = vmatmul.mubr.f32.gmra.mrb[0].mxu0 %v254
        %v598 = vpop.f32.mrb[0].mxu0
        %v599 = vadd.f32 0.0, %v598
        %v600 = vpop.f32.mrb[0].mxu0
        %v601 = vadd.f32 0.0, %v600
        %602 = vmatprep.mubr.f32.mxu0 0.0
        %603 = vmatmul.mubr.f32.gmra.mrb[0].mxu0 %v257
        %v604 = vpop.f32.mrb[0].mxu0
        %v605 = vadd.f32 0.0, %v604
        %v606 = vpop.f32.mrb[0].mxu0
        %v607 = vadd.f32 0.0, %v606
        %608 = vmatprep.mubr.f32.mxu0 0.0
        %609 = vmatmul.mubr.f32.gmra.mrb[0].mxu0 %v260
        %v610 = vpop.f32.mrb[0].mxu0
        %v611 = vadd.f32 0.0, %v610
        %v612 = vpop.f32.mrb[0].mxu0
        %v613 = vadd.f32 0.0, %v612
        %614 = vmatprep.mubr.f32.mxu0 0.0
        %615 = vmatmul.mubr.f32.gmra.mrb[0].mxu0 %v263
        %v616 = vpop.f32.mrb[0].mxu0
        %v617 = vadd.f32 0.0, %v616
        %v618 = vpop.f32.mrb[0].mxu0
        %v619 = vadd.f32 0.0, %v618
        %620 = vdwg.mxu0
        %621 = vmatprep.subr.mxu0 %v229
        %622 = vmatpush1.msra.mxu0 %v228
        %623 = vmatprep.subr.mxu0 %v245
        %624 = vmatpush1.msra.mxu0 %v244
        %625 = vmatprep.subr.mxu0 0.0
        %626 = vmatpush1.msra.mxu0 0.0
        %627 = vmatprep.subr.mxu0 0.0
        %628 = vmatpush1.msra.mxu0 0.0
        %629 = vmatprep.subr.mxu0 0.0
        %630 = vmatpush1.msra.mxu0 0.0
        %631 = vmatprep.subr.mxu0 0.0
        %632 = vmatpush1.msra.mxu0 0.0
        %633 = vmatprep.subr.mxu0 0.0
        %634 = vmatpush1.msra.mxu0 0.0
        %635 = vmatprep.subr.mxu0 0.0
        %636 = vmatpush1.msra.mxu0 0.0
        %637 = vmatprep.subr.mxu0 0.0
        %638 = vmatpush1.msra.mxu0 0.0
        %639 = vmatprep.subr.mxu0 0.0
        %640 = vmatpush1.msra.mxu0 0.0
        %641 = vmatprep.subr.mxu0 0.0
        %642 = vmatpush1.msra.mxu0 0.0
        %643 = vmatprep.subr.mxu0 0.0
        %644 = vmatpush1.msra.mxu0 0.0
        %645 = vmatprep.subr.mxu0 0.0
        %646 = vmatpush1.msra.mxu0 0.0
        %647 = vmatprep.subr.mxu0 0.0
        %648 = vmatpush1.msra.mxu0 0.0
        %649 = vmatprep.subr.mxu0 0.0
        %650 = vmatpush1.msra.mxu0 0.0
        %651 = vmatprep.subr.mxu0 0.0
        %652 = vmatpush1.msra.mxu0 0.0
        %653 = vmatprep.subr.mxu0 0.0
        %654 = vmatpush1.msra.mxu0 0.0
        %655 = vmatprep.subr.mxu0 0.0
        %656 = vmatpush1.msra.mxu0 0.0
        %657 = vmatprep.subr.mxu0 0.0
        %658 = vmatpush1.msra.mxu0 0.0
        %659 = vmatprep.subr.mxu0 0.0
        %660 = vmatpush1.msra.mxu0 0.0
        %661 = vmatprep.subr.mxu0 0.0
        %662 = vmatpush1.msra.mxu0 0.0
        %663 = vmatprep.subr.mxu0 0.0
        %664 = vmatpush1.msra.mxu0 0.0
        %665 = vmatprep.subr.mxu0 0.0
        %666 = vmatpush1.msra.mxu0 0.0
        %667 = vmatprep.subr.mxu0 0.0
        %668 = vmatpush1.msra.mxu0 0.0
        %669 = vmatprep.subr.mxu0 0.0
        %670 = vmatpush1.msra.mxu0 0.0
        %671 = vmatprep.subr.mxu0 0.0
        %672 = vmatpush1.msra.mxu0 0.0
        %673 = vmatprep.subr.mxu0 0.0
        %674 = vmatpush1.msra.mxu0 0.0
        %675 = vmatprep.subr.mxu0 0.0
        %676 = vmatpush1.msra.mxu0 0.0
        %677 = vmatprep.subr.mxu0 0.0
        %678 = vmatpush1.msra.mxu0 0.0
        %679 = vmatprep.subr.mxu0 0.0
        %680 = vmatpush1.msra.mxu0 0.0
        %681 = vmatprep.subr.mxu0 0.0
        %682 = vmatpush1.msra.mxu0 0.0
        %683 = vmatprep.subr.mxu0 0.0
        %684 = vmatpush1.msra.mxu0 0.0
        %685 = vmatprep.mubr.f32.mxu0 0.0
        %686 = vmatmul.mubr.f32.gmra.mrb[0].mxu0 %v254
        %v687 = vpop.f32.mrb[0].mxu0
        %v688 = vadd.f32 0.0, %v687
        %v689 = vpop.f32.mrb[0].mxu0
        %v690 = vadd.f32 0.0, %v689
        %691 = vmatprep.mubr.f32.mxu0 0.0
        %692 = vmatmul.mubr.f32.gmra.mrb[0].mxu0 %v257
        %v693 = vpop.f32.mrb[0].mxu0
        %v694 = vadd.f32 0.0, %v693
        %v695 = vpop.f32.mrb[0].mxu0
        %v696 = vadd.f32 0.0, %v695
        %697 = vmatprep.mubr.f32.mxu0 0.0
        %698 = vmatmul.mubr.f32.gmra.mrb[0].mxu0 %v260
        %v699 = vpop.f32.mrb[0].mxu0
        %v700 = vadd.f32 0.0, %v699
        %v701 = vpop.f32.mrb[0].mxu0
        %v702 = vadd.f32 0.0, %v701
        %703 = vmatprep.mubr.f32.mxu0 0.0
        %704 = vmatmul.mubr.f32.gmra.mrb[0].mxu0 %v263
        %v705 = vpop.f32.mrb[0].mxu0
        %v706 = vadd.f32 0.0, %v705
        %v707 = vpop.f32.mrb[0].mxu0
        %v708 = vadd.f32 0.0, %v707
        %709 = vdwg.mxu0
        %710 = vmatprep.subr.mxu0 %v231
        %711 = vmatpush1.msra.mxu0 %v230
        %712 = vmatprep.subr.mxu0 %v247
        %713 = vmatpush1.msra.mxu0 %v246
        %714 = vmatprep.subr.mxu0 0.0
        %715 = vmatpush1.msra.mxu0 0.0
        %716 = vmatprep.subr.mxu0 0.0
        %717 = vmatpush1.msra.mxu0 0.0
        %718 = vmatprep.subr.mxu0 0.0
        %719 = vmatpush1.msra.mxu0 0.0
        %720 = vmatprep.subr.mxu0 0.0
        %721 = vmatpush1.msra.mxu0 0.0
        %722 = vmatprep.subr.mxu0 0.0
        %723 = vmatpush1.msra.mxu0 0.0
        %724 = vmatprep.subr.mxu0 0.0
        %725 = vmatpush1.msra.mxu0 0.0
        %726 = vmatprep.subr.mxu0 0.0
        %727 = vmatpush1.msra.mxu0 0.0
        %728 = vmatprep.subr.mxu0 0.0
        %729 = vmatpush1.msra.mxu0 0.0
        %730 = vmatprep.subr.mxu0 0.0
        %731 = vmatpush1.msra.mxu0 0.0
        %732 = vmatprep.subr.mxu0 0.0
        %733 = vmatpush1.msra.mxu0 0.0
        %734 = vmatprep.subr.mxu0 0.0
        %735 = vmatpush1.msra.mxu0 0.0
        %736 = vmatprep.subr.mxu0 0.0
        %737 = vmatpush1.msra.mxu0 0.0
        %738 = vmatprep.subr.mxu0 0.0
        %739 = vmatpush1.msra.mxu0 0.0
        %740 = vmatprep.subr.mxu0 0.0
        %741 = vmatpush1.msra.mxu0 0.0
        %742 = vmatprep.subr.mxu0 0.0
        %743 = vmatpush1.msra.mxu0 0.0
        %744 = vmatprep.subr.mxu0 0.0
        %745 = vmatpush1.msra.mxu0 0.0
        %746 = vmatprep.subr.mxu0 0.0
        %747 = vmatpush1.msra.mxu0 0.0
        %748 = vmatprep.subr.mxu0 0.0
        %749 = vmatpush1.msra.mxu0 0.0
        %750 = vmatprep.subr.mxu0 0.0
        %751 = vmatpush1.msra.mxu0 0.0
        %752 = vmatprep.subr.mxu0 0.0
        %753 = vmatpush1.msra.mxu0 0.0
        %754 = vmatprep.subr.mxu0 0.0
        %755 = vmatpush1.msra.mxu0 0.0
        %756 = vmatprep.subr.mxu0 0.0
        %757 = vmatpush1.msra.mxu0 0.0
        %758 = vmatprep.subr.mxu0 0.0
        %759 = vmatpush1.msra.mxu0 0.0
        %760 = vmatprep.subr.mxu0 0.0
        %761 = vmatpush1.msra.mxu0 0.0
        %762 = vmatprep.subr.mxu0 0.0
        %763 = vmatpush1.msra.mxu0 0.0
        %764 = vmatprep.subr.mxu0 0.0
        %765 = vmatpush1.msra.mxu0 0.0
        %766 = vmatprep.subr.mxu0 0.0
        %767 = vmatpush1.msra.mxu0 0.0
        %768 = vmatprep.subr.mxu0 0.0
        %769 = vmatpush1.msra.mxu0 0.0
        %770 = vmatprep.subr.mxu0 0.0
        %771 = vmatpush1.msra.mxu0 0.0
        %772 = vmatprep.subr.mxu0 0.0
        %773 = vmatpush1.msra.mxu0 0.0
        %774 = vmatprep.mubr.f32.mxu0 0.0
        %775 = vmatmul.mubr.f32.gmra.mrb[0].mxu0 %v254
        %v776 = vpop.f32.mrb[0].mxu0
        %v777 = vadd.f32 0.0, %v776
        %v778 = vpop.f32.mrb[0].mxu0
        %v779 = vadd.f32 0.0, %v778
        %780 = vmatprep.mubr.f32.mxu0 0.0
        %781 = vmatmul.mubr.f32.gmra.mrb[0].mxu0 %v257
        %v782 = vpop.f32.mrb[0].mxu0
        %v783 = vadd.f32 0.0, %v782
        %v784 = vpop.f32.mrb[0].mxu0
        %v785 = vadd.f32 0.0, %v784
        %786 = vmatprep.mubr.f32.mxu0 0.0
        %787 = vmatmul.mubr.f32.gmra.mrb[0].mxu0 %v260
        %v788 = vpop.f32.mrb[0].mxu0
        %v789 = vadd.f32 0.0, %v788
        %v790 = vpop.f32.mrb[0].mxu0
        %v791 = vadd.f32 0.0, %v790
        %792 = vmatprep.mubr.f32.mxu0 0.0
        %793 = vmatmul.mubr.f32.gmra.mrb[0].mxu0 %v263
        %v794 = vpop.f32.mrb[0].mxu0
        %v795 = vadd.f32 0.0, %v794
        %v796 = vpop.f32.mrb[0].mxu0
        %v797 = vadd.f32 0.0, %v796
        %798 = vdwg.mxu0
        %799 = vmatprep.subr.mxu0 %v233
        %800 = vmatpush1.msra.mxu0 %v232
        %801 = vmatprep.subr.mxu0 %v249
        %802 = vmatpush1.msra.mxu0 %v248
        %803 = vmatprep.subr.mxu0 0.0
        %804 = vmatpush1.msra.mxu0 0.0
        %805 = vmatprep.subr.mxu0 0.0
        %806 = vmatpush1.msra.mxu0 0.0
        %807 = vmatprep.subr.mxu0 0.0
        %808 = vmatpush1.msra.mxu0 0.0
        %809 = vmatprep.subr.mxu0 0.0
        %810 = vmatpush1.msra.mxu0 0.0
        %811 = vmatprep.subr.mxu0 0.0
        %812 = vmatpush1.msra.mxu0 0.0
        %813 = vmatprep.subr.mxu0 0.0
        %814 = vmatpush1.msra.mxu0 0.0
        %815 = vmatprep.subr.mxu0 0.0
        %816 = vmatpush1.msra.mxu0 0.0
        %817 = vmatprep.subr.mxu0 0.0
        %818 = vmatpush1.msra.mxu0 0.0
        %819 = vmatprep.subr.mxu0 0.0
        %820 = vmatpush1.msra.mxu0 0.0
        %821 = vmatprep.subr.mxu0 0.0
        %822 = vmatpush1.msra.mxu0 0.0
        %823 = vmatprep.subr.mxu0 0.0
        %824 = vmatpush1.msra.mxu0 0.0
        %825 = vmatprep.subr.mxu0 0.0
        %826 = vmatpush1.msra.mxu0 0.0
        %827 = vmatprep.subr.mxu0 0.0
        %828 = vmatpush1.msra.mxu0 0.0
        %829 = vmatprep.subr.mxu0 0.0
        %830 = vmatpush1.msra.mxu0 0.0
        %831 = vmatprep.subr.mxu0 0.0
        %832 = vmatpush1.msra.mxu0 0.0
        %833 = vmatprep.subr.mxu0 0.0
        %834 = vmatpush1.msra.mxu0 0.0
        %835 = vmatprep.subr.mxu0 0.0
        %836 = vmatpush1.msra.mxu0 0.0
        %837 = vmatprep.subr.mxu0 0.0
        %838 = vmatpush1.msra.mxu0 0.0
        %839 = vmatprep.subr.mxu0 0.0
        %840 = vmatpush1.msra.mxu0 0.0
        %841 = vmatprep.subr.mxu0 0.0
        %842 = vmatpush1.msra.mxu0 0.0
        %843 = vmatprep.subr.mxu0 0.0
        %844 = vmatpush1.msra.mxu0 0.0
        %845 = vmatprep.subr.mxu0 0.0
        %846 = vmatpush1.msra.mxu0 0.0
        %847 = vmatprep.subr.mxu0 0.0
        %848 = vmatpush1.msra.mxu0 0.0
        %849 = vmatprep.subr.mxu0 0.0
        %850 = vmatpush1.msra.mxu0 0.0
        %851 = vmatprep.subr.mxu0 0.0
        %852 = vmatpush1.msra.mxu0 0.0
        %853 = vmatprep.subr.mxu0 0.0
        %854 = vmatpush1.msra.mxu0 0.0
        %855 = vmatprep.subr.mxu0 0.0
        %856 = vmatpush1.msra.mxu0 0.0
        %857 = vmatprep.subr.mxu0 0.0
        %858 = vmatpush1.msra.mxu0 0.0
        %859 = vmatprep.subr.mxu0 0.0
        %860 = vmatpush1.msra.mxu0 0.0
        %861 = vmatprep.subr.mxu0 0.0
        %862 = vmatpush1.msra.mxu0 0.0
        %863 = vmatprep.mubr.f32.mxu0 0.0
        %864 = vmatmul.mubr.f32.gmra.mrb[0].mxu0 %v254
        %v865 = vpop.f32.mrb[0].mxu0
        %v866 = vadd.f32 0.0, %v865
        %v867 = vpop.f32.mrb[0].mxu0
        %v868 = vadd.f32 0.0, %v867
        %869 = vmatprep.mubr.f32.mxu0 0.0
        %870 = vmatmul.mubr.f32.gmra.mrb[0].mxu0 %v257
        %v871 = vpop.f32.mrb[0].mxu0
        %v872 = vadd.f32 0.0, %v871
        %v873 = vpop.f32.mrb[0].mxu0
        %v874 = vadd.f32 0.0, %v873
        %875 = vmatprep.mubr.f32.mxu0 0.0
        %876 = vmatmul.mubr.f32.gmra.mrb[0].mxu0 %v260
        %v877 = vpop.f32.mrb[0].mxu0
        %v878 = vadd.f32 0.0, %v877
        %v879 = vpop.f32.mrb[0].mxu0
        %v880 = vadd.f32 0.0, %v879
        %881 = vmatprep.mubr.f32.mxu0 0.0
        %882 = vmatmul.mubr.f32.gmra.mrb[0].mxu0 %v263
        %v883 = vpop.f32.mrb[0].mxu0
        %v884 = vadd.f32 0.0, %v883
        %v885 = vpop.f32.mrb[0].mxu0
        %v886 = vadd.f32 0.0, %v885
        %887 = vdwg.mxu0
        %888 = vmatprep.subr.mxu0 %v235
        %889 = vmatpush1.msra.mxu0 %v234
        %890 = vmatprep.subr.mxu0 %v251
        %891 = vmatpush1.msra.mxu0 %v250
        %892 = vmatprep.subr.mxu0 0.0
        %893 = vmatpush1.msra.mxu0 0.0
        %894 = vmatprep.subr.mxu0 0.0
        %895 = vmatpush1.msra.mxu0 0.0
        %896 = vmatprep.subr.mxu0 0.0
        %897 = vmatpush1.msra.mxu0 0.0
        %898 = vmatprep.subr.mxu0 0.0
        %899 = vmatpush1.msra.mxu0 0.0
        %900 = vmatprep.subr.mxu0 0.0
        %901 = vmatpush1.msra.mxu0 0.0
        %902 = vmatprep.subr.mxu0 0.0
        %903 = vmatpush1.msra.mxu0 0.0
        %904 = vmatprep.subr.mxu0 0.0
        %905 = vmatpush1.msra.mxu0 0.0
        %906 = vmatprep.subr.mxu0 0.0
        %907 = vmatpush1.msra.mxu0 0.0
        %908 = vmatprep.subr.mxu0 0.0
        %909 = vmatpush1.msra.mxu0 0.0
        %910 = vmatprep.subr.mxu0 0.0
        %911 = vmatpush1.msra.mxu0 0.0
        %912 = vmatprep.subr.mxu0 0.0
        %913 = vmatpush1.msra.mxu0 0.0
        %914 = vmatprep.subr.mxu0 0.0
        %915 = vmatpush1.msra.mxu0 0.0
        %916 = vmatprep.subr.mxu0 0.0
        %917 = vmatpush1.msra.mxu0 0.0
        %918 = vmatprep.subr.mxu0 0.0
        %919 = vmatpush1.msra.mxu0 0.0
        %920 = vmatprep.subr.mxu0 0.0
        %921 = vmatpush1.msra.mxu0 0.0
        %922 = vmatprep.subr.mxu0 0.0
        %923 = vmatpush1.msra.mxu0 0.0
        %924 = vmatprep.subr.mxu0 0.0
        %925 = vmatpush1.msra.mxu0 0.0
        %926 = vmatprep.subr.mxu0 0.0
        %927 = vmatpush1.msra.mxu0 0.0
        %928 = vmatprep.subr.mxu0 0.0
        %929 = vmatpush1.msra.mxu0 0.0
        %930 = vmatprep.subr.mxu0 0.0
        %931 = vmatpush1.msra.mxu0 0.0
        %932 = vmatprep.subr.mxu0 0.0
        %933 = vmatpush1.msra.mxu0 0.0
        %934 = vmatprep.subr.mxu0 0.0
        %935 = vmatpush1.msra.mxu0 0.0
        %936 = vmatprep.subr.mxu0 0.0
        %937 = vmatpush1.msra.mxu0 0.0
        %938 = vmatprep.subr.mxu0 0.0
        %939 = vmatpush1.msra.mxu0 0.0
        %940 = vmatprep.subr.mxu0 0.0
        %941 = vmatpush1.msra.mxu0 0.0
        %942 = vmatprep.subr.mxu0 0.0
        %943 = vmatpush1.msra.mxu0 0.0
        %944 = vmatprep.subr.mxu0 0.0
        %945 = vmatpush1.msra.mxu0 0.0
        %946 = vmatprep.subr.mxu0 0.0
        %947 = vmatpush1.msra.mxu0 0.0
        %948 = vmatprep.subr.mxu0 0.0
        %949 = vmatpush1.msra.mxu0 0.0
        %950 = vmatprep.subr.mxu0 0.0
        %951 = vmatpush1.msra.mxu0 0.0
        %952 = vmatprep.mubr.f32.mxu0 0.0
        %953 = vmatmul.mubr.f32.gmra.mrb[0].mxu0 %v254
        %v954 = vpop.f32.mrb[0].mxu0
        %v955 = vadd.f32 0.0, %v954
        %v956 = vpop.f32.mrb[0].mxu0
        %v957 = vadd.f32 0.0, %v956
        %958 = vmatprep.mubr.f32.mxu0 0.0
        %959 = vmatmul.mubr.f32.gmra.mrb[0].mxu0 %v257
        %v960 = vpop.f32.mrb[0].mxu0
        %v961 = vadd.f32 0.0, %v960
        %v962 = vpop.f32.mrb[0].mxu0
        %v963 = vadd.f32 0.0, %v962
        %964 = vmatprep.mubr.f32.mxu0 0.0
        %965 = vmatmul.mubr.f32.gmra.mrb[0].mxu0 %v260
        %v966 = vpop.f32.mrb[0].mxu0
        %v967 = vadd.f32 0.0, %v966
        %v968 = vpop.f32.mrb[0].mxu0
        %v969 = vadd.f32 0.0, %v968
        %970 = vmatprep.mubr.f32.mxu0 0.0
        %971 = vmatmul.mubr.f32.gmra.mrb[0].mxu0 %v263
        %v972 = vpop.f32.mrb[0].mxu0
        %v973 = vadd.f32 0.0, %v972
        %v974 = vpop.f32.mrb[0].mxu0
        %v975 = vadd.f32 0.0, %v974
        %976 = vdwg.mxu0
        %977 = vst [vmem:[%s211] sm:$0xff] %v332
        %978 = vst [vmem:[%s211 + $0x8] sm:$0xff] %v334
        %979 = vst [vmem:[%s211 + $0x10] sm:$0xff] %v421
        %980 = vst [vmem:[%s211 + $0x18] sm:$0xff] %v423
        %981 = vst [vmem:[%s211 + $0x20] sm:$0xff] %v510
        %982 = vst [vmem:[%s211 + $0x28] sm:$0xff] %v512
        %983 = vst [vmem:[%s211 + $0x30] sm:$0xff] %v599
        %984 = vst [vmem:[%s211 + $0x38] sm:$0xff] %v601
        %985 = vst [vmem:[%s211 + $0x40] sm:$0xff] %v688
        %986 = vst [vmem:[%s211 + $0x48] sm:$0xff] %v690
        %987 = vst [vmem:[%s211 + $0x50] sm:$0xff] %v777
        %988 = vst [vmem:[%s211 + $0x58] sm:$0xff] %v779
        %989 = vst [vmem:[%s211 + $0x60] sm:$0xff] %v866
        %990 = vst [vmem:[%s211 + $0x68] sm:$0xff] %v868
        %991 = vst [vmem:[%s211 + $0x70] sm:$0xff] %v955
        %992 = vst [vmem:[%s211 + $0x78] sm:$0xff] %v957
        %993 = vst [vmem:[%s211 + $0x80] sm:$0xff] %v338
        %994 = vst [vmem:[%s211 + $0x88] sm:$0xff] %v340
        %995 = vst [vmem:[%s211 + $0x90] sm:$0xff] %v427
        %996 = vst [vmem:[%s211 + $0x98] sm:$0xff] %v429
        %997 = vst [vmem:[%s211 + $0xa0] sm:$0xff] %v516
        %998 = vst [vmem:[%s211 + $0xa8] sm:$0xff] %v518
        %999 = vst [vmem:[%s211 + $0xb0] sm:$0xff] %v605
        %1000 = vst [vmem:[%s211 + $0xb8] sm:$0xff] %v607
        %1001 = vst [vmem:[%s211 + $0xc0] sm:$0xff] %v694
        %1002 = vst [vmem:[%s211 + $0xc8] sm:$0xff] %v696
        %1003 = vst [vmem:[%s211 + $0xd0] sm:$0xff] %v783
        %1004 = vst [vmem:[%s211 + $0xd8] sm:$0xff] %v785
        %1005 = vst [vmem:[%s211 + $0xe0] sm:$0xff] %v872
        %1006 = vst [vmem:[%s211 + $0xe8] sm:$0xff] %v874
        %1007 = vst [vmem:[%s211 + $0xf0] sm:$0xff] %v961
        %1008 = vst [vmem:[%s211 + $0xf8] sm:$0xff] %v963
        %1009 = vst [vmem:[%s211 + $0x100] sm:$0xff] %v344
        %1010 = vst [vmem:[%s211 + $0x108] sm:$0xff] %v346
        %1011 = vst [vmem:[%s211 + $0x110] sm:$0xff] %v433
        %1012 = vst [vmem:[%s211 + $0x118] sm:$0xff] %v435
        %1013 = vst [vmem:[%s211 + $0x120] sm:$0xff] %v522
        %1014 = vst [vmem:[%s211 + $0x128] sm:$0xff] %v524
        %1015 = vst [vmem:[%s211 + $0x130] sm:$0xff] %v611
        %1016 = vst [vmem:[%s211 + $0x138] sm:$0xff] %v613
        %1017 = vst [vmem:[%s211 + $0x140] sm:$0xff] %v700
        %1018 = vst [vmem:[%s211 + $0x148] sm:$0xff] %v702
        %1019 = vst [vmem:[%s211 + $0x150] sm:$0xff] %v789
        %1020 = vst [vmem:[%s211 + $0x158] sm:$0xff] %v791
        %1021 = vst [vmem:[%s211 + $0x160] sm:$0xff] %v878
        %1022 = vst [vmem:[%s211 + $0x168] sm:$0xff] %v880
        %1023 = vst [vmem:[%s211 + $0x170] sm:$0xff] %v967
        %1024 = vst [vmem:[%s211 + $0x178] sm:$0xff] %v969
        %1025 = vst [vmem:[%s211 + $0x180] sm:$0xff] %v350
        %1026 = vst [vmem:[%s211 + $0x188] sm:$0xff] %v352
        %1027 = vst [vmem:[%s211 + $0x190] sm:$0xff] %v439
        %1028 = vst [vmem:[%s211 + $0x198] sm:$0xff] %v441
        %1029 = vst [vmem:[%s211 + $0x1a0] sm:$0xff] %v528
        %1030 = vst [vmem:[%s211 + $0x1a8] sm:$0xff] %v530
        %1031 = vst [vmem:[%s211 + $0x1b0] sm:$0xff] %v617
        %1032 = vst [vmem:[%s211 + $0x1b8] sm:$0xff] %v619
        %1033 = vst [vmem:[%s211 + $0x1c0] sm:$0xff] %v706
        %1034 = vst [vmem:[%s211 + $0x1c8] sm:$0xff] %v708
        %1035 = vst [vmem:[%s211 + $0x1d0] sm:$0xff] %v795
        %1036 = vst [vmem:[%s211 + $0x1d8] sm:$0xff] %v797
        %1037 = vst [vmem:[%s211 + $0x1e0] sm:$0xff] %v884
        %1038 = vst [vmem:[%s211 + $0x1e8] sm:$0xff] %v886
        %1039 = vst [vmem:[%s211 + $0x1f0] sm:$0xff] %v973
        %1040 = vst [vmem:[%s211 + $0x1f8] sm:$0xff] %v975
        %s1041 = sand.u32 %s105, 1
        %s1042 = scalar_lea.sflag [#allocation4], %s1041
        %s1043 = sand.u32 %s105, 1
        %s1044 = smul.addr %s1043, 512
        %s1045 = scalar_lea.vmem [#allocation7], %s1044
        // Predicated region
        $region37: #{classifier_forward.8} parent=27 // pred_check
          %p1046 = pneg %p115
        $region38: #{classifier_forward.8} parent=27 // pred_check_branch
          %1048 = sbr.rel (%p1046) target = $region40
        $region39: #{classifier_forward.8} parent=27 // pred_region
          %s1049 = smul.u32 4, %s26
          %s1050 = smul.u32 16, %s27
          %s1052 = ssub.s32 8192, 8192
          %1053 = vsyncadd %s1042, %s1052
          %s1054 = smul.addr %s1049, 16
          %s1055 = sadd.s32 %s1050, %s1054
          %s1056 = smul.addr %s25, 64
          %s1057 = sadd.s32 %s1055, %s1056
          %s1058 = smul.addr %s1057, 128
          %s1059 = scalar_lea.hbm %s2, %s1058
          %s1060 = sshll.u32 %s1045, 4
          %s1061 = int_to_ptr.vmem [resolvable:$true] %s1060
          %1066 = dma.vmem_to_hbm [thread:$0]  %s1061, 8192, %s1059, %s1042, 2048, 2048, 128
        $region40: #{classifier_forward.8} parent=27 // pred_fallthru
          _
      $region28: #{classifier_forward.8} parent=5 // pred_fallthru
        _
      %p1067 = scmp.le.s32.totalorder 2, %s15
      // Predicated region
      $region41: #{classifier_forward.8} parent=5 // pred_check
        %p1068 = pneg %p1067
      $region42: #{classifier_forward.8} parent=5 // pred_check_branch
        %1070 = sbr.rel (%p1068) target = $region44
      $region43: #{classifier_forward.8} parent=5 // pred_region
        %s1071 = ssub.s32 %s15, 2
        // Predicated region
        $region45: #{classifier_forward.8} parent=43 // pred_check
          %p1072 = pneg %p121
        $region46: #{classifier_forward.8} parent=43 // pred_check_branch
          %1074 = sbr.rel (%p1072) target = $region48
        $region47: #{classifier_forward.8} parent=43 // pred_region
          %s1075 = sand.u32 %s106, 1
          %s1076 = scalar_lea.sflag [#allocation4], %s1075
          %s1077 = sand.u32 %s106, 1
          %s1078 = smul.addr %s1077, 512
          %s1079 = scalar_lea.vmem [#allocation7], %s1078
          %1080 = dma.done %s1076, 8192
        $region48: #{classifier_forward.8} parent=43 // pred_fallthru
          _
      $region44: #{classifier_forward.8} parent=5 // pred_fallthru
        _
    $region6: #{classifier_forward.8} parent=1 // loop_footer
      %s19 = sadd.s32 1, %s15
    $region7: #{classifier_forward.8} parent=1 // loop_footer_branch
      %14 = sbr.rel target = $region3
    $region8: #{classifier_forward.8} parent=1 // loop_exit
      _
    %1081 = vsyncpa [#allocation3], 1
    %s1082 = scalar_lea.sflag [#allocation3], 1
    %1083 = vsyncpa %s1082, 1
    %1084 = vsyncpa [#allocation6], 1
    %s1085 = scalar_lea.sflag [#allocation6], 1
    %1086 = vsyncpa %s1085, 1
    %1087 = vsyncpa [#allocation4], 1
    %s1088 = scalar_lea.sflag [#allocation4], 1
    %1089 = vsyncpa %s1088, 1

</llo_original>
